<compile_context>
chip_gen: v7x
topology: tpu7x:2x2x1
jax: 0.10.0
libtpu: 0.0.40
codegen_flags: <defaults>
</compile_context>

<pallas_src>
import functools

import jax
import jax.numpy as jnp
from jax.experimental import pallas as pl
from jax.experimental.pallas import tpu as pltpu


def _round_up(x, m):
    return ((x + m - 1) // m) * m


def _proj_sum_kernel(*refs, num_meta, tile_n, n_valid, mask_tail):
    """Accumulates sum over nodes of tanh(z @ W1 + b1) per metapath.

    refs = (z_m0, ..., z_m{M-1}, w1, b1, hsum_out)
      z_m:  (tile_n, D)       f32   (metapath m's column window of z)
      w1:   (D, H)            bf16  (grid-invariant, stays VMEM-resident)
      b1:   (1, H)            f32   (grid-invariant)
      hsum: (1, num_meta, H)  f32   (resident accumulator, one per core)
    """
    z_refs = refs[:num_meta]
    w1_ref = refs[num_meta]
    b1_ref = refs[num_meta + 1]
    hsum_ref = refs[num_meta + 2]

    i = pl.program_id(1)                     # node-tile index within this core

    @pl.when(i == 0)
    def _():
        hsum_ref[...] = jnp.zeros_like(hsum_ref)

    w1 = w1_ref[...]                         # (D, H) bf16
    b1 = b1_ref[...]                         # (1, H) f32
    h_dim = w1.shape[1]

    if mask_tail:
        # Global node row of each sublane in this tile; padded rows dropped.
        base = (pl.program_id(0) * pl.num_programs(1) + i) * tile_n
        rows = base + jax.lax.broadcasted_iota(jnp.int32, (tile_n, 1), 0)
        valid = jnp.broadcast_to(rows < n_valid, (tile_n, h_dim))   # hoisted

    parts = []
    for m in range(num_meta):                # small, unrolled
        x = z_refs[m][...].astype(jnp.bfloat16)                   # (tile_n, D)
        h = jnp.dot(x, w1, preferred_element_type=jnp.float32)    # MXU, f32 acc
        h = jnp.tanh((h + b1).astype(jnp.bfloat16))               # EUP in bf16
        h = h.astype(jnp.float32)
        if mask_tail:
            h = jnp.where(valid, h, 0.0)                          # NaN-safe mask
        parts.append(jnp.sum(h, axis=0, keepdims=True))           # (1, H) f32
    # Single full-block accumulator update per grid step.
    hsum_ref[...] += jnp.concatenate(parts, axis=0)[None]         # (1, M, H)


def _weighted_sum_kernel(beta_ref, *refs, num_meta):
    """out = sum_m beta[m] * z[:, m, :] for one node tile.

    beta_ref: (num_meta,)  f32 in SMEM (scalar reads)
    refs = (z_m0, ..., z_m{M-1}, out); each z_m / out is (tile_n, D).
    """
    z_refs = refs[:num_meta]
    o_ref = refs[num_meta]
    acc = beta_ref[0] * z_refs[0][...]
    for m in range(1, num_meta):
        acc = acc + beta_ref[m] * z_refs[m][...]
    o_ref[...] = acc.astype(o_ref.dtype)


def semantic_attention_forward(z, w1_t, b1, a2, *, tile_n=1024):
    """z: [N, M, D]; w1_t: [D, H] (Linear1 weight transposed); b1: [H];
    a2: [H, 1] (Linear2 weight transposed, no bias). Returns [N, D].

    Assumes D and H are multiples of 128 (lane-dense tiles).
    """
    n, num_meta, d = z.shape
    h_dim = w1_t.shape[1]

    # Free, contiguous view: metapath m lives in columns [m*D, (m+1)*D).
    z2 = z.reshape(n, num_meta * d)

    tile_n = max(8, min(tile_n, _round_up(n, 8)))
    n_tiles = pl.cdiv(n, tile_n)
    mask_tail = (n_tiles * tile_n != n)

    # Split the node reduction across TensorCores (v7x megacore) when even.
    split = 2 if (n_tiles >= 2 and n_tiles % 2 == 0) else 1
    tiles_per_split = n_tiles // split

    w1_bf16 = w1_t.astype(jnp.bfloat16)
    b1_2d = b1.reshape(1, h_dim).astype(jnp.float32)

    # ---------- pass 1: per-metapath sum_n tanh(z @ W1 + b1) -> [split, M, H]
    proj_kernel = functools.partial(
        _proj_sum_kernel, num_meta=num_meta, tile_n=tile_n, n_valid=n,
        mask_tail=mask_tail)
    z_specs_p1 = [
        pl.BlockSpec(
            (tile_n, d),
            lambda c, i, m=m, tps=tiles_per_split: (c * tps + i, m))
        for m in range(num_meta)
    ]
    hsum_parts = pl.pallas_call(
        proj_kernel,
        out_shape=jax.ShapeDtypeStruct((split, num_meta, h_dim), jnp.float32),
        grid_spec=pltpu.PrefetchScalarGridSpec(
            num_scalar_prefetch=0,
            grid=(split, tiles_per_split),
            in_specs=z_specs_p1 + [
                pl.BlockSpec((d, h_dim), lambda c, i: (0, 0)),
                pl.BlockSpec((1, h_dim), lambda c, i: (0, 0)),
            ],
            out_specs=pl.BlockSpec((1, num_meta, h_dim),
                                   lambda c, i: (c, 0, 0)),
        ),
        compiler_params=pltpu.CompilerParams(
            dimension_semantics=("parallel", "arbitrary"),
            vmem_limit_bytes=32 * 1024 * 1024),
    )(*([z2] * num_meta), w1_bf16, b1_2d)

    # ---------- tiny scalar tail: Linear2, mean over N, softmax over M -------
    hsum = jnp.sum(hsum_parts, axis=0)                 # [M, H]
    logits = jnp.dot(hsum, a2) / jnp.float32(n)        # [M, 1]
    beta = jax.nn.softmax(logits, axis=0)              # [M, 1]
    # TODO(synk): for VMEM-resident N this dot/softmax (and pass 2) could be
    # folded into pass 1's final grid step to save the extra dispatches.

    # ---------- pass 2: out[n] = sum_m beta[m] * z[n, m] -> [N, D] -----------
    comb_kernel = functools.partial(_weighted_sum_kernel, num_meta=num_meta)
    z_specs_p2 = [
        pl.BlockSpec((tile_n, d), lambda i, m=m: (i, m))
        for m in range(num_meta)
    ]
    out = pl.pallas_call(
        comb_kernel,
        out_shape=jax.ShapeDtypeStruct((n, d), z.dtype),
        grid_spec=pltpu.PrefetchScalarGridSpec(
            num_scalar_prefetch=0,
            grid=(n_tiles,),
            in_specs=[pl.BlockSpec(memory_space=pltpu.MemorySpace.SMEM)]
                     + z_specs_p2,
            out_specs=pl.BlockSpec((tile_n, d), lambda i: (i, 0)),
        ),
        compiler_params=pltpu.CompilerParams(
            dimension_semantics=("parallel",),
            vmem_limit_bytes=32 * 1024 * 1024),
    )(beta[:, 0], *([z2] * num_meta))
    return out


def semantic_attention_ref(z, w1_t, b1, a2):
    """Plain-JAX reference with the same bf16-operand / f32-accumulate matmul."""
    n, m, d = z.shape
    x = z.reshape(n * m, d).astype(jnp.bfloat16)
    h = jnp.dot(x, w1_t.astype(jnp.bfloat16),
                preferred_element_type=jnp.float32)
    h = jnp.tanh(h + b1[None, :]).reshape(n, m, -1)            # [N, M, H]
    w = jnp.mean(jnp.einsum("nmh,ho->nmo", h, a2), axis=0)     # [M, 1]
    beta = jax.nn.softmax(w, axis=0)                           # [M, 1]
    return jnp.sum(beta[None, :, :] * z, axis=1)               # [N, D]


if __name__ == "__main__":
    key = jax.random.PRNGKey(0)

    # Small but TPU-friendly config: 256 nodes, 4 metapaths, in_size 128,
    # hidden_size 128 (module default) -> lane-dense (multiple-of-128) tiles.
    n_nodes, num_meta, in_size, hidden = 256, 4, 128, 128

    kz, kw1, kb1, kw2 = jax.random.split(key, 4)
    z = jax.random.normal(kz, (n_nodes, num_meta, in_size), jnp.float32)

    # nn.Linear(in_size, hidden): weight [H, D], bias [H]; stored transposed.
    w1 = jax.random.normal(kw1, (hidden, in_size), jnp.float32) / jnp.sqrt(
        jnp.float32(in_size))
    b1 = jax.random.uniform(kb1, (hidden,), jnp.float32, -0.1, 0.1)
    w1_t = jnp.transpose(w1)                        # [D, H]
    # nn.Linear(hidden, 1, bias=False): weight [1, H]; stored transposed.
    w2 = jax.random.normal(kw2, (1, hidden), jnp.float32) / jnp.sqrt(
        jnp.float32(hidden))
    a2 = jnp.transpose(w2)                          # [H, 1]

    fwd = jax.jit(functools.partial(semantic_attention_forward, tile_n=1024))
    out = fwd(z, w1_t, b1, a2)
    jax.block_until_ready(out)

    ref = semantic_attention_ref(z, w1_t, b1, a2)
    err = float(jnp.max(jnp.abs(out - ref)))
    assert out.shape == (n_nodes, in_size), out.shape
    assert err < 3e-3, f"max abs err {err}"
    print("KERNEL_OK")
</pallas_src>

<mosaic_0001>
module attributes {stable_mosaic.version = 11 : i64} {
  func.func @_proj_sum_kernel(%arg0: i32, %arg1: i32, %arg2: memref<256x128xf32, #tpu.memory_space<vmem>>, %arg3: memref<256x128xf32, #tpu.memory_space<vmem>>, %arg4: memref<256x128xf32, #tpu.memory_space<vmem>>, %arg5: memref<256x128xf32, #tpu.memory_space<vmem>>, %arg6: memref<128x128xbf16, #tpu.memory_space<vmem>>, %arg7: memref<1x128xf32, #tpu.memory_space<vmem>>, %arg8: memref<1x4x128xf32, #tpu.memory_space<vmem>>) attributes {dimension_semantics = [#tpu.dimension_semantics<parallel>, #tpu.dimension_semantics<arbitrary>], iteration_bounds = array<i64: 1, 1>, scalar_prefetch = 0 : i64, scratch_operands = 0 : i64, tpu.core_type = #tpu.core_type<tc>, window_params = [{transform_indices = @transform_0, window_bounds = array<i64: 256, 128>}, {transform_indices = @transform_1, window_bounds = array<i64: 256, 128>}, {transform_indices = @transform_2, window_bounds = array<i64: 256, 128>}, {transform_indices = @transform_3, window_bounds = array<i64: 256, 128>}, {pipeline_mode = #tpu.pipeline_mode<synchronous>, transform_indices = @transform_4, window_bounds = array<i64: 128, 128>}, {pipeline_mode = #tpu.pipeline_mode<synchronous>, transform_indices = @transform_5, window_bounds = array<i64: 1, 128>}, {transform_indices = @transform_6, window_bounds = array<i64: 1, 4, 128>}]} {
    %c0_i32 = arith.constant 0 : i32
    %0 = arith.cmpi eq, %arg1, %c0_i32 : i32
    %1 = arith.extui %0 : i1 to i32
    %c0_i32_0 = arith.constant 0 : i32
    %2 = arith.cmpi ne, %1, %c0_i32_0 : i32
    scf.if %2 {
      %cst_25 = arith.constant 0.000000e+00 : f32
      %50 = vector.broadcast %cst_25 : f32 to vector<1x4x128xf32>
      %c0_26 = arith.constant 0 : index
      %c0_27 = arith.constant 0 : index
      %c0_28 = arith.constant 0 : index
      %51 = vector.load %arg8[%c0_26, %c0_27, %c0_28] : memref<1x4x128xf32, #tpu.memory_space<vmem>>, vector<1x4x128xf32>
      tpu.vector_store %arg8[%c0_26, %c0_27, %c0_28], %50 {strides = array<i32>} : memref<1x4x128xf32, #tpu.memory_space<vmem>>, vector<1x4x128xf32>,
    } else {
    }
    %c0 = arith.constant 0 : index
    %c0_1 = arith.constant 0 : index
    %3 = vector.load %arg6[%c0, %c0_1] : memref<128x128xbf16, #tpu.memory_space<vmem>>, vector<128x128xbf16>
    %c0_2 = arith.constant 0 : index
    %c0_3 = arith.constant 0 : index
    %4 = vector.load %arg7[%c0_2, %c0_3] : memref<1x128xf32, #tpu.memory_space<vmem>>, vector<1x128xf32>
    %c0_4 = arith.constant 0 : index
    %c0_5 = arith.constant 0 : index
    %5 = vector.load %arg2[%c0_4, %c0_5] : memref<256x128xf32, #tpu.memory_space<vmem>>, vector<256x128xf32>
    %6 = arith.truncf %5 : vector<256x128xf32> to vector<256x128xbf16>
    %cst = arith.constant dense<0.000000e+00> : vector<256x128xf32>
    %7 = tpu.matmul %6, %3, %cst {dimension_numbers = #tpu.dot_dimension_numbers<[1], [0], [0], [1], [0, 0, 1, 1], [], []>} : vector<256x128xbf16>, vector<128x128xbf16>, vector<256x128xf32> -> vector<256x128xf32>
    %8 = vector.broadcast %4 : vector<1x128xf32> to vector<256x128xf32>
    %9 = arith.addf %7, %8 : vector<256x128xf32>
    %10 = arith.truncf %9 : vector<256x128xf32> to vector<256x128xbf16>
    %11 = math.tanh %10 : vector<256x128xbf16>
    %12 = arith.extf %11 : vector<256x128xbf16> to vector<256x128xf32>
    %cst_6 = arith.constant dense<0.000000e+00> : vector<128xf32>
    %13 = vector.multi_reduction <add>, %12, %cst_6 [0] : vector<256x128xf32> to vector<128xf32>
    %14 = vector.shape_cast %13 : vector<128xf32> to vector<1x128xf32>
    %c0_7 = arith.constant 0 : index
    %c0_8 = arith.constant 0 : index
    %15 = vector.load %arg3[%c0_7, %c0_8] : memref<256x128xf32, #tpu.memory_space<vmem>>, vector<256x128xf32>
    %16 = arith.truncf %15 : vector<256x128xf32> to vector<256x128xbf16>
    %cst_9 = arith.constant dense<0.000000e+00> : vector<256x128xf32>
    %17 = tpu.matmul %16, %3, %cst_9 {dimension_numbers = #tpu.dot_dimension_numbers<[1], [0], [0], [1], [0, 0, 1, 1], [], []>} : vector<256x128xbf16>, vector<128x128xbf16>, vector<256x128xf32> -> vector<256x128xf32>
    %18 = vector.broadcast %4 : vector<1x128xf32> to vector<256x128xf32>
    %19 = arith.addf %17, %18 : vector<256x128xf32>
    %20 = arith.truncf %19 : vector<256x128xf32> to vector<256x128xbf16>
    %21 = math.tanh %20 : vector<256x128xbf16>
    %22 = arith.extf %21 : vector<256x128xbf16> to vector<256x128xf32>
    %cst_10 = arith.constant dense<0.000000e+00> : vector<128xf32>
    %23 = vector.multi_reduction <add>, %22, %cst_10 [0] : vector<256x128xf32> to vector<128xf32>
    %24 = vector.shape_cast %23 : vector<128xf32> to vector<1x128xf32>
    %c0_11 = arith.constant 0 : index
    %c0_12 = arith.constant 0 : index
    %25 = vector.load %arg4[%c0_11, %c0_12] : memref<256x128xf32, #tpu.memory_space<vmem>>, vector<256x128xf32>
    %26 = arith.truncf %25 : vector<256x128xf32> to vector<256x128xbf16>
    %cst_13 = arith.constant dense<0.000000e+00> : vector<256x128xf32>
    %27 = tpu.matmul %26, %3, %cst_13 {dimension_numbers = #tpu.dot_dimension_numbers<[1], [0], [0], [1], [0, 0, 1, 1], [], []>} : vector<256x128xbf16>, vector<128x128xbf16>, vector<256x128xf32> -> vector<256x128xf32>
    %28 = vector.broadcast %4 : vector<1x128xf32> to vector<256x128xf32>
    %29 = arith.addf %27, %28 : vector<256x128xf32>
    %30 = arith.truncf %29 : vector<256x128xf32> to vector<256x128xbf16>
    %31 = math.tanh %30 : vector<256x128xbf16>
    %32 = arith.extf %31 : vector<256x128xbf16> to vector<256x128xf32>
    %cst_14 = arith.constant dense<0.000000e+00> : vector<128xf32>
    %33 = vector.multi_reduction <add>, %32, %cst_14 [0] : vector<256x128xf32> to vector<128xf32>
    %34 = vector.shape_cast %33 : vector<128xf32> to vector<1x128xf32>
    %c0_15 = arith.constant 0 : index
    %c0_16 = arith.constant 0 : index
    %35 = vector.load %arg5[%c0_15, %c0_16] : memref<256x128xf32, #tpu.memory_space<vmem>>, vector<256x128xf32>
    %36 = arith.truncf %35 : vector<256x128xf32> to vector<256x128xbf16>
    %cst_17 = arith.constant dense<0.000000e+00> : vector<256x128xf32>
    %37 = tpu.matmul %36, %3, %cst_17 {dimension_numbers = #tpu.dot_dimension_numbers<[1], [0], [0], [1], [0, 0, 1, 1], [], []>} : vector<256x128xbf16>, vector<128x128xbf16>, vector<256x128xf32> -> vector<256x128xf32>
    %38 = vector.broadcast %4 : vector<1x128xf32> to vector<256x128xf32>
    %39 = arith.addf %37, %38 : vector<256x128xf32>
    %40 = arith.truncf %39 : vector<256x128xf32> to vector<256x128xbf16>
    %41 = math.tanh %40 : vector<256x128xbf16>
    %42 = arith.extf %41 : vector<256x128xbf16> to vector<256x128xf32>
    %cst_18 = arith.constant dense<0.000000e+00> : vector<128xf32>
    %43 = vector.multi_reduction <add>, %42, %cst_18 [0] : vector<256x128xf32> to vector<128xf32>
    %44 = vector.shape_cast %43 : vector<128xf32> to vector<1x128xf32>
    %c0_19 = arith.constant 0 : index
    %c0_20 = arith.constant 0 : index
    %c0_21 = arith.constant 0 : index
    %45 = vector.load %arg8[%c0_19, %c0_20, %c0_21] : memref<1x4x128xf32, #tpu.memory_space<vmem>>, vector<1x4x128xf32>
    %46 = tpu.concatenate %14, %24, %34, %44 in 0 : vector<1x128xf32>, vector<1x128xf32>, vector<1x128xf32>, vector<1x128xf32> -> vector<4x128xf32>
    %47 = vector.shape_cast %46 : vector<4x128xf32> to vector<1x4x128xf32>
    %48 = arith.addf %45, %47 : vector<1x4x128xf32>
    %c0_22 = arith.constant 0 : index
    %c0_23 = arith.constant 0 : index
    %c0_24 = arith.constant 0 : index
    %49 = vector.load %arg8[%c0_22, %c0_23, %c0_24] : memref<1x4x128xf32, #tpu.memory_space<vmem>>, vector<1x4x128xf32>
    tpu.vector_store %arg8[%c0_22, %c0_23, %c0_24], %48 {strides = array<i32>} : memref<1x4x128xf32, #tpu.memory_space<vmem>>, vector<1x4x128xf32>,
    return
  }
  func.func @transform_0(%arg0: i32, %arg1: i32) -> (i32, i32) {
    %c1_i32 = arith.constant 1 : i32
    %0 = arith.muli %arg0, %c1_i32 : i32
    %1 = arith.addi %0, %arg1 : i32
    %c0_i32 = arith.constant 0 : i32
    %c0_i32_0 = arith.constant 0 : i32
    return %1, %c0_i32 : i32, i32
  }
  func.func @transform_1(%arg0: i32, %arg1: i32) -> (i32, i32) {
    %c1_i32 = arith.constant 1 : i32
    %0 = arith.muli %arg0, %c1_i32 : i32
    %1 = arith.addi %0, %arg1 : i32
    %c1_i32_0 = arith.constant 1 : i32
    %c0_i32 = arith.constant 0 : i32
    return %1, %c1_i32_0 : i32, i32
  }
  func.func @transform_2(%arg0: i32, %arg1: i32) -> (i32, i32) {
    %c1_i32 = arith.constant 1 : i32
    %0 = arith.muli %arg0, %c1_i32 : i32
    %1 = arith.addi %0, %arg1 : i32
    %c2_i32 = arith.constant 2 : i32
    %c0_i32 = arith.constant 0 : i32
    return %1, %c2_i32 : i32, i32
  }
  func.func @transform_3(%arg0: i32, %arg1: i32) -> (i32, i32) {
    %c1_i32 = arith.constant 1 : i32
    %0 = arith.muli %arg0, %c1_i32 : i32
    %1 = arith.addi %0, %arg1 : i32
    %c3_i32 = arith.constant 3 : i32
    %c0_i32 = arith.constant 0 : i32
    return %1, %c3_i32 : i32, i32
  }
  func.func @transform_4(%arg0: i32, %arg1: i32) -> (i32, i32) {
    %c0_i32 = arith.constant 0 : i32
    %c0_i32_0 = arith.constant 0 : i32
    %c0_i32_1 = arith.constant 0 : i32
    return %c0_i32, %c0_i32_0 : i32, i32
  }
  func.func @transform_5(%arg0: i32, %arg1: i32) -> (i32, i32) {
    %c0_i32 = arith.constant 0 : i32
    %c0_i32_0 = arith.constant 0 : i32
    %c0_i32_1 = arith.constant 0 : i32
    return %c0_i32, %c0_i32_0 : i32, i32
  }
  func.func @transform_6(%arg0: i32, %arg1: i32) -> (i32, i32, i32) {
    %c0_i32 = arith.constant 0 : i32
    %c0_i32_0 = arith.constant 0 : i32
    %c0_i32_1 = arith.constant 0 : i32
    return %arg0, %c0_i32, %c0_i32_0 : i32, i32, i32
  }
}

module attributes {stable_mosaic.version = 11 : i64} {
  func.func @_weighted_sum_kernel(%arg0: i32, %arg1: memref<4xf32, #tpu.memory_space<smem>>, %arg2: memref<256x128xf32, #tpu.memory_space<vmem>>, %arg3: memref<256x128xf32, #tpu.memory_space<vmem>>, %arg4: memref<256x128xf32, #tpu.memory_space<vmem>>, %arg5: memref<256x128xf32, #tpu.memory_space<vmem>>, %arg6: memref<256x128xf32, #tpu.memory_space<vmem>>) attributes {dimension_semantics = [#tpu.dimension_semantics<parallel>], iteration_bounds = array<i64: 1>, scalar_prefetch = 0 : i64, scratch_operands = 0 : i64, tpu.core_type = #tpu.core_type<tc>, window_params = [{transform_indices = @transform_0, window_bounds = array<i64: 4>}, {transform_indices = @transform_1, window_bounds = array<i64: 256, 128>}, {transform_indices = @transform_2, window_bounds = array<i64: 256, 128>}, {transform_indices = @transform_3, window_bounds = array<i64: 256, 128>}, {transform_indices = @transform_4, window_bounds = array<i64: 256, 128>}, {transform_indices = @transform_5, window_bounds = array<i64: 256, 128>}]} {
    %c0 = arith.constant 0 : index
    %0 = memref.load %arg1[%c0] : memref<4xf32, #tpu.memory_space<smem>>
    %c0_0 = arith.constant 0 : index
    %c0_1 = arith.constant 0 : index
    %1 = vector.load %arg2[%c0_0, %c0_1] : memref<256x128xf32, #tpu.memory_space<vmem>>, vector<256x128xf32>
    %2 = vector.broadcast %0 : f32 to vector<256x128xf32>
    %3 = arith.mulf %2, %1 : vector<256x128xf32>
    %c1 = arith.constant 1 : index
    %4 = memref.load %arg1[%c1] : memref<4xf32, #tpu.memory_space<smem>>
    %c0_2 = arith.constant 0 : index
    %c0_3 = arith.constant 0 : index
    %5 = vector.load %arg3[%c0_2, %c0_3] : memref<256x128xf32, #tpu.memory_space<vmem>>, vector<256x128xf32>
    %6 = vector.broadcast %4 : f32 to vector<256x128xf32>
    %7 = arith.mulf %6, %5 : vector<256x128xf32>
    %8 = arith.addf %3, %7 : vector<256x128xf32>
    %c2 = arith.constant 2 : index
    %9 = memref.load %arg1[%c2] : memref<4xf32, #tpu.memory_space<smem>>
    %c0_4 = arith.constant 0 : index
    %c0_5 = arith.constant 0 : index
    %10 = vector.load %arg4[%c0_4, %c0_5] : memref<256x128xf32, #tpu.memory_space<vmem>>, vector<256x128xf32>
    %11 = vector.broadcast %9 : f32 to vector<256x128xf32>
    %12 = arith.mulf %11, %10 : vector<256x128xf32>
    %13 = arith.addf %8, %12 : vector<256x128xf32>
    %c3 = arith.constant 3 : index
    %14 = memref.load %arg1[%c3] : memref<4xf32, #tpu.memory_space<smem>>
    %c0_6 = arith.constant 0 : index
    %c0_7 = arith.constant 0 : index
    %15 = vector.load %arg5[%c0_6, %c0_7] : memref<256x128xf32, #tpu.memory_space<vmem>>, vector<256x128xf32>
    %16 = vector.broadcast %14 : f32 to vector<256x128xf32>
    %17 = arith.mulf %16, %15 : vector<256x128xf32>
    %18 = arith.addf %13, %17 : vector<256x128xf32>
    %c0_8 = arith.constant 0 : index
    %c0_9 = arith.constant 0 : index
    %19 = vector.load %arg6[%c0_8, %c0_9] : memref<256x128xf32, #tpu.memory_space<vmem>>, vector<256x128xf32>
    tpu.vector_store %arg6[%c0_8, %c0_9], %18 {strides = array<i32>} : memref<256x128xf32, #tpu.memory_space<vmem>>, vector<256x128xf32>,
    return
  }
  func.func @transform_0(%arg0: i32) -> i32 {
    %c0_i32 = arith.constant 0 : i32
    %c0_i32_0 = arith.constant 0 : i32
    return %c0_i32 : i32
  }
  func.func @transform_1(%arg0: i32) -> (i32, i32) {
    %c0_i32 = arith.constant 0 : i32
    %c0_i32_0 = arith.constant 0 : i32
    return %arg0, %c0_i32 : i32, i32
  }
  func.func @transform_2(%arg0: i32) -> (i32, i32) {
    %c1_i32 = arith.constant 1 : i32
    %c0_i32 = arith.constant 0 : i32
    return %arg0, %c1_i32 : i32, i32
  }
  func.func @transform_3(%arg0: i32) -> (i32, i32) {
    %c2_i32 = arith.constant 2 : i32
    %c0_i32 = arith.constant 0 : i32
    return %arg0, %c2_i32 : i32, i32
  }
  func.func @transform_4(%arg0: i32) -> (i32, i32) {
    %c3_i32 = arith.constant 3 : i32
    %c0_i32 = arith.constant 0 : i32
    return %arg0, %c3_i32 : i32, i32
  }
  func.func @transform_5(%arg0: i32) -> (i32, i32) {
    %c0_i32 = arith.constant 0 : i32
    %c0_i32_0 = arith.constant 0 : i32
    return %arg0, %c0_i32 : i32, i32
  }
}

</mosaic_0001>

<llo_original>
// kernel: semantic_attention_forward.3
$region0: #{semantic_attention_forward.3}
  #allocation0 [shape = 'u32[]', space=smem, size = 0x4, offset = 0x4, fixed_abs, tag = 'smem constant byte address 0x4 - core index']
  #allocation1 [shape = 'u32[144,128]{1,0:T(1,128)}', space=vmem, size = 0x12000, scoped, tag = 'internal scratch']
  %s0 = inlined_call_operand.vmem [shape: f32[4], index: 0, kind: input, shape index: {}]
  %s1 = inlined_call_operand.vmem [shape: f32[256,512], index: 1, kind: input, shape index: {}, may-alias: {1,2,3,4}]
  %s2 = inlined_call_operand.vmem [shape: f32[256,512], index: 2, kind: input, shape index: {}, may-alias: {1,2,3,4}]
  %s3 = inlined_call_operand.vmem [shape: f32[256,512], index: 3, kind: input, shape index: {}, may-alias: {1,2,3,4}]
  %s4 = inlined_call_operand.vmem [shape: f32[256,512], index: 4, kind: input, shape index: {}, may-alias: {1,2,3,4}]
  %s5 = inlined_call_operand.hbm [shape: f32[256,128], index: 5, kind: output, shape index: {}]
  %s6 = sld [smem:[#allocation0]]
  $region186: #{semantic_attention_forward.3} parent=0
    _
  %s8 = ssub.s32 1, %s6
  %s9 = scalar_select 0, %s8, %s6
  $region1: #{semantic_attention_forward.3} parent=0
    #allocation2 [shape = 'u8[512]{0}', space=smem, size = 0x200, scoped, tag = 'input window, operand 0, single buffered']
    #allocation3 [shape = 's32[1]{0}', space=sflag, size = 0x4, scoped, tag = 'scoped memory for semantic_attention_forward.3']
    #allocation4 [shape = 's32[1]{0}', space=sflag, size = 0x4, scoped, tag = 'scoped memory for semantic_attention_forward.3']
    #allocation5 [shape = 'u8[131072]{0}', space=vmem, size = 0x20000, scoped, tag = 'input window, operand 1, single buffered']
    #allocation6 [shape = 'u8[131072]{0}', space=vmem, size = 0x20000, scoped, tag = 'input window, operand 2, single buffered']
    #allocation7 [shape = 'u8[131072]{0}', space=vmem, size = 0x20000, scoped, tag = 'input window, operand 3, single buffered']
    #allocation8 [shape = 'u8[131072]{0}', space=vmem, size = 0x20000, scoped, tag = 'input window, operand 4, single buffered']
    #allocation9 [shape = 'u8[131072]{0}', space=vmem, size = 0x20000, scoped, tag = 'output window, operand 0, single buffered']
    %10 = vsyncpa [#allocation4], 0
    %11 = vsyncpa [#allocation3], 0
    // Predicated region
    $region2: #{semantic_attention_forward.3} parent=1 // pred_check
      _
    $region3: #{semantic_attention_forward.3} parent=1 // pred_check_branch
      %13 = sbr.rel (0) target = $region5
    $region4: #{semantic_attention_forward.3} parent=1 // pred_region
      %s15 = ssub.s32 16, 16
      %16 = vsyncadd [#allocation4], %s15
      %s18 = sshll.u32 %s0, 4
      %s19 = int_to_ptr.vmem [resolvable:$true] %s18
      %21 = dma.vmem_to_smem %s19, 16, [#allocation2], [#allocation4]
    $region5: #{semantic_attention_forward.3} parent=1 // pred_fallthru
      _
    // Predicated region
    $region6: #{semantic_attention_forward.3} parent=1 // pred_check
      _
    $region7: #{semantic_attention_forward.3} parent=1 // pred_check_branch
      %23 = sbr.rel (0) target = $region9
    $region8: #{semantic_attention_forward.3} parent=1 // pred_region
      // Predicated region
      $region10: #{semantic_attention_forward.3} parent=8 // pred_check
        _
      $region11: #{semantic_attention_forward.3} parent=8 // pred_check_branch
        %25 = sbr.rel (0) target = $region13
      $region12: #{semantic_attention_forward.3} parent=8 // pred_region
        // Predicated region
        $region14: #{semantic_attention_forward.3} parent=12 // pred_check
          _
        $region15: #{semantic_attention_forward.3} parent=12 // pred_check_branch
          %27 = sbr.rel (0) target = $region17
        $region16: #{semantic_attention_forward.3} parent=12 // pred_region
          // Predicated region
          $region29: #{semantic_attention_forward.3} parent=16 // pred_check
            _
          $region30: #{semantic_attention_forward.3} parent=16 // pred_check_branch
            %104 = sbr.rel (0) target = $region32
          $region31: #{semantic_attention_forward.3} parent=16 // pred_region
            loop: start=0, step=1, limit=1
            $region33: #{semantic_attention_forward.3} parent=31 // loop_pre_header
              _
            $region34: #{semantic_attention_forward.3} parent=31 // loop_header
              %s106 = sphi 0, %s110
              %p107 = scmp.ge.s32.totalorder %s106, 1
              %s111 = sphi %s1, %s1
              %s112 = sphi [#allocation5], [#allocation5]
            $region35: #{semantic_attention_forward.3} parent=31 // loop_header_branch
              %109 = sbr.rel (%p107) target = $region39
            $region36: #{semantic_attention_forward.3} parent=31 // loop_body
              %v113 = vld [vmem:[%s111] sm:$0xff]
              %114 = vst [vmem:[%s112] sm:$0xff] %v113
              %v115 = vld [vmem:[%s111 + $0x20] sm:$0xff]
              %116 = vst [vmem:[%s112 + $0x8] sm:$0xff] %v115
              %v117 = vld [vmem:[%s111 + $0x40] sm:$0xff]
              %118 = vst [vmem:[%s112 + $0x10] sm:$0xff] %v117
              %v119 = vld [vmem:[%s111 + $0x60] sm:$0xff]
              %120 = vst [vmem:[%s112 + $0x18] sm:$0xff] %v119
              %v121 = vld [vmem:[%s111 + $0x80] sm:$0xff]
              %122 = vst [vmem:[%s112 + $0x20] sm:$0xff] %v121
              %v123 = vld [vmem:[%s111 + $0xa0] sm:$0xff]
              %124 = vst [vmem:[%s112 + $0x28] sm:$0xff] %v123
              %v125 = vld [vmem:[%s111 + $0xc0] sm:$0xff]
              %126 = vst [vmem:[%s112 + $0x30] sm:$0xff] %v125
              %v127 = vld [vmem:[%s111 + $0xe0] sm:$0xff]
              %128 = vst [vmem:[%s112 + $0x38] sm:$0xff] %v127
              %v129 = vld [vmem:[%s111 + $0x100] sm:$0xff]
              %130 = vst [vmem:[%s112 + $0x40] sm:$0xff] %v129
              %v131 = vld [vmem:[%s111 + $0x120] sm:$0xff]
              %132 = vst [vmem:[%s112 + $0x48] sm:$0xff] %v131
              %v133 = vld [vmem:[%s111 + $0x140] sm:$0xff]
              %134 = vst [vmem:[%s112 + $0x50] sm:$0xff] %v133
              %v135 = vld [vmem:[%s111 + $0x160] sm:$0xff]
              %136 = vst [vmem:[%s112 + $0x58] sm:$0xff] %v135
              %v137 = vld [vmem:[%s111 + $0x180] sm:$0xff]
              %138 = vst [vmem:[%s112 + $0x60] sm:$0xff] %v137
              %v139 = vld [vmem:[%s111 + $0x1a0] sm:$0xff]
              %140 = vst [vmem:[%s112 + $0x68] sm:$0xff] %v139
              %v141 = vld [vmem:[%s111 + $0x1c0] sm:$0xff]
              %142 = vst [vmem:[%s112 + $0x70] sm:$0xff] %v141
              %v143 = vld [vmem:[%s111 + $0x1e0] sm:$0xff]
              %144 = vst [vmem:[%s112 + $0x78] sm:$0xff] %v143
              %v145 = vld [vmem:[%s111 + $0x200] sm:$0xff]
              %146 = vst [vmem:[%s112 + $0x80] sm:$0xff] %v145
              %v147 = vld [vmem:[%s111 + $0x220] sm:$0xff]
              %148 = vst [vmem:[%s112 + $0x88] sm:$0xff] %v147
              %v149 = vld [vmem:[%s111 + $0x240] sm:$0xff]
              %150 = vst [vmem:[%s112 + $0x90] sm:$0xff] %v149
              %v151 = vld [vmem:[%s111 + $0x260] sm:$0xff]
              %152 = vst [vmem:[%s112 + $0x98] sm:$0xff] %v151
              %v153 = vld [vmem:[%s111 + $0x280] sm:$0xff]
              %154 = vst [vmem:[%s112 + $0xa0] sm:$0xff] %v153
              %v155 = vld [vmem:[%s111 + $0x2a0] sm:$0xff]
              %156 = vst [vmem:[%s112 + $0xa8] sm:$0xff] %v155
              %v157 = vld [vmem:[%s111 + $0x2c0] sm:$0xff]
              %158 = vst [vmem:[%s112 + $0xb0] sm:$0xff] %v157
              %v159 = vld [vmem:[%s111 + $0x2e0] sm:$0xff]
              %160 = vst [vmem:[%s112 + $0xb8] sm:$0xff] %v159
              %v161 = vld [vmem:[%s111 + $0x300] sm:$0xff]
              %162 = vst [vmem:[%s112 + $0xc0] sm:$0xff] %v161
              %v163 = vld [vmem:[%s111 + $0x320] sm:$0xff]
              %164 = vst [vmem:[%s112 + $0xc8] sm:$0xff] %v163
              %v165 = vld [vmem:[%s111 + $0x340] sm:$0xff]
              %166 = vst [vmem:[%s112 + $0xd0] sm:$0xff] %v165
              %v167 = vld [vmem:[%s111 + $0x360] sm:$0xff]
              %168 = vst [vmem:[%s112 + $0xd8] sm:$0xff] %v167
              %v169 = vld [vmem:[%s111 + $0x380] sm:$0xff]
              %170 = vst [vmem:[%s112 + $0xe0] sm:$0xff] %v169
              %v171 = vld [vmem:[%s111 + $0x3a0] sm:$0xff]
              %172 = vst [vmem:[%s112 + $0xe8] sm:$0xff] %v171
              %v173 = vld [vmem:[%s111 + $0x3c0] sm:$0xff]
              %174 = vst [vmem:[%s112 + $0xf0] sm:$0xff] %v173
              %v175 = vld [vmem:[%s111 + $0x3e0] sm:$0xff]
              %176 = vst [vmem:[%s112 + $0xf8] sm:$0xff] %v175
            $region37: #{semantic_attention_forward.3} parent=31 // loop_footer
              %s110 = sadd.s32 1, %s106
            $region38: #{semantic_attention_forward.3} parent=31 // loop_footer_branch
              %105 = sbr.rel target = $region34
            $region39: #{semantic_attention_forward.3} parent=31 // loop_exit
              _
          $region32: #{semantic_attention_forward.3} parent=16 // pred_fallthru
            _
          // Predicated region
          $region40: #{semantic_attention_forward.3} parent=16 // pred_check
            _
          $region41: #{semantic_attention_forward.3} parent=16 // pred_check_branch
            %178 = sbr.rel target = $region43
          $region42: #{semantic_attention_forward.3} parent=16 // pred_region
            _
          $region43: #{semantic_attention_forward.3} parent=16 // pred_fallthru
            _
        $region17: #{semantic_attention_forward.3} parent=12 // pred_fallthru
          _
        // Predicated region
        $region18: #{semantic_attention_forward.3} parent=12 // pred_check
          _
        $region19: #{semantic_attention_forward.3} parent=12 // pred_check_branch
          %29 = sbr.rel target = $region21
        $region20: #{semantic_attention_forward.3} parent=12 // pred_region
          loop: start=0, step=1, limit=1
          $region22: #{semantic_attention_forward.3} parent=20 // loop_pre_header
            _
          $region23: #{semantic_attention_forward.3} parent=20 // loop_header
            %s32 = sphi 0, %s36
            %p33 = scmp.ge.s32.totalorder %s32, 1
            %s37 = sphi %s1, %s1
            %s38 = sphi [#allocation5], [#allocation5]
          $region24: #{semantic_attention_forward.3} parent=20 // loop_header_branch
            %35 = sbr.rel (%p33) target = $region28
          $region25: #{semantic_attention_forward.3} parent=20 // loop_body
            %v39 = vld [vmem:[%s37] sm:$0xff]
            %40 = vst [vmem:[%s38] sm:$0xff] %v39
            %v41 = vld [vmem:[%s37 + $0x20] sm:$0xff]
            %42 = vst [vmem:[%s38 + $0x8] sm:$0xff] %v41
            %v43 = vld [vmem:[%s37 + $0x40] sm:$0xff]
            %44 = vst [vmem:[%s38 + $0x10] sm:$0xff] %v43
            %v45 = vld [vmem:[%s37 + $0x60] sm:$0xff]
            %46 = vst [vmem:[%s38 + $0x18] sm:$0xff] %v45
            %v47 = vld [vmem:[%s37 + $0x80] sm:$0xff]
            %48 = vst [vmem:[%s38 + $0x20] sm:$0xff] %v47
            %v49 = vld [vmem:[%s37 + $0xa0] sm:$0xff]
            %50 = vst [vmem:[%s38 + $0x28] sm:$0xff] %v49
            %v51 = vld [vmem:[%s37 + $0xc0] sm:$0xff]
            %52 = vst [vmem:[%s38 + $0x30] sm:$0xff] %v51
            %v53 = vld [vmem:[%s37 + $0xe0] sm:$0xff]
            %54 = vst [vmem:[%s38 + $0x38] sm:$0xff] %v53
            %v55 = vld [vmem:[%s37 + $0x100] sm:$0xff]
            %56 = vst [vmem:[%s38 + $0x40] sm:$0xff] %v55
            %v57 = vld [vmem:[%s37 + $0x120] sm:$0xff]
            %58 = vst [vmem:[%s38 + $0x48] sm:$0xff] %v57
            %v59 = vld [vmem:[%s37 + $0x140] sm:$0xff]
            %60 = vst [vmem:[%s38 + $0x50] sm:$0xff] %v59
            %v61 = vld [vmem:[%s37 + $0x160] sm:$0xff]
            %62 = vst [vmem:[%s38 + $0x58] sm:$0xff] %v61
            %v63 = vld [vmem:[%s37 + $0x180] sm:$0xff]
            %64 = vst [vmem:[%s38 + $0x60] sm:$0xff] %v63
            %v65 = vld [vmem:[%s37 + $0x1a0] sm:$0xff]
            %66 = vst [vmem:[%s38 + $0x68] sm:$0xff] %v65
            %v67 = vld [vmem:[%s37 + $0x1c0] sm:$0xff]
            %68 = vst [vmem:[%s38 + $0x70] sm:$0xff] %v67
            %v69 = vld [vmem:[%s37 + $0x1e0] sm:$0xff]
            %70 = vst [vmem:[%s38 + $0x78] sm:$0xff] %v69
            %v71 = vld [vmem:[%s37 + $0x200] sm:$0xff]
            %72 = vst [vmem:[%s38 + $0x80] sm:$0xff] %v71
            %v73 = vld [vmem:[%s37 + $0x220] sm:$0xff]
            %74 = vst [vmem:[%s38 + $0x88] sm:$0xff] %v73
            %v75 = vld [vmem:[%s37 + $0x240] sm:$0xff]
            %76 = vst [vmem:[%s38 + $0x90] sm:$0xff] %v75
            %v77 = vld [vmem:[%s37 + $0x260] sm:$0xff]
            %78 = vst [vmem:[%s38 + $0x98] sm:$0xff] %v77
            %v79 = vld [vmem:[%s37 + $0x280] sm:$0xff]
            %80 = vst [vmem:[%s38 + $0xa0] sm:$0xff] %v79
            %v81 = vld [vmem:[%s37 + $0x2a0] sm:$0xff]
            %82 = vst [vmem:[%s38 + $0xa8] sm:$0xff] %v81
            %v83 = vld [vmem:[%s37 + $0x2c0] sm:$0xff]
            %84 = vst [vmem:[%s38 + $0xb0] sm:$0xff] %v83
            %v85 = vld [vmem:[%s37 + $0x2e0] sm:$0xff]
            %86 = vst [vmem:[%s38 + $0xb8] sm:$0xff] %v85
            %v87 = vld [vmem:[%s37 + $0x300] sm:$0xff]
            %88 = vst [vmem:[%s38 + $0xc0] sm:$0xff] %v87
            %v89 = vld [vmem:[%s37 + $0x320] sm:$0xff]
            %90 = vst [vmem:[%s38 + $0xc8] sm:$0xff] %v89
            %v91 = vld [vmem:[%s37 + $0x340] sm:$0xff]
            %92 = vst [vmem:[%s38 + $0xd0] sm:$0xff] %v91
            %v93 = vld [vmem:[%s37 + $0x360] sm:$0xff]
            %94 = vst [vmem:[%s38 + $0xd8] sm:$0xff] %v93
            %v95 = vld [vmem:[%s37 + $0x380] sm:$0xff]
            %96 = vst [vmem:[%s38 + $0xe0] sm:$0xff] %v95
            %v97 = vld [vmem:[%s37 + $0x3a0] sm:$0xff]
            %98 = vst [vmem:[%s38 + $0xe8] sm:$0xff] %v97
            %v99 = vld [vmem:[%s37 + $0x3c0] sm:$0xff]
            %100 = vst [vmem:[%s38 + $0xf0] sm:$0xff] %v99
            %v101 = vld [vmem:[%s37 + $0x3e0] sm:$0xff]
            %102 = vst [vmem:[%s38 + $0xf8] sm:$0xff] %v101
          $region26: #{semantic_attention_forward.3} parent=20 // loop_footer
            %s36 = sadd.s32 1, %s32
          $region27: #{semantic_attention_forward.3} parent=20 // loop_footer_branch
            %31 = sbr.rel target = $region23
          $region28: #{semantic_attention_forward.3} parent=20 // loop_exit
            _
        $region21: #{semantic_attention_forward.3} parent=12 // pred_fallthru
          _
      $region13: #{semantic_attention_forward.3} parent=8 // pred_fallthru
        _
      %179 = vnop
    $region9: #{semantic_attention_forward.3} parent=1 // pred_fallthru
      _
    // Predicated region
    $region44: #{semantic_attention_forward.3} parent=1 // pred_check
      _
    $region45: #{semantic_attention_forward.3} parent=1 // pred_check_branch
      %181 = sbr.rel (0) target = $region47
    $region46: #{semantic_attention_forward.3} parent=1 // pred_region
      %s182 = scalar_lea.vmem %s2, 8
      // Predicated region
      $region48: #{semantic_attention_forward.3} parent=46 // pred_check
        _
      $region49: #{semantic_attention_forward.3} parent=46 // pred_check_branch
        %184 = sbr.rel (0) target = $region51
      $region50: #{semantic_attention_forward.3} parent=46 // pred_region
        // Predicated region
        $region52: #{semantic_attention_forward.3} parent=50 // pred_check
          _
        $region53: #{semantic_attention_forward.3} parent=50 // pred_check_branch
          %186 = sbr.rel (0) target = $region55
        $region54: #{semantic_attention_forward.3} parent=50 // pred_region
          // Predicated region
          $region67: #{semantic_attention_forward.3} parent=54 // pred_check
            _
          $region68: #{semantic_attention_forward.3} parent=54 // pred_check_branch
            %263 = sbr.rel (0) target = $region70
          $region69: #{semantic_attention_forward.3} parent=54 // pred_region
            loop: start=0, step=1, limit=1
            $region71: #{semantic_attention_forward.3} parent=69 // loop_pre_header
              _
            $region72: #{semantic_attention_forward.3} parent=69 // loop_header
              %s265 = sphi 0, %s269
              %p266 = scmp.ge.s32.totalorder %s265, 1
              %s270 = sphi %s182, %s182
              %s271 = sphi [#allocation6], [#allocation6]
            $region73: #{semantic_attention_forward.3} parent=69 // loop_header_branch
              %268 = sbr.rel (%p266) target = $region77
            $region74: #{semantic_attention_forward.3} parent=69 // loop_body
              %v272 = vld [vmem:[%s270] sm:$0xff]
              %273 = vst [vmem:[%s271] sm:$0xff] %v272
              %v274 = vld [vmem:[%s270 + $0x20] sm:$0xff]
              %275 = vst [vmem:[%s271 + $0x8] sm:$0xff] %v274
              %v276 = vld [vmem:[%s270 + $0x40] sm:$0xff]
              %277 = vst [vmem:[%s271 + $0x10] sm:$0xff] %v276
              %v278 = vld [vmem:[%s270 + $0x60] sm:$0xff]
              %279 = vst [vmem:[%s271 + $0x18] sm:$0xff] %v278
              %v280 = vld [vmem:[%s270 + $0x80] sm:$0xff]
              %281 = vst [vmem:[%s271 + $0x20] sm:$0xff] %v280
              %v282 = vld [vmem:[%s270 + $0xa0] sm:$0xff]
              %283 = vst [vmem:[%s271 + $0x28] sm:$0xff] %v282
              %v284 = vld [vmem:[%s270 + $0xc0] sm:$0xff]
              %285 = vst [vmem:[%s271 + $0x30] sm:$0xff] %v284
              %v286 = vld [vmem:[%s270 + $0xe0] sm:$0xff]
              %287 = vst [vmem:[%s271 + $0x38] sm:$0xff] %v286
              %v288 = vld [vmem:[%s270 + $0x100] sm:$0xff]
              %289 = vst [vmem:[%s271 + $0x40] sm:$0xff] %v288
              %v290 = vld [vmem:[%s270 + $0x120] sm:$0xff]
              %291 = vst [vmem:[%s271 + $0x48] sm:$0xff] %v290
              %v292 = vld [vmem:[%s270 + $0x140] sm:$0xff]
              %293 = vst [vmem:[%s271 + $0x50] sm:$0xff] %v292
              %v294 = vld [vmem:[%s270 + $0x160] sm:$0xff]
              %295 = vst [vmem:[%s271 + $0x58] sm:$0xff] %v294
              %v296 = vld [vmem:[%s270 + $0x180] sm:$0xff]
              %297 = vst [vmem:[%s271 + $0x60] sm:$0xff] %v296
              %v298 = vld [vmem:[%s270 + $0x1a0] sm:$0xff]
              %299 = vst [vmem:[%s271 + $0x68] sm:$0xff] %v298
              %v300 = vld [vmem:[%s270 + $0x1c0] sm:$0xff]
              %301 = vst [vmem:[%s271 + $0x70] sm:$0xff] %v300
              %v302 = vld [vmem:[%s270 + $0x1e0] sm:$0xff]
              %303 = vst [vmem:[%s271 + $0x78] sm:$0xff] %v302
              %v304 = vld [vmem:[%s270 + $0x200] sm:$0xff]
              %305 = vst [vmem:[%s271 + $0x80] sm:$0xff] %v304
              %v306 = vld [vmem:[%s270 + $0x220] sm:$0xff]
              %307 = vst [vmem:[%s271 + $0x88] sm:$0xff] %v306
              %v308 = vld [vmem:[%s270 + $0x240] sm:$0xff]
              %309 = vst [vmem:[%s271 + $0x90] sm:$0xff] %v308
              %v310 = vld [vmem:[%s270 + $0x260] sm:$0xff]
              %311 = vst [vmem:[%s271 + $0x98] sm:$0xff] %v310
              %v312 = vld [vmem:[%s270 + $0x280] sm:$0xff]
              %313 = vst [vmem:[%s271 + $0xa0] sm:$0xff] %v312
              %v314 = vld [vmem:[%s270 + $0x2a0] sm:$0xff]
              %315 = vst [vmem:[%s271 + $0xa8] sm:$0xff] %v314
              %v316 = vld [vmem:[%s270 + $0x2c0] sm:$0xff]
              %317 = vst [vmem:[%s271 + $0xb0] sm:$0xff] %v316
              %v318 = vld [vmem:[%s270 + $0x2e0] sm:$0xff]
              %319 = vst [vmem:[%s271 + $0xb8] sm:$0xff] %v318
              %v320 = vld [vmem:[%s270 + $0x300] sm:$0xff]
              %321 = vst [vmem:[%s271 + $0xc0] sm:$0xff] %v320
              %v322 = vld [vmem:[%s270 + $0x320] sm:$0xff]
              %323 = vst [vmem:[%s271 + $0xc8] sm:$0xff] %v322
              %v324 = vld [vmem:[%s270 + $0x340] sm:$0xff]
              %325 = vst [vmem:[%s271 + $0xd0] sm:$0xff] %v324
              %v326 = vld [vmem:[%s270 + $0x360] sm:$0xff]
              %327 = vst [vmem:[%s271 + $0xd8] sm:$0xff] %v326
              %v328 = vld [vmem:[%s270 + $0x380] sm:$0xff]
              %329 = vst [vmem:[%s271 + $0xe0] sm:$0xff] %v328
              %v330 = vld [vmem:[%s270 + $0x3a0] sm:$0xff]
              %331 = vst [vmem:[%s271 + $0xe8] sm:$0xff] %v330
              %v332 = vld [vmem:[%s270 + $0x3c0] sm:$0xff]
              %333 = vst [vmem:[%s271 + $0xf0] sm:$0xff] %v332
              %v334 = vld [vmem:[%s270 + $0x3e0] sm:$0xff]
              %335 = vst [vmem:[%s271 + $0xf8] sm:$0xff] %v334
            $region75: #{semantic_attention_forward.3} parent=69 // loop_footer
              %s269 = sadd.s32 1, %s265
            $region76: #{semantic_attention_forward.3} parent=69 // loop_footer_branch
              %264 = sbr.rel target = $region72
            $region77: #{semantic_attention_forward.3} parent=69 // loop_exit
              _
          $region70: #{semantic_attention_forward.3} parent=54 // pred_fallthru
            _
          // Predicated region
          $region78: #{semantic_attention_forward.3} parent=54 // pred_check
            _
          $region79: #{semantic_attention_forward.3} parent=54 // pred_check_branch
            %337 = sbr.rel target = $region81
          $region80: #{semantic_attention_forward.3} parent=54 // pred_region
            _
          $region81: #{semantic_attention_forward.3} parent=54 // pred_fallthru
            _
        $region55: #{semantic_attention_forward.3} parent=50 // pred_fallthru
          _
        // Predicated region
        $region56: #{semantic_attention_forward.3} parent=50 // pred_check
          _
        $region57: #{semantic_attention_forward.3} parent=50 // pred_check_branch
          %188 = sbr.rel target = $region59
        $region58: #{semantic_attention_forward.3} parent=50 // pred_region
          loop: start=0, step=1, limit=1
          $region60: #{semantic_attention_forward.3} parent=58 // loop_pre_header
            _
          $region61: #{semantic_attention_forward.3} parent=58 // loop_header
            %s191 = sphi 0, %s195
            %p192 = scmp.ge.s32.totalorder %s191, 1
            %s196 = sphi %s182, %s182
            %s197 = sphi [#allocation6], [#allocation6]
          $region62: #{semantic_attention_forward.3} parent=58 // loop_header_branch
            %194 = sbr.rel (%p192) target = $region66
          $region63: #{semantic_attention_forward.3} parent=58 // loop_body
            %v198 = vld [vmem:[%s196] sm:$0xff]
            %199 = vst [vmem:[%s197] sm:$0xff] %v198
            %v200 = vld [vmem:[%s196 + $0x20] sm:$0xff]
            %201 = vst [vmem:[%s197 + $0x8] sm:$0xff] %v200
            %v202 = vld [vmem:[%s196 + $0x40] sm:$0xff]
            %203 = vst [vmem:[%s197 + $0x10] sm:$0xff] %v202
            %v204 = vld [vmem:[%s196 + $0x60] sm:$0xff]
            %205 = vst [vmem:[%s197 + $0x18] sm:$0xff] %v204
            %v206 = vld [vmem:[%s196 + $0x80] sm:$0xff]
            %207 = vst [vmem:[%s197 + $0x20] sm:$0xff] %v206
            %v208 = vld [vmem:[%s196 + $0xa0] sm:$0xff]
            %209 = vst [vmem:[%s197 + $0x28] sm:$0xff] %v208
            %v210 = vld [vmem:[%s196 + $0xc0] sm:$0xff]
            %211 = vst [vmem:[%s197 + $0x30] sm:$0xff] %v210
            %v212 = vld [vmem:[%s196 + $0xe0] sm:$0xff]
            %213 = vst [vmem:[%s197 + $0x38] sm:$0xff] %v212
            %v214 = vld [vmem:[%s196 + $0x100] sm:$0xff]
            %215 = vst [vmem:[%s197 + $0x40] sm:$0xff] %v214
            %v216 = vld [vmem:[%s196 + $0x120] sm:$0xff]
            %217 = vst [vmem:[%s197 + $0x48] sm:$0xff] %v216
            %v218 = vld [vmem:[%s196 + $0x140] sm:$0xff]
            %219 = vst [vmem:[%s197 + $0x50] sm:$0xff] %v218
            %v220 = vld [vmem:[%s196 + $0x160] sm:$0xff]
            %221 = vst [vmem:[%s197 + $0x58] sm:$0xff] %v220
            %v222 = vld [vmem:[%s196 + $0x180] sm:$0xff]
            %223 = vst [vmem:[%s197 + $0x60] sm:$0xff] %v222
            %v224 = vld [vmem:[%s196 + $0x1a0] sm:$0xff]
            %225 = vst [vmem:[%s197 + $0x68] sm:$0xff] %v224
            %v226 = vld [vmem:[%s196 + $0x1c0] sm:$0xff]
            %227 = vst [vmem:[%s197 + $0x70] sm:$0xff] %v226
            %v228 = vld [vmem:[%s196 + $0x1e0] sm:$0xff]
            %229 = vst [vmem:[%s197 + $0x78] sm:$0xff] %v228
            %v230 = vld [vmem:[%s196 + $0x200] sm:$0xff]
            %231 = vst [vmem:[%s197 + $0x80] sm:$0xff] %v230
            %v232 = vld [vmem:[%s196 + $0x220] sm:$0xff]
            %233 = vst [vmem:[%s197 + $0x88] sm:$0xff] %v232
            %v234 = vld [vmem:[%s196 + $0x240] sm:$0xff]
            %235 = vst [vmem:[%s197 + $0x90] sm:$0xff] %v234
            %v236 = vld [vmem:[%s196 + $0x260] sm:$0xff]
            %237 = vst [vmem:[%s197 + $0x98] sm:$0xff] %v236
            %v238 = vld [vmem:[%s196 + $0x280] sm:$0xff]
            %239 = vst [vmem:[%s197 + $0xa0] sm:$0xff] %v238
            %v240 = vld [vmem:[%s196 + $0x2a0] sm:$0xff]
            %241 = vst [vmem:[%s197 + $0xa8] sm:$0xff] %v240
            %v242 = vld [vmem:[%s196 + $0x2c0] sm:$0xff]
            %243 = vst [vmem:[%s197 + $0xb0] sm:$0xff] %v242
            %v244 = vld [vmem:[%s196 + $0x2e0] sm:$0xff]
            %245 = vst [vmem:[%s197 + $0xb8] sm:$0xff] %v244
            %v246 = vld [vmem:[%s196 + $0x300] sm:$0xff]
            %247 = vst [vmem:[%s197 + $0xc0] sm:$0xff] %v246
            %v248 = vld [vmem:[%s196 + $0x320] sm:$0xff]
            %249 = vst [vmem:[%s197 + $0xc8] sm:$0xff] %v248
            %v250 = vld [vmem:[%s196 + $0x340] sm:$0xff]
            %251 = vst [vmem:[%s197 + $0xd0] sm:$0xff] %v250
            %v252 = vld [vmem:[%s196 + $0x360] sm:$0xff]
            %253 = vst [vmem:[%s197 + $0xd8] sm:$0xff] %v252
            %v254 = vld [vmem:[%s196 + $0x380] sm:$0xff]
            %255 = vst [vmem:[%s197 + $0xe0] sm:$0xff] %v254
            %v256 = vld [vmem:[%s196 + $0x3a0] sm:$0xff]
            %257 = vst [vmem:[%s197 + $0xe8] sm:$0xff] %v256
            %v258 = vld [vmem:[%s196 + $0x3c0] sm:$0xff]
            %259 = vst [vmem:[%s197 + $0xf0] sm:$0xff] %v258
            %v260 = vld [vmem:[%s196 + $0x3e0] sm:$0xff]
            %261 = vst [vmem:[%s197 + $0xf8] sm:$0xff] %v260
          $region64: #{semantic_attention_forward.3} parent=58 // loop_footer
            %s195 = sadd.s32 1, %s191
          $region65: #{semantic_attention_forward.3} parent=58 // loop_footer_branch
            %190 = sbr.rel target = $region61
          $region66: #{semantic_attention_forward.3} parent=58 // loop_exit
            _
        $region59: #{semantic_attention_forward.3} parent=50 // pred_fallthru
          _
      $region51: #{semantic_attention_forward.3} parent=46 // pred_fallthru
        _
      %338 = vnop
    $region47: #{semantic_attention_forward.3} parent=1 // pred_fallthru
      _
    // Predicated region
    $region82: #{semantic_attention_forward.3} parent=1 // pred_check
      _
    $region83: #{semantic_attention_forward.3} parent=1 // pred_check_branch
      %340 = sbr.rel (0) target = $region85
    $region84: #{semantic_attention_forward.3} parent=1 // pred_region
      %s341 = scalar_lea.vmem %s3, 16
      // Predicated region
      $region86: #{semantic_attention_forward.3} parent=84 // pred_check
        _
      $region87: #{semantic_attention_forward.3} parent=84 // pred_check_branch
        %343 = sbr.rel (0) target = $region89
      $region88: #{semantic_attention_forward.3} parent=84 // pred_region
        // Predicated region
        $region90: #{semantic_attention_forward.3} parent=88 // pred_check
          _
        $region91: #{semantic_attention_forward.3} parent=88 // pred_check_branch
          %345 = sbr.rel (0) target = $region93
        $region92: #{semantic_attention_forward.3} parent=88 // pred_region
          // Predicated region
          $region105: #{semantic_attention_forward.3} parent=92 // pred_check
            _
          $region106: #{semantic_attention_forward.3} parent=92 // pred_check_branch
            %422 = sbr.rel (0) target = $region108
          $region107: #{semantic_attention_forward.3} parent=92 // pred_region
            loop: start=0, step=1, limit=1
            $region109: #{semantic_attention_forward.3} parent=107 // loop_pre_header
              _
            $region110: #{semantic_attention_forward.3} parent=107 // loop_header
              %s424 = sphi 0, %s428
              %p425 = scmp.ge.s32.totalorder %s424, 1
              %s429 = sphi %s341, %s341
              %s430 = sphi [#allocation7], [#allocation7]
            $region111: #{semantic_attention_forward.3} parent=107 // loop_header_branch
              %427 = sbr.rel (%p425) target = $region115
            $region112: #{semantic_attention_forward.3} parent=107 // loop_body
              %v431 = vld [vmem:[%s429] sm:$0xff]
              %432 = vst [vmem:[%s430] sm:$0xff] %v431
              %v433 = vld [vmem:[%s429 + $0x20] sm:$0xff]
              %434 = vst [vmem:[%s430 + $0x8] sm:$0xff] %v433
              %v435 = vld [vmem:[%s429 + $0x40] sm:$0xff]
              %436 = vst [vmem:[%s430 + $0x10] sm:$0xff] %v435
              %v437 = vld [vmem:[%s429 + $0x60] sm:$0xff]
              %438 = vst [vmem:[%s430 + $0x18] sm:$0xff] %v437
              %v439 = vld [vmem:[%s429 + $0x80] sm:$0xff]
              %440 = vst [vmem:[%s430 + $0x20] sm:$0xff] %v439
              %v441 = vld [vmem:[%s429 + $0xa0] sm:$0xff]
              %442 = vst [vmem:[%s430 + $0x28] sm:$0xff] %v441
              %v443 = vld [vmem:[%s429 + $0xc0] sm:$0xff]
              %444 = vst [vmem:[%s430 + $0x30] sm:$0xff] %v443
              %v445 = vld [vmem:[%s429 + $0xe0] sm:$0xff]
              %446 = vst [vmem:[%s430 + $0x38] sm:$0xff] %v445
              %v447 = vld [vmem:[%s429 + $0x100] sm:$0xff]
              %448 = vst [vmem:[%s430 + $0x40] sm:$0xff] %v447
              %v449 = vld [vmem:[%s429 + $0x120] sm:$0xff]
              %450 = vst [vmem:[%s430 + $0x48] sm:$0xff] %v449
              %v451 = vld [vmem:[%s429 + $0x140] sm:$0xff]
              %452 = vst [vmem:[%s430 + $0x50] sm:$0xff] %v451
              %v453 = vld [vmem:[%s429 + $0x160] sm:$0xff]
              %454 = vst [vmem:[%s430 + $0x58] sm:$0xff] %v453
              %v455 = vld [vmem:[%s429 + $0x180] sm:$0xff]
              %456 = vst [vmem:[%s430 + $0x60] sm:$0xff] %v455
              %v457 = vld [vmem:[%s429 + $0x1a0] sm:$0xff]
              %458 = vst [vmem:[%s430 + $0x68] sm:$0xff] %v457
              %v459 = vld [vmem:[%s429 + $0x1c0] sm:$0xff]
              %460 = vst [vmem:[%s430 + $0x70] sm:$0xff] %v459
              %v461 = vld [vmem:[%s429 + $0x1e0] sm:$0xff]
              %462 = vst [vmem:[%s430 + $0x78] sm:$0xff] %v461
              %v463 = vld [vmem:[%s429 + $0x200] sm:$0xff]
              %464 = vst [vmem:[%s430 + $0x80] sm:$0xff] %v463
              %v465 = vld [vmem:[%s429 + $0x220] sm:$0xff]
              %466 = vst [vmem:[%s430 + $0x88] sm:$0xff] %v465
              %v467 = vld [vmem:[%s429 + $0x240] sm:$0xff]
              %468 = vst [vmem:[%s430 + $0x90] sm:$0xff] %v467
              %v469 = vld [vmem:[%s429 + $0x260] sm:$0xff]
              %470 = vst [vmem:[%s430 + $0x98] sm:$0xff] %v469
              %v471 = vld [vmem:[%s429 + $0x280] sm:$0xff]
              %472 = vst [vmem:[%s430 + $0xa0] sm:$0xff] %v471
              %v473 = vld [vmem:[%s429 + $0x2a0] sm:$0xff]
              %474 = vst [vmem:[%s430 + $0xa8] sm:$0xff] %v473
              %v475 = vld [vmem:[%s429 + $0x2c0] sm:$0xff]
              %476 = vst [vmem:[%s430 + $0xb0] sm:$0xff] %v475
              %v477 = vld [vmem:[%s429 + $0x2e0] sm:$0xff]
              %478 = vst [vmem:[%s430 + $0xb8] sm:$0xff] %v477
              %v479 = vld [vmem:[%s429 + $0x300] sm:$0xff]
              %480 = vst [vmem:[%s430 + $0xc0] sm:$0xff] %v479
              %v481 = vld [vmem:[%s429 + $0x320] sm:$0xff]
              %482 = vst [vmem:[%s430 + $0xc8] sm:$0xff] %v481
              %v483 = vld [vmem:[%s429 + $0x340] sm:$0xff]
              %484 = vst [vmem:[%s430 + $0xd0] sm:$0xff] %v483
              %v485 = vld [vmem:[%s429 + $0x360] sm:$0xff]
              %486 = vst [vmem:[%s430 + $0xd8] sm:$0xff] %v485
              %v487 = vld [vmem:[%s429 + $0x380] sm:$0xff]
              %488 = vst [vmem:[%s430 + $0xe0] sm:$0xff] %v487
              %v489 = vld [vmem:[%s429 + $0x3a0] sm:$0xff]
              %490 = vst [vmem:[%s430 + $0xe8] sm:$0xff] %v489
              %v491 = vld [vmem:[%s429 + $0x3c0] sm:$0xff]
              %492 = vst [vmem:[%s430 + $0xf0] sm:$0xff] %v491
              %v493 = vld [vmem:[%s429 + $0x3e0] sm:$0xff]
              %494 = vst [vmem:[%s430 + $0xf8] sm:$0xff] %v493
            $region113: #{semantic_attention_forward.3} parent=107 // loop_footer
              %s428 = sadd.s32 1, %s424
            $region114: #{semantic_attention_forward.3} parent=107 // loop_footer_branch
              %423 = sbr.rel target = $region110
            $region115: #{semantic_attention_forward.3} parent=107 // loop_exit
              _
          $region108: #{semantic_attention_forward.3} parent=92 // pred_fallthru
            _
          // Predicated region
          $region116: #{semantic_attention_forward.3} parent=92 // pred_check
            _
          $region117: #{semantic_attention_forward.3} parent=92 // pred_check_branch
            %496 = sbr.rel target = $region119
          $region118: #{semantic_attention_forward.3} parent=92 // pred_region
            _
          $region119: #{semantic_attention_forward.3} parent=92 // pred_fallthru
            _
        $region93: #{semantic_attention_forward.3} parent=88 // pred_fallthru
          _
        // Predicated region
        $region94: #{semantic_attention_forward.3} parent=88 // pred_check
          _
        $region95: #{semantic_attention_forward.3} parent=88 // pred_check_branch
          %347 = sbr.rel target = $region97
        $region96: #{semantic_attention_forward.3} parent=88 // pred_region
          loop: start=0, step=1, limit=1
          $region98: #{semantic_attention_forward.3} parent=96 // loop_pre_header
            _
          $region99: #{semantic_attention_forward.3} parent=96 // loop_header
            %s350 = sphi 0, %s354
            %p351 = scmp.ge.s32.totalorder %s350, 1
            %s355 = sphi %s341, %s341
            %s356 = sphi [#allocation7], [#allocation7]
          $region100: #{semantic_attention_forward.3} parent=96 // loop_header_branch
            %353 = sbr.rel (%p351) target = $region104
          $region101: #{semantic_attention_forward.3} parent=96 // loop_body
            %v357 = vld [vmem:[%s355] sm:$0xff]
            %358 = vst [vmem:[%s356] sm:$0xff] %v357
            %v359 = vld [vmem:[%s355 + $0x20] sm:$0xff]
            %360 = vst [vmem:[%s356 + $0x8] sm:$0xff] %v359
            %v361 = vld [vmem:[%s355 + $0x40] sm:$0xff]
            %362 = vst [vmem:[%s356 + $0x10] sm:$0xff] %v361
            %v363 = vld [vmem:[%s355 + $0x60] sm:$0xff]
            %364 = vst [vmem:[%s356 + $0x18] sm:$0xff] %v363
            %v365 = vld [vmem:[%s355 + $0x80] sm:$0xff]
            %366 = vst [vmem:[%s356 + $0x20] sm:$0xff] %v365
            %v367 = vld [vmem:[%s355 + $0xa0] sm:$0xff]
            %368 = vst [vmem:[%s356 + $0x28] sm:$0xff] %v367
            %v369 = vld [vmem:[%s355 + $0xc0] sm:$0xff]
            %370 = vst [vmem:[%s356 + $0x30] sm:$0xff] %v369
            %v371 = vld [vmem:[%s355 + $0xe0] sm:$0xff]
            %372 = vst [vmem:[%s356 + $0x38] sm:$0xff] %v371
            %v373 = vld [vmem:[%s355 + $0x100] sm:$0xff]
            %374 = vst [vmem:[%s356 + $0x40] sm:$0xff] %v373
            %v375 = vld [vmem:[%s355 + $0x120] sm:$0xff]
            %376 = vst [vmem:[%s356 + $0x48] sm:$0xff] %v375
            %v377 = vld [vmem:[%s355 + $0x140] sm:$0xff]
            %378 = vst [vmem:[%s356 + $0x50] sm:$0xff] %v377
            %v379 = vld [vmem:[%s355 + $0x160] sm:$0xff]
            %380 = vst [vmem:[%s356 + $0x58] sm:$0xff] %v379
            %v381 = vld [vmem:[%s355 + $0x180] sm:$0xff]
            %382 = vst [vmem:[%s356 + $0x60] sm:$0xff] %v381
            %v383 = vld [vmem:[%s355 + $0x1a0] sm:$0xff]
            %384 = vst [vmem:[%s356 + $0x68] sm:$0xff] %v383
            %v385 = vld [vmem:[%s355 + $0x1c0] sm:$0xff]
            %386 = vst [vmem:[%s356 + $0x70] sm:$0xff] %v385
            %v387 = vld [vmem:[%s355 + $0x1e0] sm:$0xff]
            %388 = vst [vmem:[%s356 + $0x78] sm:$0xff] %v387
            %v389 = vld [vmem:[%s355 + $0x200] sm:$0xff]
            %390 = vst [vmem:[%s356 + $0x80] sm:$0xff] %v389
            %v391 = vld [vmem:[%s355 + $0x220] sm:$0xff]
            %392 = vst [vmem:[%s356 + $0x88] sm:$0xff] %v391
            %v393 = vld [vmem:[%s355 + $0x240] sm:$0xff]
            %394 = vst [vmem:[%s356 + $0x90] sm:$0xff] %v393
            %v395 = vld [vmem:[%s355 + $0x260] sm:$0xff]
            %396 = vst [vmem:[%s356 + $0x98] sm:$0xff] %v395
            %v397 = vld [vmem:[%s355 + $0x280] sm:$0xff]
            %398 = vst [vmem:[%s356 + $0xa0] sm:$0xff] %v397
            %v399 = vld [vmem:[%s355 + $0x2a0] sm:$0xff]
            %400 = vst [vmem:[%s356 + $0xa8] sm:$0xff] %v399
            %v401 = vld [vmem:[%s355 + $0x2c0] sm:$0xff]
            %402 = vst [vmem:[%s356 + $0xb0] sm:$0xff] %v401
            %v403 = vld [vmem:[%s355 + $0x2e0] sm:$0xff]
            %404 = vst [vmem:[%s356 + $0xb8] sm:$0xff] %v403
            %v405 = vld [vmem:[%s355 + $0x300] sm:$0xff]
            %406 = vst [vmem:[%s356 + $0xc0] sm:$0xff] %v405
            %v407 = vld [vmem:[%s355 + $0x320] sm:$0xff]
            %408 = vst [vmem:[%s356 + $0xc8] sm:$0xff] %v407
            %v409 = vld [vmem:[%s355 + $0x340] sm:$0xff]
            %410 = vst [vmem:[%s356 + $0xd0] sm:$0xff] %v409
            %v411 = vld [vmem:[%s355 + $0x360] sm:$0xff]
            %412 = vst [vmem:[%s356 + $0xd8] sm:$0xff] %v411
            %v413 = vld [vmem:[%s355 + $0x380] sm:$0xff]
            %414 = vst [vmem:[%s356 + $0xe0] sm:$0xff] %v413
            %v415 = vld [vmem:[%s355 + $0x3a0] sm:$0xff]
            %416 = vst [vmem:[%s356 + $0xe8] sm:$0xff] %v415
            %v417 = vld [vmem:[%s355 + $0x3c0] sm:$0xff]
            %418 = vst [vmem:[%s356 + $0xf0] sm:$0xff] %v417
            %v419 = vld [vmem:[%s355 + $0x3e0] sm:$0xff]
            %420 = vst [vmem:[%s356 + $0xf8] sm:$0xff] %v419
          $region102: #{semantic_attention_forward.3} parent=96 // loop_footer
            %s354 = sadd.s32 1, %s350
          $region103: #{semantic_attention_forward.3} parent=96 // loop_footer_branch
            %349 = sbr.rel target = $region99
          $region104: #{semantic_attention_forward.3} parent=96 // loop_exit
            _
        $region97: #{semantic_attention_forward.3} parent=88 // pred_fallthru
          _
      $region89: #{semantic_attention_forward.3} parent=84 // pred_fallthru
        _
      %497 = vnop
    $region85: #{semantic_attention_forward.3} parent=1 // pred_fallthru
      _
    // Predicated region
    $region120: #{semantic_attention_forward.3} parent=1 // pred_check
      _
    $region121: #{semantic_attention_forward.3} parent=1 // pred_check_branch
      %499 = sbr.rel (0) target = $region123
    $region122: #{semantic_attention_forward.3} parent=1 // pred_region
      %s500 = scalar_lea.vmem %s4, 24
      // Predicated region
      $region124: #{semantic_attention_forward.3} parent=122 // pred_check
        _
      $region125: #{semantic_attention_forward.3} parent=122 // pred_check_branch
        %502 = sbr.rel (0) target = $region127
      $region126: #{semantic_attention_forward.3} parent=122 // pred_region
        // Predicated region
        $region128: #{semantic_attention_forward.3} parent=126 // pred_check
          _
        $region129: #{semantic_attention_forward.3} parent=126 // pred_check_branch
          %504 = sbr.rel (0) target = $region131
        $region130: #{semantic_attention_forward.3} parent=126 // pred_region
          // Predicated region
          $region143: #{semantic_attention_forward.3} parent=130 // pred_check
            _
          $region144: #{semantic_attention_forward.3} parent=130 // pred_check_branch
            %581 = sbr.rel (0) target = $region146
          $region145: #{semantic_attention_forward.3} parent=130 // pred_region
            loop: start=0, step=1, limit=1
            $region147: #{semantic_attention_forward.3} parent=145 // loop_pre_header
              _
            $region148: #{semantic_attention_forward.3} parent=145 // loop_header
              %s583 = sphi 0, %s587
              %p584 = scmp.ge.s32.totalorder %s583, 1
              %s588 = sphi %s500, %s500
              %s589 = sphi [#allocation8], [#allocation8]
            $region149: #{semantic_attention_forward.3} parent=145 // loop_header_branch
              %586 = sbr.rel (%p584) target = $region153
            $region150: #{semantic_attention_forward.3} parent=145 // loop_body
              %v590 = vld [vmem:[%s588] sm:$0xff]
              %591 = vst [vmem:[%s589] sm:$0xff] %v590
              %v592 = vld [vmem:[%s588 + $0x20] sm:$0xff]
              %593 = vst [vmem:[%s589 + $0x8] sm:$0xff] %v592
              %v594 = vld [vmem:[%s588 + $0x40] sm:$0xff]
              %595 = vst [vmem:[%s589 + $0x10] sm:$0xff] %v594
              %v596 = vld [vmem:[%s588 + $0x60] sm:$0xff]
              %597 = vst [vmem:[%s589 + $0x18] sm:$0xff] %v596
              %v598 = vld [vmem:[%s588 + $0x80] sm:$0xff]
              %599 = vst [vmem:[%s589 + $0x20] sm:$0xff] %v598
              %v600 = vld [vmem:[%s588 + $0xa0] sm:$0xff]
              %601 = vst [vmem:[%s589 + $0x28] sm:$0xff] %v600
              %v602 = vld [vmem:[%s588 + $0xc0] sm:$0xff]
              %603 = vst [vmem:[%s589 + $0x30] sm:$0xff] %v602
              %v604 = vld [vmem:[%s588 + $0xe0] sm:$0xff]
              %605 = vst [vmem:[%s589 + $0x38] sm:$0xff] %v604
              %v606 = vld [vmem:[%s588 + $0x100] sm:$0xff]
              %607 = vst [vmem:[%s589 + $0x40] sm:$0xff] %v606
              %v608 = vld [vmem:[%s588 + $0x120] sm:$0xff]
              %609 = vst [vmem:[%s589 + $0x48] sm:$0xff] %v608
              %v610 = vld [vmem:[%s588 + $0x140] sm:$0xff]
              %611 = vst [vmem:[%s589 + $0x50] sm:$0xff] %v610
              %v612 = vld [vmem:[%s588 + $0x160] sm:$0xff]
              %613 = vst [vmem:[%s589 + $0x58] sm:$0xff] %v612
              %v614 = vld [vmem:[%s588 + $0x180] sm:$0xff]
              %615 = vst [vmem:[%s589 + $0x60] sm:$0xff] %v614
              %v616 = vld [vmem:[%s588 + $0x1a0] sm:$0xff]
              %617 = vst [vmem:[%s589 + $0x68] sm:$0xff] %v616
              %v618 = vld [vmem:[%s588 + $0x1c0] sm:$0xff]
              %619 = vst [vmem:[%s589 + $0x70] sm:$0xff] %v618
              %v620 = vld [vmem:[%s588 + $0x1e0] sm:$0xff]
              %621 = vst [vmem:[%s589 + $0x78] sm:$0xff] %v620
              %v622 = vld [vmem:[%s588 + $0x200] sm:$0xff]
              %623 = vst [vmem:[%s589 + $0x80] sm:$0xff] %v622
              %v624 = vld [vmem:[%s588 + $0x220] sm:$0xff]
              %625 = vst [vmem:[%s589 + $0x88] sm:$0xff] %v624
              %v626 = vld [vmem:[%s588 + $0x240] sm:$0xff]
              %627 = vst [vmem:[%s589 + $0x90] sm:$0xff] %v626
              %v628 = vld [vmem:[%s588 + $0x260] sm:$0xff]
              %629 = vst [vmem:[%s589 + $0x98] sm:$0xff] %v628
              %v630 = vld [vmem:[%s588 + $0x280] sm:$0xff]
              %631 = vst [vmem:[%s589 + $0xa0] sm:$0xff] %v630
              %v632 = vld [vmem:[%s588 + $0x2a0] sm:$0xff]
              %633 = vst [vmem:[%s589 + $0xa8] sm:$0xff] %v632
              %v634 = vld [vmem:[%s588 + $0x2c0] sm:$0xff]
              %635 = vst [vmem:[%s589 + $0xb0] sm:$0xff] %v634
              %v636 = vld [vmem:[%s588 + $0x2e0] sm:$0xff]
              %637 = vst [vmem:[%s589 + $0xb8] sm:$0xff] %v636
              %v638 = vld [vmem:[%s588 + $0x300] sm:$0xff]
              %639 = vst [vmem:[%s589 + $0xc0] sm:$0xff] %v638
              %v640 = vld [vmem:[%s588 + $0x320] sm:$0xff]
              %641 = vst [vmem:[%s589 + $0xc8] sm:$0xff] %v640
              %v642 = vld [vmem:[%s588 + $0x340] sm:$0xff]
              %643 = vst [vmem:[%s589 + $0xd0] sm:$0xff] %v642
              %v644 = vld [vmem:[%s588 + $0x360] sm:$0xff]
              %645 = vst [vmem:[%s589 + $0xd8] sm:$0xff] %v644
              %v646 = vld [vmem:[%s588 + $0x380] sm:$0xff]
              %647 = vst [vmem:[%s589 + $0xe0] sm:$0xff] %v646
              %v648 = vld [vmem:[%s588 + $0x3a0] sm:$0xff]
              %649 = vst [vmem:[%s589 + $0xe8] sm:$0xff] %v648
              %v650 = vld [vmem:[%s588 + $0x3c0] sm:$0xff]
              %651 = vst [vmem:[%s589 + $0xf0] sm:$0xff] %v650
              %v652 = vld [vmem:[%s588 + $0x3e0] sm:$0xff]
              %653 = vst [vmem:[%s589 + $0xf8] sm:$0xff] %v652
            $region151: #{semantic_attention_forward.3} parent=145 // loop_footer
              %s587 = sadd.s32 1, %s583
            $region152: #{semantic_attention_forward.3} parent=145 // loop_footer_branch
              %582 = sbr.rel target = $region148
            $region153: #{semantic_attention_forward.3} parent=145 // loop_exit
              _
          $region146: #{semantic_attention_forward.3} parent=130 // pred_fallthru
            _
          // Predicated region
          $region154: #{semantic_attention_forward.3} parent=130 // pred_check
            _
          $region155: #{semantic_attention_forward.3} parent=130 // pred_check_branch
            %655 = sbr.rel target = $region157
          $region156: #{semantic_attention_forward.3} parent=130 // pred_region
            _
          $region157: #{semantic_attention_forward.3} parent=130 // pred_fallthru
            _
        $region131: #{semantic_attention_forward.3} parent=126 // pred_fallthru
          _
        // Predicated region
        $region132: #{semantic_attention_forward.3} parent=126 // pred_check
          _
        $region133: #{semantic_attention_forward.3} parent=126 // pred_check_branch
          %506 = sbr.rel target = $region135
        $region134: #{semantic_attention_forward.3} parent=126 // pred_region
          loop: start=0, step=1, limit=1
          $region136: #{semantic_attention_forward.3} parent=134 // loop_pre_header
            _
          $region137: #{semantic_attention_forward.3} parent=134 // loop_header
            %s509 = sphi 0, %s513
            %p510 = scmp.ge.s32.totalorder %s509, 1
            %s514 = sphi %s500, %s500
            %s515 = sphi [#allocation8], [#allocation8]
          $region138: #{semantic_attention_forward.3} parent=134 // loop_header_branch
            %512 = sbr.rel (%p510) target = $region142
          $region139: #{semantic_attention_forward.3} parent=134 // loop_body
            %v516 = vld [vmem:[%s514] sm:$0xff]
            %517 = vst [vmem:[%s515] sm:$0xff] %v516
            %v518 = vld [vmem:[%s514 + $0x20] sm:$0xff]
            %519 = vst [vmem:[%s515 + $0x8] sm:$0xff] %v518
            %v520 = vld [vmem:[%s514 + $0x40] sm:$0xff]
            %521 = vst [vmem:[%s515 + $0x10] sm:$0xff] %v520
            %v522 = vld [vmem:[%s514 + $0x60] sm:$0xff]
            %523 = vst [vmem:[%s515 + $0x18] sm:$0xff] %v522
            %v524 = vld [vmem:[%s514 + $0x80] sm:$0xff]
            %525 = vst [vmem:[%s515 + $0x20] sm:$0xff] %v524
            %v526 = vld [vmem:[%s514 + $0xa0] sm:$0xff]
            %527 = vst [vmem:[%s515 + $0x28] sm:$0xff] %v526
            %v528 = vld [vmem:[%s514 + $0xc0] sm:$0xff]
            %529 = vst [vmem:[%s515 + $0x30] sm:$0xff] %v528
            %v530 = vld [vmem:[%s514 + $0xe0] sm:$0xff]
            %531 = vst [vmem:[%s515 + $0x38] sm:$0xff] %v530
            %v532 = vld [vmem:[%s514 + $0x100] sm:$0xff]
            %533 = vst [vmem:[%s515 + $0x40] sm:$0xff] %v532
            %v534 = vld [vmem:[%s514 + $0x120] sm:$0xff]
            %535 = vst [vmem:[%s515 + $0x48] sm:$0xff] %v534
            %v536 = vld [vmem:[%s514 + $0x140] sm:$0xff]
            %537 = vst [vmem:[%s515 + $0x50] sm:$0xff] %v536
            %v538 = vld [vmem:[%s514 + $0x160] sm:$0xff]
            %539 = vst [vmem:[%s515 + $0x58] sm:$0xff] %v538
            %v540 = vld [vmem:[%s514 + $0x180] sm:$0xff]
            %541 = vst [vmem:[%s515 + $0x60] sm:$0xff] %v540
            %v542 = vld [vmem:[%s514 + $0x1a0] sm:$0xff]
            %543 = vst [vmem:[%s515 + $0x68] sm:$0xff] %v542
            %v544 = vld [vmem:[%s514 + $0x1c0] sm:$0xff]
            %545 = vst [vmem:[%s515 + $0x70] sm:$0xff] %v544
            %v546 = vld [vmem:[%s514 + $0x1e0] sm:$0xff]
            %547 = vst [vmem:[%s515 + $0x78] sm:$0xff] %v546
            %v548 = vld [vmem:[%s514 + $0x200] sm:$0xff]
            %549 = vst [vmem:[%s515 + $0x80] sm:$0xff] %v548
            %v550 = vld [vmem:[%s514 + $0x220] sm:$0xff]
            %551 = vst [vmem:[%s515 + $0x88] sm:$0xff] %v550
            %v552 = vld [vmem:[%s514 + $0x240] sm:$0xff]
            %553 = vst [vmem:[%s515 + $0x90] sm:$0xff] %v552
            %v554 = vld [vmem:[%s514 + $0x260] sm:$0xff]
            %555 = vst [vmem:[%s515 + $0x98] sm:$0xff] %v554
            %v556 = vld [vmem:[%s514 + $0x280] sm:$0xff]
            %557 = vst [vmem:[%s515 + $0xa0] sm:$0xff] %v556
            %v558 = vld [vmem:[%s514 + $0x2a0] sm:$0xff]
            %559 = vst [vmem:[%s515 + $0xa8] sm:$0xff] %v558
            %v560 = vld [vmem:[%s514 + $0x2c0] sm:$0xff]
            %561 = vst [vmem:[%s515 + $0xb0] sm:$0xff] %v560
            %v562 = vld [vmem:[%s514 + $0x2e0] sm:$0xff]
            %563 = vst [vmem:[%s515 + $0xb8] sm:$0xff] %v562
            %v564 = vld [vmem:[%s514 + $0x300] sm:$0xff]
            %565 = vst [vmem:[%s515 + $0xc0] sm:$0xff] %v564
            %v566 = vld [vmem:[%s514 + $0x320] sm:$0xff]
            %567 = vst [vmem:[%s515 + $0xc8] sm:$0xff] %v566
            %v568 = vld [vmem:[%s514 + $0x340] sm:$0xff]
            %569 = vst [vmem:[%s515 + $0xd0] sm:$0xff] %v568
            %v570 = vld [vmem:[%s514 + $0x360] sm:$0xff]
            %571 = vst [vmem:[%s515 + $0xd8] sm:$0xff] %v570
            %v572 = vld [vmem:[%s514 + $0x380] sm:$0xff]
            %573 = vst [vmem:[%s515 + $0xe0] sm:$0xff] %v572
            %v574 = vld [vmem:[%s514 + $0x3a0] sm:$0xff]
            %575 = vst [vmem:[%s515 + $0xe8] sm:$0xff] %v574
            %v576 = vld [vmem:[%s514 + $0x3c0] sm:$0xff]
            %577 = vst [vmem:[%s515 + $0xf0] sm:$0xff] %v576
            %v578 = vld [vmem:[%s514 + $0x3e0] sm:$0xff]
            %579 = vst [vmem:[%s515 + $0xf8] sm:$0xff] %v578
          $region140: #{semantic_attention_forward.3} parent=134 // loop_footer
            %s513 = sadd.s32 1, %s509
          $region141: #{semantic_attention_forward.3} parent=134 // loop_footer_branch
            %508 = sbr.rel target = $region137
          $region142: #{semantic_attention_forward.3} parent=134 // loop_exit
            _
        $region135: #{semantic_attention_forward.3} parent=126 // pred_fallthru
          _
      $region127: #{semantic_attention_forward.3} parent=122 // pred_fallthru
        _
      %656 = vnop
    $region123: #{semantic_attention_forward.3} parent=1 // pred_fallthru
      _
    // Predicated region
    $region158: #{semantic_attention_forward.3} parent=1 // pred_check
      _
    $region159: #{semantic_attention_forward.3} parent=1 // pred_check_branch
      %658 = sbr.rel (0) target = $region161
    $region160: #{semantic_attention_forward.3} parent=1 // pred_region
      %659 = dma.done [#allocation4], 16
    $region161: #{semantic_attention_forward.3} parent=1 // pred_fallthru
      _
    // Predicated region
    $region162: #{semantic_attention_forward.3} parent=1 // pred_check
      _
    $region163: #{semantic_attention_forward.3} parent=1 // pred_check_branch
      %661 = sbr.rel (0) target = $region165
    $region164: #{semantic_attention_forward.3} parent=1 // pred_region
      _
    $region165: #{semantic_attention_forward.3} parent=1 // pred_fallthru
      _
    // Predicated region
    $region166: #{semantic_attention_forward.3} parent=1 // pred_check
      _
    $region167: #{semantic_attention_forward.3} parent=1 // pred_check_branch
      %663 = sbr.rel (0) target = $region169
    $region168: #{semantic_attention_forward.3} parent=1 // pred_region
      _
    $region169: #{semantic_attention_forward.3} parent=1 // pred_fallthru
      _
    // Predicated region
    $region170: #{semantic_attention_forward.3} parent=1 // pred_check
      _
    $region171: #{semantic_attention_forward.3} parent=1 // pred_check_branch
      %665 = sbr.rel (0) target = $region173
    $region172: #{semantic_attention_forward.3} parent=1 // pred_region
      _
    $region173: #{semantic_attention_forward.3} parent=1 // pred_fallthru
      _
    // Predicated region
    $region174: #{semantic_attention_forward.3} parent=1 // pred_check
      _
    $region175: #{semantic_attention_forward.3} parent=1 // pred_check_branch
      %667 = sbr.rel (0) target = $region177
    $region176: #{semantic_attention_forward.3} parent=1 // pred_region
      _
    $region177: #{semantic_attention_forward.3} parent=1 // pred_fallthru
      _
    %668 = sfence
    %s669 = sld [smem:[#allocation2]]
    %v670 = vld [vmem:[#allocation5] sm:$0xff]
    %v671 = vld [vmem:[#allocation5 + $0x8] sm:$0xff]
    %v672 = vld [vmem:[#allocation5 + $0x10] sm:$0xff]
    %v673 = vld [vmem:[#allocation5 + $0x18] sm:$0xff]
    %v674 = vld [vmem:[#allocation5 + $0x20] sm:$0xff]
    %v675 = vld [vmem:[#allocation5 + $0x28] sm:$0xff]
    %v676 = vld [vmem:[#allocation5 + $0x30] sm:$0xff]
    %v677 = vld [vmem:[#allocation5 + $0x38] sm:$0xff]
    %v678 = vld [vmem:[#allocation5 + $0x40] sm:$0xff]
    %v679 = vld [vmem:[#allocation5 + $0x48] sm:$0xff]
    %v680 = vld [vmem:[#allocation5 + $0x50] sm:$0xff]
    %v681 = vld [vmem:[#allocation5 + $0x58] sm:$0xff]
    %v682 = vld [vmem:[#allocation5 + $0x60] sm:$0xff]
    %v683 = vld [vmem:[#allocation5 + $0x68] sm:$0xff]
    %v684 = vld [vmem:[#allocation5 + $0x70] sm:$0xff]
    %v685 = vld [vmem:[#allocation5 + $0x78] sm:$0xff]
    %v686 = vld [vmem:[#allocation5 + $0x80] sm:$0xff]
    %v687 = vld [vmem:[#allocation5 + $0x88] sm:$0xff]
    %v688 = vld [vmem:[#allocation5 + $0x90] sm:$0xff]
    %v689 = vld [vmem:[#allocation5 + $0x98] sm:$0xff]
    %v690 = vld [vmem:[#allocation5 + $0xa0] sm:$0xff]
    %v691 = vld [vmem:[#allocation5 + $0xa8] sm:$0xff]
    %v692 = vld [vmem:[#allocation5 + $0xb0] sm:$0xff]
    %v693 = vld [vmem:[#allocation5 + $0xb8] sm:$0xff]
    %v694 = vld [vmem:[#allocation5 + $0xc0] sm:$0xff]
    %v695 = vld [vmem:[#allocation5 + $0xc8] sm:$0xff]
    %v696 = vld [vmem:[#allocation5 + $0xd0] sm:$0xff]
    %v697 = vld [vmem:[#allocation5 + $0xd8] sm:$0xff]
    %v698 = vld [vmem:[#allocation5 + $0xe0] sm:$0xff]
    %v699 = vld [vmem:[#allocation5 + $0xe8] sm:$0xff]
    %v700 = vld [vmem:[#allocation5 + $0xf0] sm:$0xff]
    %v701 = vld [vmem:[#allocation5 + $0xf8] sm:$0xff]
    %v702 = vstv %s669
    %v703 = vmul.f32 %v702, %v670
    %v704 = vmul.f32 %v702, %v671
    %v705 = vmul.f32 %v702, %v672
    %v706 = vmul.f32 %v702, %v673
    %v707 = vmul.f32 %v702, %v674
    %v708 = vmul.f32 %v702, %v675
    %v709 = vmul.f32 %v702, %v676
    %v710 = vmul.f32 %v702, %v677
    %v711 = vmul.f32 %v702, %v678
    %v712 = vmul.f32 %v702, %v679
    %v713 = vmul.f32 %v702, %v680
    %v714 = vmul.f32 %v702, %v681
    %v715 = vmul.f32 %v702, %v682
    %v716 = vmul.f32 %v702, %v683
    %v717 = vmul.f32 %v702, %v684
    %v718 = vmul.f32 %v702, %v685
    %v719 = vmul.f32 %v702, %v686
    %v720 = vmul.f32 %v702, %v687
    %v721 = vmul.f32 %v702, %v688
    %v722 = vmul.f32 %v702, %v689
    %v723 = vmul.f32 %v702, %v690
    %v724 = vmul.f32 %v702, %v691
    %v725 = vmul.f32 %v702, %v692
    %v726 = vmul.f32 %v702, %v693
    %v727 = vmul.f32 %v702, %v694
    %v728 = vmul.f32 %v702, %v695
    %v729 = vmul.f32 %v702, %v696
    %v730 = vmul.f32 %v702, %v697
    %v731 = vmul.f32 %v702, %v698
    %v732 = vmul.f32 %v702, %v699
    %v733 = vmul.f32 %v702, %v700
    %v734 = vmul.f32 %v702, %v701
    %s735 = sld [smem:[#allocation2 + $0x1]]
    %v736 = vld [vmem:[#allocation6] sm:$0xff]
    %v737 = vld [vmem:[#allocation6 + $0x8] sm:$0xff]
    %v738 = vld [vmem:[#allocation6 + $0x10] sm:$0xff]
    %v739 = vld [vmem:[#allocation6 + $0x18] sm:$0xff]
    %v740 = vld [vmem:[#allocation6 + $0x20] sm:$0xff]
    %v741 = vld [vmem:[#allocation6 + $0x28] sm:$0xff]
    %v742 = vld [vmem:[#allocation6 + $0x30] sm:$0xff]
    %v743 = vld [vmem:[#allocation6 + $0x38] sm:$0xff]
    %v744 = vld [vmem:[#allocation6 + $0x40] sm:$0xff]
    %v745 = vld [vmem:[#allocation6 + $0x48] sm:$0xff]
    %v746 = vld [vmem:[#allocation6 + $0x50] sm:$0xff]
    %v747 = vld [vmem:[#allocation6 + $0x58] sm:$0xff]
    %v748 = vld [vmem:[#allocation6 + $0x60] sm:$0xff]
    %v749 = vld [vmem:[#allocation6 + $0x68] sm:$0xff]
    %v750 = vld [vmem:[#allocation6 + $0x70] sm:$0xff]
    %v751 = vld [vmem:[#allocation6 + $0x78] sm:$0xff]
    %v752 = vld [vmem:[#allocation6 + $0x80] sm:$0xff]
    %v753 = vld [vmem:[#allocation6 + $0x88] sm:$0xff]
    %v754 = vld [vmem:[#allocation6 + $0x90] sm:$0xff]
    %v755 = vld [vmem:[#allocation6 + $0x98] sm:$0xff]
    %v756 = vld [vmem:[#allocation6 + $0xa0] sm:$0xff]
    %v757 = vld [vmem:[#allocation6 + $0xa8] sm:$0xff]
    %v758 = vld [vmem:[#allocation6 + $0xb0] sm:$0xff]
    %v759 = vld [vmem:[#allocation6 + $0xb8] sm:$0xff]
    %v760 = vld [vmem:[#allocation6 + $0xc0] sm:$0xff]
    %v761 = vld [vmem:[#allocation6 + $0xc8] sm:$0xff]
    %v762 = vld [vmem:[#allocation6 + $0xd0] sm:$0xff]
    %v763 = vld [vmem:[#allocation6 + $0xd8] sm:$0xff]
    %v764 = vld [vmem:[#allocation6 + $0xe0] sm:$0xff]
    %v765 = vld [vmem:[#allocation6 + $0xe8] sm:$0xff]
    %v766 = vld [vmem:[#allocation6 + $0xf0] sm:$0xff]
    %v767 = vld [vmem:[#allocation6 + $0xf8] sm:$0xff]
    %v768 = vstv %s735
    %v769 = vmul.f32 %v768, %v736
    %v770 = vmul.f32 %v768, %v737
    %v771 = vmul.f32 %v768, %v738
    %v772 = vmul.f32 %v768, %v739
    %v773 = vmul.f32 %v768, %v740
    %v774 = vmul.f32 %v768, %v741
    %v775 = vmul.f32 %v768, %v742
    %v776 = vmul.f32 %v768, %v743
    %v777 = vmul.f32 %v768, %v744
    %v778 = vmul.f32 %v768, %v745
    %v779 = vmul.f32 %v768, %v746
    %v780 = vmul.f32 %v768, %v747
    %v781 = vmul.f32 %v768, %v748
    %v782 = vmul.f32 %v768, %v749
    %v783 = vmul.f32 %v768, %v750
    %v784 = vmul.f32 %v768, %v751
    %v785 = vmul.f32 %v768, %v752
    %v786 = vmul.f32 %v768, %v753
    %v787 = vmul.f32 %v768, %v754
    %v788 = vmul.f32 %v768, %v755
    %v789 = vmul.f32 %v768, %v756
    %v790 = vmul.f32 %v768, %v757
    %v791 = vmul.f32 %v768, %v758
    %v792 = vmul.f32 %v768, %v759
    %v793 = vmul.f32 %v768, %v760
    %v794 = vmul.f32 %v768, %v761
    %v795 = vmul.f32 %v768, %v762
    %v796 = vmul.f32 %v768, %v763
    %v797 = vmul.f32 %v768, %v764
    %v798 = vmul.f32 %v768, %v765
    %v799 = vmul.f32 %v768, %v766
    %v800 = vmul.f32 %v768, %v767
    %v801 = vadd.f32 %v703, %v769
    %v802 = vadd.f32 %v704, %v770
    %v803 = vadd.f32 %v705, %v771
    %v804 = vadd.f32 %v706, %v772
    %v805 = vadd.f32 %v707, %v773
    %v806 = vadd.f32 %v708, %v774
    %v807 = vadd.f32 %v709, %v775
    %v808 = vadd.f32 %v710, %v776
    %v809 = vadd.f32 %v711, %v777
    %v810 = vadd.f32 %v712, %v778
    %v811 = vadd.f32 %v713, %v779
    %v812 = vadd.f32 %v714, %v780
    %v813 = vadd.f32 %v715, %v781
    %v814 = vadd.f32 %v716, %v782
    %v815 = vadd.f32 %v717, %v783
    %v816 = vadd.f32 %v718, %v784
    %v817 = vadd.f32 %v719, %v785
    %v818 = vadd.f32 %v720, %v786
    %v819 = vadd.f32 %v721, %v787
    %v820 = vadd.f32 %v722, %v788
    %v821 = vadd.f32 %v723, %v789
    %v822 = vadd.f32 %v724, %v790
    %v823 = vadd.f32 %v725, %v791
    %v824 = vadd.f32 %v726, %v792
    %v825 = vadd.f32 %v727, %v793
    %v826 = vadd.f32 %v728, %v794
    %v827 = vadd.f32 %v729, %v795
    %v828 = vadd.f32 %v730, %v796
    %v829 = vadd.f32 %v731, %v797
    %v830 = vadd.f32 %v732, %v798
    %v831 = vadd.f32 %v733, %v799
    %v832 = vadd.f32 %v734, %v800
    %s833 = sld [smem:[#allocation2 + $0x2]]
    %v834 = vld [vmem:[#allocation7] sm:$0xff]
    %v835 = vld [vmem:[#allocation7 + $0x8] sm:$0xff]
    %v836 = vld [vmem:[#allocation7 + $0x10] sm:$0xff]
    %v837 = vld [vmem:[#allocation7 + $0x18] sm:$0xff]
    %v838 = vld [vmem:[#allocation7 + $0x20] sm:$0xff]
    %v839 = vld [vmem:[#allocation7 + $0x28] sm:$0xff]
    %v840 = vld [vmem:[#allocation7 + $0x30] sm:$0xff]
    %v841 = vld [vmem:[#allocation7 + $0x38] sm:$0xff]
    %v842 = vld [vmem:[#allocation7 + $0x40] sm:$0xff]
    %v843 = vld [vmem:[#allocation7 + $0x48] sm:$0xff]
    %v844 = vld [vmem:[#allocation7 + $0x50] sm:$0xff]
    %v845 = vld [vmem:[#allocation7 + $0x58] sm:$0xff]
    %v846 = vld [vmem:[#allocation7 + $0x60] sm:$0xff]
    %v847 = vld [vmem:[#allocation7 + $0x68] sm:$0xff]
    %v848 = vld [vmem:[#allocation7 + $0x70] sm:$0xff]
    %v849 = vld [vmem:[#allocation7 + $0x78] sm:$0xff]
    %v850 = vld [vmem:[#allocation7 + $0x80] sm:$0xff]
    %v851 = vld [vmem:[#allocation7 + $0x88] sm:$0xff]
    %v852 = vld [vmem:[#allocation7 + $0x90] sm:$0xff]
    %v853 = vld [vmem:[#allocation7 + $0x98] sm:$0xff]
    %v854 = vld [vmem:[#allocation7 + $0xa0] sm:$0xff]
    %v855 = vld [vmem:[#allocation7 + $0xa8] sm:$0xff]
    %v856 = vld [vmem:[#allocation7 + $0xb0] sm:$0xff]
    %v857 = vld [vmem:[#allocation7 + $0xb8] sm:$0xff]
    %v858 = vld [vmem:[#allocation7 + $0xc0] sm:$0xff]
    %v859 = vld [vmem:[#allocation7 + $0xc8] sm:$0xff]
    %v860 = vld [vmem:[#allocation7 + $0xd0] sm:$0xff]
    %v861 = vld [vmem:[#allocation7 + $0xd8] sm:$0xff]
    %v862 = vld [vmem:[#allocation7 + $0xe0] sm:$0xff]
    %v863 = vld [vmem:[#allocation7 + $0xe8] sm:$0xff]
    %v864 = vld [vmem:[#allocation7 + $0xf0] sm:$0xff]
    %v865 = vld [vmem:[#allocation7 + $0xf8] sm:$0xff]
    %v866 = vstv %s833
    %v867 = vmul.f32 %v866, %v834
    %v868 = vmul.f32 %v866, %v835
    %v869 = vmul.f32 %v866, %v836
    %v870 = vmul.f32 %v866, %v837
    %v871 = vmul.f32 %v866, %v838
    %v872 = vmul.f32 %v866, %v839
    %v873 = vmul.f32 %v866, %v840
    %v874 = vmul.f32 %v866, %v841
    %v875 = vmul.f32 %v866, %v842
    %v876 = vmul.f32 %v866, %v843
    %v877 = vmul.f32 %v866, %v844
    %v878 = vmul.f32 %v866, %v845
    %v879 = vmul.f32 %v866, %v846
    %v880 = vmul.f32 %v866, %v847
    %v881 = vmul.f32 %v866, %v848
    %v882 = vmul.f32 %v866, %v849
    %v883 = vmul.f32 %v866, %v850
    %v884 = vmul.f32 %v866, %v851
    %v885 = vmul.f32 %v866, %v852
    %v886 = vmul.f32 %v866, %v853
    %v887 = vmul.f32 %v866, %v854
    %v888 = vmul.f32 %v866, %v855
    %v889 = vmul.f32 %v866, %v856
    %v890 = vmul.f32 %v866, %v857
    %v891 = vmul.f32 %v866, %v858
    %v892 = vmul.f32 %v866, %v859
    %v893 = vmul.f32 %v866, %v860
    %v894 = vmul.f32 %v866, %v861
    %v895 = vmul.f32 %v866, %v862
    %v896 = vmul.f32 %v866, %v863
    %v897 = vmul.f32 %v866, %v864
    %v898 = vmul.f32 %v866, %v865
    %v899 = vadd.f32 %v801, %v867
    %v900 = vadd.f32 %v802, %v868
    %v901 = vadd.f32 %v803, %v869
    %v902 = vadd.f32 %v804, %v870
    %v903 = vadd.f32 %v805, %v871
    %v904 = vadd.f32 %v806, %v872
    %v905 = vadd.f32 %v807, %v873
    %v906 = vadd.f32 %v808, %v874
    %v907 = vadd.f32 %v809, %v875
    %v908 = vadd.f32 %v810, %v876
    %v909 = vadd.f32 %v811, %v877
    %v910 = vadd.f32 %v812, %v878
    %v911 = vadd.f32 %v813, %v879
    %v912 = vadd.f32 %v814, %v880
    %v913 = vadd.f32 %v815, %v881
    %v914 = vadd.f32 %v816, %v882
    %v915 = vadd.f32 %v817, %v883
    %v916 = vadd.f32 %v818, %v884
    %v917 = vadd.f32 %v819, %v885
    %v918 = vadd.f32 %v820, %v886
    %v919 = vadd.f32 %v821, %v887
    %v920 = vadd.f32 %v822, %v888
    %v921 = vadd.f32 %v823, %v889
    %v922 = vadd.f32 %v824, %v890
    %v923 = vadd.f32 %v825, %v891
    %v924 = vadd.f32 %v826, %v892
    %v925 = vadd.f32 %v827, %v893
    %v926 = vadd.f32 %v828, %v894
    %v927 = vadd.f32 %v829, %v895
    %v928 = vadd.f32 %v830, %v896
    %v929 = vadd.f32 %v831, %v897
    %v930 = vadd.f32 %v832, %v898
    %s931 = sld [smem:[#allocation2 + $0x3]]
    %v932 = vld [vmem:[#allocation8] sm:$0xff]
    %v933 = vld [vmem:[#allocation8 + $0x8] sm:$0xff]
    %v934 = vld [vmem:[#allocation8 + $0x10] sm:$0xff]
    %v935 = vld [vmem:[#allocation8 + $0x18] sm:$0xff]
    %v936 = vld [vmem:[#allocation8 + $0x20] sm:$0xff]
    %v937 = vld [vmem:[#allocation8 + $0x28] sm:$0xff]
    %v938 = vld [vmem:[#allocation8 + $0x30] sm:$0xff]
    %v939 = vld [vmem:[#allocation8 + $0x38] sm:$0xff]
    %v940 = vld [vmem:[#allocation8 + $0x40] sm:$0xff]
    %v941 = vld [vmem:[#allocation8 + $0x48] sm:$0xff]
    %v942 = vld [vmem:[#allocation8 + $0x50] sm:$0xff]
    %v943 = vld [vmem:[#allocation8 + $0x58] sm:$0xff]
    %v944 = vld [vmem:[#allocation8 + $0x60] sm:$0xff]
    %v945 = vld [vmem:[#allocation8 + $0x68] sm:$0xff]
    %v946 = vld [vmem:[#allocation8 + $0x70] sm:$0xff]
    %v947 = vld [vmem:[#allocation8 + $0x78] sm:$0xff]
    %v948 = vld [vmem:[#allocation8 + $0x80] sm:$0xff]
    %v949 = vld [vmem:[#allocation8 + $0x88] sm:$0xff]
    %v950 = vld [vmem:[#allocation8 + $0x90] sm:$0xff]
    %v951 = vld [vmem:[#allocation8 + $0x98] sm:$0xff]
    %v952 = vld [vmem:[#allocation8 + $0xa0] sm:$0xff]
    %v953 = vld [vmem:[#allocation8 + $0xa8] sm:$0xff]
    %v954 = vld [vmem:[#allocation8 + $0xb0] sm:$0xff]
    %v955 = vld [vmem:[#allocation8 + $0xb8] sm:$0xff]
    %v956 = vld [vmem:[#allocation8 + $0xc0] sm:$0xff]
    %v957 = vld [vmem:[#allocation8 + $0xc8] sm:$0xff]
    %v958 = vld [vmem:[#allocation8 + $0xd0] sm:$0xff]
    %v959 = vld [vmem:[#allocation8 + $0xd8] sm:$0xff]
    %v960 = vld [vmem:[#allocation8 + $0xe0] sm:$0xff]
    %v961 = vld [vmem:[#allocation8 + $0xe8] sm:$0xff]
    %v962 = vld [vmem:[#allocation8 + $0xf0] sm:$0xff]
    %v963 = vld [vmem:[#allocation8 + $0xf8] sm:$0xff]
    %v964 = vstv %s931
    %v965 = vmul.f32 %v964, %v932
    %v966 = vmul.f32 %v964, %v933
    %v967 = vmul.f32 %v964, %v934
    %v968 = vmul.f32 %v964, %v935
    %v969 = vmul.f32 %v964, %v936
    %v970 = vmul.f32 %v964, %v937
    %v971 = vmul.f32 %v964, %v938
    %v972 = vmul.f32 %v964, %v939
    %v973 = vmul.f32 %v964, %v940
    %v974 = vmul.f32 %v964, %v941
    %v975 = vmul.f32 %v964, %v942
    %v976 = vmul.f32 %v964, %v943
    %v977 = vmul.f32 %v964, %v944
    %v978 = vmul.f32 %v964, %v945
    %v979 = vmul.f32 %v964, %v946
    %v980 = vmul.f32 %v964, %v947
    %v981 = vmul.f32 %v964, %v948
    %v982 = vmul.f32 %v964, %v949
    %v983 = vmul.f32 %v964, %v950
    %v984 = vmul.f32 %v964, %v951
    %v985 = vmul.f32 %v964, %v952
    %v986 = vmul.f32 %v964, %v953
    %v987 = vmul.f32 %v964, %v954
    %v988 = vmul.f32 %v964, %v955
    %v989 = vmul.f32 %v964, %v956
    %v990 = vmul.f32 %v964, %v957
    %v991 = vmul.f32 %v964, %v958
    %v992 = vmul.f32 %v964, %v959
    %v993 = vmul.f32 %v964, %v960
    %v994 = vmul.f32 %v964, %v961
    %v995 = vmul.f32 %v964, %v962
    %v996 = vmul.f32 %v964, %v963
    %v997 = vadd.f32 %v899, %v965
    %v998 = vadd.f32 %v900, %v966
    %v999 = vadd.f32 %v901, %v967
    %v1000 = vadd.f32 %v902, %v968
    %v1001 = vadd.f32 %v903, %v969
    %v1002 = vadd.f32 %v904, %v970
    %v1003 = vadd.f32 %v905, %v971
    %v1004 = vadd.f32 %v906, %v972
    %v1005 = vadd.f32 %v907, %v973
    %v1006 = vadd.f32 %v908, %v974
    %v1007 = vadd.f32 %v909, %v975
    %v1008 = vadd.f32 %v910, %v976
    %v1009 = vadd.f32 %v911, %v977
    %v1010 = vadd.f32 %v912, %v978
    %v1011 = vadd.f32 %v913, %v979
    %v1012 = vadd.f32 %v914, %v980
    %v1013 = vadd.f32 %v915, %v981
    %v1014 = vadd.f32 %v916, %v982
    %v1015 = vadd.f32 %v917, %v983
    %v1016 = vadd.f32 %v918, %v984
    %v1017 = vadd.f32 %v919, %v985
    %v1018 = vadd.f32 %v920, %v986
    %v1019 = vadd.f32 %v921, %v987
    %v1020 = vadd.f32 %v922, %v988
    %v1021 = vadd.f32 %v923, %v989
    %v1022 = vadd.f32 %v924, %v990
    %v1023 = vadd.f32 %v925, %v991
    %v1024 = vadd.f32 %v926, %v992
    %v1025 = vadd.f32 %v927, %v993
    %v1026 = vadd.f32 %v928, %v994
    %v1027 = vadd.f32 %v929, %v995
    %v1028 = vadd.f32 %v930, %v996
    %1029 = vst [vmem:[#allocation9] sm:$0xff] %v997
    %1030 = vst [vmem:[#allocation9 + $0x8] sm:$0xff] %v998
    %1031 = vst [vmem:[#allocation9 + $0x10] sm:$0xff] %v999
    %1032 = vst [vmem:[#allocation9 + $0x18] sm:$0xff] %v1000
    %1033 = vst [vmem:[#allocation9 + $0x20] sm:$0xff] %v1001
    %1034 = vst [vmem:[#allocation9 + $0x28] sm:$0xff] %v1002
    %1035 = vst [vmem:[#allocation9 + $0x30] sm:$0xff] %v1003
    %1036 = vst [vmem:[#allocation9 + $0x38] sm:$0xff] %v1004
    %1037 = vst [vmem:[#allocation9 + $0x40] sm:$0xff] %v1005
    %1038 = vst [vmem:[#allocation9 + $0x48] sm:$0xff] %v1006
    %1039 = vst [vmem:[#allocation9 + $0x50] sm:$0xff] %v1007
    %1040 = vst [vmem:[#allocation9 + $0x58] sm:$0xff] %v1008
    %1041 = vst [vmem:[#allocation9 + $0x60] sm:$0xff] %v1009
    %1042 = vst [vmem:[#allocation9 + $0x68] sm:$0xff] %v1010
    %1043 = vst [vmem:[#allocation9 + $0x70] sm:$0xff] %v1011
    %1044 = vst [vmem:[#allocation9 + $0x78] sm:$0xff] %v1012
    %1045 = vst [vmem:[#allocation9 + $0x80] sm:$0xff] %v1013
    %1046 = vst [vmem:[#allocation9 + $0x88] sm:$0xff] %v1014
    %1047 = vst [vmem:[#allocation9 + $0x90] sm:$0xff] %v1015
    %1048 = vst [vmem:[#allocation9 + $0x98] sm:$0xff] %v1016
    %1049 = vst [vmem:[#allocation9 + $0xa0] sm:$0xff] %v1017
    %1050 = vst [vmem:[#allocation9 + $0xa8] sm:$0xff] %v1018
    %1051 = vst [vmem:[#allocation9 + $0xb0] sm:$0xff] %v1019
    %1052 = vst [vmem:[#allocation9 + $0xb8] sm:$0xff] %v1020
    %1053 = vst [vmem:[#allocation9 + $0xc0] sm:$0xff] %v1021
    %1054 = vst [vmem:[#allocation9 + $0xc8] sm:$0xff] %v1022
    %1055 = vst [vmem:[#allocation9 + $0xd0] sm:$0xff] %v1023
    %1056 = vst [vmem:[#allocation9 + $0xd8] sm:$0xff] %v1024
    %1057 = vst [vmem:[#allocation9 + $0xe0] sm:$0xff] %v1025
    %1058 = vst [vmem:[#allocation9 + $0xe8] sm:$0xff] %v1026
    %1059 = vst [vmem:[#allocation9 + $0xf0] sm:$0xff] %v1027
    %1060 = vst [vmem:[#allocation9 + $0xf8] sm:$0xff] %v1028
    // Predicated region
    $region178: #{semantic_attention_forward.3} parent=1 // pred_check
      _
    $region179: #{semantic_attention_forward.3} parent=1 // pred_check_branch
      %1062 = sbr.rel (0) target = $region181
    $region180: #{semantic_attention_forward.3} parent=1 // pred_region
      %s1064 = ssub.s32 4096, 4096
      %1065 = vsyncadd [#allocation3], %s1064
      %s1066 = sshll.u32 [#allocation9], 4
      %s1067 = int_to_ptr.vmem [resolvable:$true] %s1066
      %1072 = dma.vmem_to_hbm [thread:$0]  %s1067, 4096, %s5, [#allocation3], 128, 128, 8
    $region181: #{semantic_attention_forward.3} parent=1 // pred_fallthru
      _
    // Predicated region
    $region182: #{semantic_attention_forward.3} parent=1 // pred_check
      _
    $region183: #{semantic_attention_forward.3} parent=1 // pred_check_branch
      %1074 = sbr.rel (0) target = $region185
    $region184: #{semantic_attention_forward.3} parent=1 // pred_region
      %1075 = dma.done [#allocation3], 4096
    $region185: #{semantic_attention_forward.3} parent=1 // pred_fallthru
      _
    %1076 = vsyncpa [#allocation3], 1
    %1077 = vsyncpa [#allocation4], 1

// kernel: semantic_attention_forward.2
$region0: #{semantic_attention_forward.2}
  #allocation0 [shape = 'u32[]', space=smem, size = 0x4, offset = 0x4, fixed_abs, tag = 'smem constant byte address 0x4 - core index']
  #allocation1 [shape = 'u32[144,128]{1,0:T(1,128)}', space=vmem, size = 0x12000, scoped, tag = 'internal scratch']
  %s0 = inlined_call_operand.vmem [shape: f32[256,512], index: 0, kind: input, shape index: {}, may-alias: {0,1,2,3}]
  %s1 = inlined_call_operand.vmem [shape: f32[256,512], index: 1, kind: input, shape index: {}, may-alias: {0,1,2,3}]
  %s2 = inlined_call_operand.vmem [shape: f32[256,512], index: 2, kind: input, shape index: {}, may-alias: {0,1,2,3}]
  %s3 = inlined_call_operand.vmem [shape: f32[256,512], index: 3, kind: input, shape index: {}, may-alias: {0,1,2,3}]
  %s4 = inlined_call_operand.vmem [shape: bf16[128,128], index: 4, kind: input, shape index: {}]
  %s5 = inlined_call_operand.vmem [shape: f32[1,128], index: 5, kind: input, shape index: {}]
  %s6 = inlined_call_operand.vmem [shape: f32[1,4,128], index: 6, kind: output, shape index: {}]
  %s7 = sld [smem:[#allocation0]]
  $region190: #{semantic_attention_forward.2} parent=0
    _
  %s9 = ssub.s32 1, %s7
  %s10 = scalar_select 0, %s9, %s7
  $region1: #{semantic_attention_forward.2} parent=0
    #allocation2 [shape = 'u8[131072]{0}', space=vmem, size = 0x20000, scoped, tag = 'input window, operand 0, single buffered']
    #allocation3 [shape = 'u8[131072]{0}', space=vmem, size = 0x20000, scoped, tag = 'input window, operand 1, single buffered']
    #allocation4 [shape = 'u8[131072]{0}', space=vmem, size = 0x20000, scoped, tag = 'input window, operand 2, single buffered']
    #allocation5 [shape = 'u8[131072]{0}', space=vmem, size = 0x20000, scoped, tag = 'input window, operand 3, single buffered']
    // Predicated region
    $region2: #{semantic_attention_forward.2} parent=1 // pred_check
      _
    $region3: #{semantic_attention_forward.2} parent=1 // pred_check_branch
      %12 = sbr.rel (0) target = $region5
    $region4: #{semantic_attention_forward.2} parent=1 // pred_region
      %s13 = sadd.s32 0, 0
      %s14 = smul.u32 32, %s13
      %s15 = smul.addr %s14, 4
      %s16 = smul.addr %s15, 8
      %s17 = scalar_lea.vmem %s0, %s16
      // Predicated region
      $region6: #{semantic_attention_forward.2} parent=4 // pred_check
        _
      $region7: #{semantic_attention_forward.2} parent=4 // pred_check_branch
        %19 = sbr.rel (0) target = $region9
      $region8: #{semantic_attention_forward.2} parent=4 // pred_region
        // Predicated region
        $region10: #{semantic_attention_forward.2} parent=8 // pred_check
          _
        $region11: #{semantic_attention_forward.2} parent=8 // pred_check_branch
          %21 = sbr.rel (0) target = $region13
        $region12: #{semantic_attention_forward.2} parent=8 // pred_region
          // Predicated region
          $region25: #{semantic_attention_forward.2} parent=12 // pred_check
            _
          $region26: #{semantic_attention_forward.2} parent=12 // pred_check_branch
            %98 = sbr.rel (0) target = $region28
          $region27: #{semantic_attention_forward.2} parent=12 // pred_region
            loop: start=0, step=1, limit=1
            $region29: #{semantic_attention_forward.2} parent=27 // loop_pre_header
              _
            $region30: #{semantic_attention_forward.2} parent=27 // loop_header
              %s100 = sphi 0, %s104
              %p101 = scmp.ge.s32.totalorder %s100, 1
              %s105 = sphi %s17, %s17
              %s106 = sphi [#allocation2], [#allocation2]
            $region31: #{semantic_attention_forward.2} parent=27 // loop_header_branch
              %103 = sbr.rel (%p101) target = $region35
            $region32: #{semantic_attention_forward.2} parent=27 // loop_body
              %v107 = vld [vmem:[%s105] sm:$0xff]
              %108 = vst [vmem:[%s106] sm:$0xff] %v107
              %v109 = vld [vmem:[%s105 + $0x20] sm:$0xff]
              %110 = vst [vmem:[%s106 + $0x8] sm:$0xff] %v109
              %v111 = vld [vmem:[%s105 + $0x40] sm:$0xff]
              %112 = vst [vmem:[%s106 + $0x10] sm:$0xff] %v111
              %v113 = vld [vmem:[%s105 + $0x60] sm:$0xff]
              %114 = vst [vmem:[%s106 + $0x18] sm:$0xff] %v113
              %v115 = vld [vmem:[%s105 + $0x80] sm:$0xff]
              %116 = vst [vmem:[%s106 + $0x20] sm:$0xff] %v115
              %v117 = vld [vmem:[%s105 + $0xa0] sm:$0xff]
              %118 = vst [vmem:[%s106 + $0x28] sm:$0xff] %v117
              %v119 = vld [vmem:[%s105 + $0xc0] sm:$0xff]
              %120 = vst [vmem:[%s106 + $0x30] sm:$0xff] %v119
              %v121 = vld [vmem:[%s105 + $0xe0] sm:$0xff]
              %122 = vst [vmem:[%s106 + $0x38] sm:$0xff] %v121
              %v123 = vld [vmem:[%s105 + $0x100] sm:$0xff]
              %124 = vst [vmem:[%s106 + $0x40] sm:$0xff] %v123
              %v125 = vld [vmem:[%s105 + $0x120] sm:$0xff]
              %126 = vst [vmem:[%s106 + $0x48] sm:$0xff] %v125
              %v127 = vld [vmem:[%s105 + $0x140] sm:$0xff]
              %128 = vst [vmem:[%s106 + $0x50] sm:$0xff] %v127
              %v129 = vld [vmem:[%s105 + $0x160] sm:$0xff]
              %130 = vst [vmem:[%s106 + $0x58] sm:$0xff] %v129
              %v131 = vld [vmem:[%s105 + $0x180] sm:$0xff]
              %132 = vst [vmem:[%s106 + $0x60] sm:$0xff] %v131
              %v133 = vld [vmem:[%s105 + $0x1a0] sm:$0xff]
              %134 = vst [vmem:[%s106 + $0x68] sm:$0xff] %v133
              %v135 = vld [vmem:[%s105 + $0x1c0] sm:$0xff]
              %136 = vst [vmem:[%s106 + $0x70] sm:$0xff] %v135
              %v137 = vld [vmem:[%s105 + $0x1e0] sm:$0xff]
              %138 = vst [vmem:[%s106 + $0x78] sm:$0xff] %v137
              %v139 = vld [vmem:[%s105 + $0x200] sm:$0xff]
              %140 = vst [vmem:[%s106 + $0x80] sm:$0xff] %v139
              %v141 = vld [vmem:[%s105 + $0x220] sm:$0xff]
              %142 = vst [vmem:[%s106 + $0x88] sm:$0xff] %v141
              %v143 = vld [vmem:[%s105 + $0x240] sm:$0xff]
              %144 = vst [vmem:[%s106 + $0x90] sm:$0xff] %v143
              %v145 = vld [vmem:[%s105 + $0x260] sm:$0xff]
              %146 = vst [vmem:[%s106 + $0x98] sm:$0xff] %v145
              %v147 = vld [vmem:[%s105 + $0x280] sm:$0xff]
              %148 = vst [vmem:[%s106 + $0xa0] sm:$0xff] %v147
              %v149 = vld [vmem:[%s105 + $0x2a0] sm:$0xff]
              %150 = vst [vmem:[%s106 + $0xa8] sm:$0xff] %v149
              %v151 = vld [vmem:[%s105 + $0x2c0] sm:$0xff]
              %152 = vst [vmem:[%s106 + $0xb0] sm:$0xff] %v151
              %v153 = vld [vmem:[%s105 + $0x2e0] sm:$0xff]
              %154 = vst [vmem:[%s106 + $0xb8] sm:$0xff] %v153
              %v155 = vld [vmem:[%s105 + $0x300] sm:$0xff]
              %156 = vst [vmem:[%s106 + $0xc0] sm:$0xff] %v155
              %v157 = vld [vmem:[%s105 + $0x320] sm:$0xff]
              %158 = vst [vmem:[%s106 + $0xc8] sm:$0xff] %v157
              %v159 = vld [vmem:[%s105 + $0x340] sm:$0xff]
              %160 = vst [vmem:[%s106 + $0xd0] sm:$0xff] %v159
              %v161 = vld [vmem:[%s105 + $0x360] sm:$0xff]
              %162 = vst [vmem:[%s106 + $0xd8] sm:$0xff] %v161
              %v163 = vld [vmem:[%s105 + $0x380] sm:$0xff]
              %164 = vst [vmem:[%s106 + $0xe0] sm:$0xff] %v163
              %v165 = vld [vmem:[%s105 + $0x3a0] sm:$0xff]
              %166 = vst [vmem:[%s106 + $0xe8] sm:$0xff] %v165
              %v167 = vld [vmem:[%s105 + $0x3c0] sm:$0xff]
              %168 = vst [vmem:[%s106 + $0xf0] sm:$0xff] %v167
              %v169 = vld [vmem:[%s105 + $0x3e0] sm:$0xff]
              %170 = vst [vmem:[%s106 + $0xf8] sm:$0xff] %v169
            $region33: #{semantic_attention_forward.2} parent=27 // loop_footer
              %s104 = sadd.s32 1, %s100
            $region34: #{semantic_attention_forward.2} parent=27 // loop_footer_branch
              %99 = sbr.rel target = $region30
            $region35: #{semantic_attention_forward.2} parent=27 // loop_exit
              _
          $region28: #{semantic_attention_forward.2} parent=12 // pred_fallthru
            _
          // Predicated region
          $region36: #{semantic_attention_forward.2} parent=12 // pred_check
            _
          $region37: #{semantic_attention_forward.2} parent=12 // pred_check_branch
            %172 = sbr.rel target = $region39
          $region38: #{semantic_attention_forward.2} parent=12 // pred_region
            _
          $region39: #{semantic_attention_forward.2} parent=12 // pred_fallthru
            _
        $region13: #{semantic_attention_forward.2} parent=8 // pred_fallthru
          _
        // Predicated region
        $region14: #{semantic_attention_forward.2} parent=8 // pred_check
          _
        $region15: #{semantic_attention_forward.2} parent=8 // pred_check_branch
          %23 = sbr.rel target = $region17
        $region16: #{semantic_attention_forward.2} parent=8 // pred_region
          loop: start=0, step=1, limit=1
          $region18: #{semantic_attention_forward.2} parent=16 // loop_pre_header
            _
          $region19: #{semantic_attention_forward.2} parent=16 // loop_header
            %s26 = sphi 0, %s30
            %p27 = scmp.ge.s32.totalorder %s26, 1
            %s31 = sphi %s17, %s17
            %s32 = sphi [#allocation2], [#allocation2]
          $region20: #{semantic_attention_forward.2} parent=16 // loop_header_branch
            %29 = sbr.rel (%p27) target = $region24
          $region21: #{semantic_attention_forward.2} parent=16 // loop_body
            %v33 = vld [vmem:[%s31] sm:$0xff]
            %34 = vst [vmem:[%s32] sm:$0xff] %v33
            %v35 = vld [vmem:[%s31 + $0x20] sm:$0xff]
            %36 = vst [vmem:[%s32 + $0x8] sm:$0xff] %v35
            %v37 = vld [vmem:[%s31 + $0x40] sm:$0xff]
            %38 = vst [vmem:[%s32 + $0x10] sm:$0xff] %v37
            %v39 = vld [vmem:[%s31 + $0x60] sm:$0xff]
            %40 = vst [vmem:[%s32 + $0x18] sm:$0xff] %v39
            %v41 = vld [vmem:[%s31 + $0x80] sm:$0xff]
            %42 = vst [vmem:[%s32 + $0x20] sm:$0xff] %v41
            %v43 = vld [vmem:[%s31 + $0xa0] sm:$0xff]
            %44 = vst [vmem:[%s32 + $0x28] sm:$0xff] %v43
            %v45 = vld [vmem:[%s31 + $0xc0] sm:$0xff]
            %46 = vst [vmem:[%s32 + $0x30] sm:$0xff] %v45
            %v47 = vld [vmem:[%s31 + $0xe0] sm:$0xff]
            %48 = vst [vmem:[%s32 + $0x38] sm:$0xff] %v47
            %v49 = vld [vmem:[%s31 + $0x100] sm:$0xff]
            %50 = vst [vmem:[%s32 + $0x40] sm:$0xff] %v49
            %v51 = vld [vmem:[%s31 + $0x120] sm:$0xff]
            %52 = vst [vmem:[%s32 + $0x48] sm:$0xff] %v51
            %v53 = vld [vmem:[%s31 + $0x140] sm:$0xff]
            %54 = vst [vmem:[%s32 + $0x50] sm:$0xff] %v53
            %v55 = vld [vmem:[%s31 + $0x160] sm:$0xff]
            %56 = vst [vmem:[%s32 + $0x58] sm:$0xff] %v55
            %v57 = vld [vmem:[%s31 + $0x180] sm:$0xff]
            %58 = vst [vmem:[%s32 + $0x60] sm:$0xff] %v57
            %v59 = vld [vmem:[%s31 + $0x1a0] sm:$0xff]
            %60 = vst [vmem:[%s32 + $0x68] sm:$0xff] %v59
            %v61 = vld [vmem:[%s31 + $0x1c0] sm:$0xff]
            %62 = vst [vmem:[%s32 + $0x70] sm:$0xff] %v61
            %v63 = vld [vmem:[%s31 + $0x1e0] sm:$0xff]
            %64 = vst [vmem:[%s32 + $0x78] sm:$0xff] %v63
            %v65 = vld [vmem:[%s31 + $0x200] sm:$0xff]
            %66 = vst [vmem:[%s32 + $0x80] sm:$0xff] %v65
            %v67 = vld [vmem:[%s31 + $0x220] sm:$0xff]
            %68 = vst [vmem:[%s32 + $0x88] sm:$0xff] %v67
            %v69 = vld [vmem:[%s31 + $0x240] sm:$0xff]
            %70 = vst [vmem:[%s32 + $0x90] sm:$0xff] %v69
            %v71 = vld [vmem:[%s31 + $0x260] sm:$0xff]
            %72 = vst [vmem:[%s32 + $0x98] sm:$0xff] %v71
            %v73 = vld [vmem:[%s31 + $0x280] sm:$0xff]
            %74 = vst [vmem:[%s32 + $0xa0] sm:$0xff] %v73
            %v75 = vld [vmem:[%s31 + $0x2a0] sm:$0xff]
            %76 = vst [vmem:[%s32 + $0xa8] sm:$0xff] %v75
            %v77 = vld [vmem:[%s31 + $0x2c0] sm:$0xff]
            %78 = vst [vmem:[%s32 + $0xb0] sm:$0xff] %v77
            %v79 = vld [vmem:[%s31 + $0x2e0] sm:$0xff]
            %80 = vst [vmem:[%s32 + $0xb8] sm:$0xff] %v79
            %v81 = vld [vmem:[%s31 + $0x300] sm:$0xff]
            %82 = vst [vmem:[%s32 + $0xc0] sm:$0xff] %v81
            %v83 = vld [vmem:[%s31 + $0x320] sm:$0xff]
            %84 = vst [vmem:[%s32 + $0xc8] sm:$0xff] %v83
            %v85 = vld [vmem:[%s31 + $0x340] sm:$0xff]
            %86 = vst [vmem:[%s32 + $0xd0] sm:$0xff] %v85
            %v87 = vld [vmem:[%s31 + $0x360] sm:$0xff]
            %88 = vst [vmem:[%s32 + $0xd8] sm:$0xff] %v87
            %v89 = vld [vmem:[%s31 + $0x380] sm:$0xff]
            %90 = vst [vmem:[%s32 + $0xe0] sm:$0xff] %v89
            %v91 = vld [vmem:[%s31 + $0x3a0] sm:$0xff]
            %92 = vst [vmem:[%s32 + $0xe8] sm:$0xff] %v91
            %v93 = vld [vmem:[%s31 + $0x3c0] sm:$0xff]
            %94 = vst [vmem:[%s32 + $0xf0] sm:$0xff] %v93
            %v95 = vld [vmem:[%s31 + $0x3e0] sm:$0xff]
            %96 = vst [vmem:[%s32 + $0xf8] sm:$0xff] %v95
          $region22: #{semantic_attention_forward.2} parent=16 // loop_footer
            %s30 = sadd.s32 1, %s26
          $region23: #{semantic_attention_forward.2} parent=16 // loop_footer_branch
            %25 = sbr.rel target = $region19
          $region24: #{semantic_attention_forward.2} parent=16 // loop_exit
            _
        $region17: #{semantic_attention_forward.2} parent=8 // pred_fallthru
          _
      $region9: #{semantic_attention_forward.2} parent=4 // pred_fallthru
        _
      %173 = vnop
    $region5: #{semantic_attention_forward.2} parent=1 // pred_fallthru
      _
    // Predicated region
    $region40: #{semantic_attention_forward.2} parent=1 // pred_check
      _
    $region41: #{semantic_attention_forward.2} parent=1 // pred_check_branch
      %175 = sbr.rel (0) target = $region43
    $region42: #{semantic_attention_forward.2} parent=1 // pred_region
      %s176 = sadd.s32 0, 0
      %s177 = smul.u32 32, %s176
      %s178 = smul.addr %s177, 4
      %s179 = sadd.s32 1, %s178
      %s180 = smul.addr %s179, 8
      %s181 = scalar_lea.vmem %s1, %s180
      // Predicated region
      $region44: #{semantic_attention_forward.2} parent=42 // pred_check
        _
      $region45: #{semantic_attention_forward.2} parent=42 // pred_check_branch
        %183 = sbr.rel (0) target = $region47
      $region46: #{semantic_attention_forward.2} parent=42 // pred_region
        // Predicated region
        $region48: #{semantic_attention_forward.2} parent=46 // pred_check
          _
        $region49: #{semantic_attention_forward.2} parent=46 // pred_check_branch
          %185 = sbr.rel (0) target = $region51
        $region50: #{semantic_attention_forward.2} parent=46 // pred_region
          // Predicated region
          $region63: #{semantic_attention_forward.2} parent=50 // pred_check
            _
          $region64: #{semantic_attention_forward.2} parent=50 // pred_check_branch
            %262 = sbr.rel (0) target = $region66
          $region65: #{semantic_attention_forward.2} parent=50 // pred_region
            loop: start=0, step=1, limit=1
            $region67: #{semantic_attention_forward.2} parent=65 // loop_pre_header
              _
            $region68: #{semantic_attention_forward.2} parent=65 // loop_header
              %s264 = sphi 0, %s268
              %p265 = scmp.ge.s32.totalorder %s264, 1
              %s269 = sphi %s181, %s181
              %s270 = sphi [#allocation3], [#allocation3]
            $region69: #{semantic_attention_forward.2} parent=65 // loop_header_branch
              %267 = sbr.rel (%p265) target = $region73
            $region70: #{semantic_attention_forward.2} parent=65 // loop_body
              %v271 = vld [vmem:[%s269] sm:$0xff]
              %272 = vst [vmem:[%s270] sm:$0xff] %v271
              %v273 = vld [vmem:[%s269 + $0x20] sm:$0xff]
              %274 = vst [vmem:[%s270 + $0x8] sm:$0xff] %v273
              %v275 = vld [vmem:[%s269 + $0x40] sm:$0xff]
              %276 = vst [vmem:[%s270 + $0x10] sm:$0xff] %v275
              %v277 = vld [vmem:[%s269 + $0x60] sm:$0xff]
              %278 = vst [vmem:[%s270 + $0x18] sm:$0xff] %v277
              %v279 = vld [vmem:[%s269 + $0x80] sm:$0xff]
              %280 = vst [vmem:[%s270 + $0x20] sm:$0xff] %v279
              %v281 = vld [vmem:[%s269 + $0xa0] sm:$0xff]
              %282 = vst [vmem:[%s270 + $0x28] sm:$0xff] %v281
              %v283 = vld [vmem:[%s269 + $0xc0] sm:$0xff]
              %284 = vst [vmem:[%s270 + $0x30] sm:$0xff] %v283
              %v285 = vld [vmem:[%s269 + $0xe0] sm:$0xff]
              %286 = vst [vmem:[%s270 + $0x38] sm:$0xff] %v285
              %v287 = vld [vmem:[%s269 + $0x100] sm:$0xff]
              %288 = vst [vmem:[%s270 + $0x40] sm:$0xff] %v287
              %v289 = vld [vmem:[%s269 + $0x120] sm:$0xff]
              %290 = vst [vmem:[%s270 + $0x48] sm:$0xff] %v289
              %v291 = vld [vmem:[%s269 + $0x140] sm:$0xff]
              %292 = vst [vmem:[%s270 + $0x50] sm:$0xff] %v291
              %v293 = vld [vmem:[%s269 + $0x160] sm:$0xff]
              %294 = vst [vmem:[%s270 + $0x58] sm:$0xff] %v293
              %v295 = vld [vmem:[%s269 + $0x180] sm:$0xff]
              %296 = vst [vmem:[%s270 + $0x60] sm:$0xff] %v295
              %v297 = vld [vmem:[%s269 + $0x1a0] sm:$0xff]
              %298 = vst [vmem:[%s270 + $0x68] sm:$0xff] %v297
              %v299 = vld [vmem:[%s269 + $0x1c0] sm:$0xff]
              %300 = vst [vmem:[%s270 + $0x70] sm:$0xff] %v299
              %v301 = vld [vmem:[%s269 + $0x1e0] sm:$0xff]
              %302 = vst [vmem:[%s270 + $0x78] sm:$0xff] %v301
              %v303 = vld [vmem:[%s269 + $0x200] sm:$0xff]
              %304 = vst [vmem:[%s270 + $0x80] sm:$0xff] %v303
              %v305 = vld [vmem:[%s269 + $0x220] sm:$0xff]
              %306 = vst [vmem:[%s270 + $0x88] sm:$0xff] %v305
              %v307 = vld [vmem:[%s269 + $0x240] sm:$0xff]
              %308 = vst [vmem:[%s270 + $0x90] sm:$0xff] %v307
              %v309 = vld [vmem:[%s269 + $0x260] sm:$0xff]
              %310 = vst [vmem:[%s270 + $0x98] sm:$0xff] %v309
              %v311 = vld [vmem:[%s269 + $0x280] sm:$0xff]
              %312 = vst [vmem:[%s270 + $0xa0] sm:$0xff] %v311
              %v313 = vld [vmem:[%s269 + $0x2a0] sm:$0xff]
              %314 = vst [vmem:[%s270 + $0xa8] sm:$0xff] %v313
              %v315 = vld [vmem:[%s269 + $0x2c0] sm:$0xff]
              %316 = vst [vmem:[%s270 + $0xb0] sm:$0xff] %v315
              %v317 = vld [vmem:[%s269 + $0x2e0] sm:$0xff]
              %318 = vst [vmem:[%s270 + $0xb8] sm:$0xff] %v317
              %v319 = vld [vmem:[%s269 + $0x300] sm:$0xff]
              %320 = vst [vmem:[%s270 + $0xc0] sm:$0xff] %v319
              %v321 = vld [vmem:[%s269 + $0x320] sm:$0xff]
              %322 = vst [vmem:[%s270 + $0xc8] sm:$0xff] %v321
              %v323 = vld [vmem:[%s269 + $0x340] sm:$0xff]
              %324 = vst [vmem:[%s270 + $0xd0] sm:$0xff] %v323
              %v325 = vld [vmem:[%s269 + $0x360] sm:$0xff]
              %326 = vst [vmem:[%s270 + $0xd8] sm:$0xff] %v325
              %v327 = vld [vmem:[%s269 + $0x380] sm:$0xff]
              %328 = vst [vmem:[%s270 + $0xe0] sm:$0xff] %v327
              %v329 = vld [vmem:[%s269 + $0x3a0] sm:$0xff]
              %330 = vst [vmem:[%s270 + $0xe8] sm:$0xff] %v329
              %v331 = vld [vmem:[%s269 + $0x3c0] sm:$0xff]
              %332 = vst [vmem:[%s270 + $0xf0] sm:$0xff] %v331
              %v333 = vld [vmem:[%s269 + $0x3e0] sm:$0xff]
              %334 = vst [vmem:[%s270 + $0xf8] sm:$0xff] %v333
            $region71: #{semantic_attention_forward.2} parent=65 // loop_footer
              %s268 = sadd.s32 1, %s264
            $region72: #{semantic_attention_forward.2} parent=65 // loop_footer_branch
              %263 = sbr.rel target = $region68
            $region73: #{semantic_attention_forward.2} parent=65 // loop_exit
              _
          $region66: #{semantic_attention_forward.2} parent=50 // pred_fallthru
            _
          // Predicated region
          $region74: #{semantic_attention_forward.2} parent=50 // pred_check
            _
          $region75: #{semantic_attention_forward.2} parent=50 // pred_check_branch
            %336 = sbr.rel target = $region77
          $region76: #{semantic_attention_forward.2} parent=50 // pred_region
            _
          $region77: #{semantic_attention_forward.2} parent=50 // pred_fallthru
            _
        $region51: #{semantic_attention_forward.2} parent=46 // pred_fallthru
          _
        // Predicated region
        $region52: #{semantic_attention_forward.2} parent=46 // pred_check
          _
        $region53: #{semantic_attention_forward.2} parent=46 // pred_check_branch
          %187 = sbr.rel target = $region55
        $region54: #{semantic_attention_forward.2} parent=46 // pred_region
          loop: start=0, step=1, limit=1
          $region56: #{semantic_attention_forward.2} parent=54 // loop_pre_header
            _
          $region57: #{semantic_attention_forward.2} parent=54 // loop_header
            %s190 = sphi 0, %s194
            %p191 = scmp.ge.s32.totalorder %s190, 1
            %s195 = sphi %s181, %s181
            %s196 = sphi [#allocation3], [#allocation3]
          $region58: #{semantic_attention_forward.2} parent=54 // loop_header_branch
            %193 = sbr.rel (%p191) target = $region62
          $region59: #{semantic_attention_forward.2} parent=54 // loop_body
            %v197 = vld [vmem:[%s195] sm:$0xff]
            %198 = vst [vmem:[%s196] sm:$0xff] %v197
            %v199 = vld [vmem:[%s195 + $0x20] sm:$0xff]
            %200 = vst [vmem:[%s196 + $0x8] sm:$0xff] %v199
            %v201 = vld [vmem:[%s195 + $0x40] sm:$0xff]
            %202 = vst [vmem:[%s196 + $0x10] sm:$0xff] %v201
            %v203 = vld [vmem:[%s195 + $0x60] sm:$0xff]
            %204 = vst [vmem:[%s196 + $0x18] sm:$0xff] %v203
            %v205 = vld [vmem:[%s195 + $0x80] sm:$0xff]
            %206 = vst [vmem:[%s196 + $0x20] sm:$0xff] %v205
            %v207 = vld [vmem:[%s195 + $0xa0] sm:$0xff]
            %208 = vst [vmem:[%s196 + $0x28] sm:$0xff] %v207
            %v209 = vld [vmem:[%s195 + $0xc0] sm:$0xff]
            %210 = vst [vmem:[%s196 + $0x30] sm:$0xff] %v209
            %v211 = vld [vmem:[%s195 + $0xe0] sm:$0xff]
            %212 = vst [vmem:[%s196 + $0x38] sm:$0xff] %v211
            %v213 = vld [vmem:[%s195 + $0x100] sm:$0xff]
            %214 = vst [vmem:[%s196 + $0x40] sm:$0xff] %v213
            %v215 = vld [vmem:[%s195 + $0x120] sm:$0xff]
            %216 = vst [vmem:[%s196 + $0x48] sm:$0xff] %v215
            %v217 = vld [vmem:[%s195 + $0x140] sm:$0xff]
            %218 = vst [vmem:[%s196 + $0x50] sm:$0xff] %v217
            %v219 = vld [vmem:[%s195 + $0x160] sm:$0xff]
            %220 = vst [vmem:[%s196 + $0x58] sm:$0xff] %v219
            %v221 = vld [vmem:[%s195 + $0x180] sm:$0xff]
            %222 = vst [vmem:[%s196 + $0x60] sm:$0xff] %v221
            %v223 = vld [vmem:[%s195 + $0x1a0] sm:$0xff]
            %224 = vst [vmem:[%s196 + $0x68] sm:$0xff] %v223
            %v225 = vld [vmem:[%s195 + $0x1c0] sm:$0xff]
            %226 = vst [vmem:[%s196 + $0x70] sm:$0xff] %v225
            %v227 = vld [vmem:[%s195 + $0x1e0] sm:$0xff]
            %228 = vst [vmem:[%s196 + $0x78] sm:$0xff] %v227
            %v229 = vld [vmem:[%s195 + $0x200] sm:$0xff]
            %230 = vst [vmem:[%s196 + $0x80] sm:$0xff] %v229
            %v231 = vld [vmem:[%s195 + $0x220] sm:$0xff]
            %232 = vst [vmem:[%s196 + $0x88] sm:$0xff] %v231
            %v233 = vld [vmem:[%s195 + $0x240] sm:$0xff]
            %234 = vst [vmem:[%s196 + $0x90] sm:$0xff] %v233
            %v235 = vld [vmem:[%s195 + $0x260] sm:$0xff]
            %236 = vst [vmem:[%s196 + $0x98] sm:$0xff] %v235
            %v237 = vld [vmem:[%s195 + $0x280] sm:$0xff]
            %238 = vst [vmem:[%s196 + $0xa0] sm:$0xff] %v237
            %v239 = vld [vmem:[%s195 + $0x2a0] sm:$0xff]
            %240 = vst [vmem:[%s196 + $0xa8] sm:$0xff] %v239
            %v241 = vld [vmem:[%s195 + $0x2c0] sm:$0xff]
            %242 = vst [vmem:[%s196 + $0xb0] sm:$0xff] %v241
            %v243 = vld [vmem:[%s195 + $0x2e0] sm:$0xff]
            %244 = vst [vmem:[%s196 + $0xb8] sm:$0xff] %v243
            %v245 = vld [vmem:[%s195 + $0x300] sm:$0xff]
            %246 = vst [vmem:[%s196 + $0xc0] sm:$0xff] %v245
            %v247 = vld [vmem:[%s195 + $0x320] sm:$0xff]
            %248 = vst [vmem:[%s196 + $0xc8] sm:$0xff] %v247
            %v249 = vld [vmem:[%s195 + $0x340] sm:$0xff]
            %250 = vst [vmem:[%s196 + $0xd0] sm:$0xff] %v249
            %v251 = vld [vmem:[%s195 + $0x360] sm:$0xff]
            %252 = vst [vmem:[%s196 + $0xd8] sm:$0xff] %v251
            %v253 = vld [vmem:[%s195 + $0x380] sm:$0xff]
            %254 = vst [vmem:[%s196 + $0xe0] sm:$0xff] %v253
            %v255 = vld [vmem:[%s195 + $0x3a0] sm:$0xff]
            %256 = vst [vmem:[%s196 + $0xe8] sm:$0xff] %v255
            %v257 = vld [vmem:[%s195 + $0x3c0] sm:$0xff]
            %258 = vst [vmem:[%s196 + $0xf0] sm:$0xff] %v257
            %v259 = vld [vmem:[%s195 + $0x3e0] sm:$0xff]
            %260 = vst [vmem:[%s196 + $0xf8] sm:$0xff] %v259
          $region60: #{semantic_attention_forward.2} parent=54 // loop_footer
            %s194 = sadd.s32 1, %s190
          $region61: #{semantic_attention_forward.2} parent=54 // loop_footer_branch
            %189 = sbr.rel target = $region57
          $region62: #{semantic_attention_forward.2} parent=54 // loop_exit
            _
        $region55: #{semantic_attention_forward.2} parent=46 // pred_fallthru
          _
      $region47: #{semantic_attention_forward.2} parent=42 // pred_fallthru
        _
      %337 = vnop
    $region43: #{semantic_attention_forward.2} parent=1 // pred_fallthru
      _
    // Predicated region
    $region78: #{semantic_attention_forward.2} parent=1 // pred_check
      _
    $region79: #{semantic_attention_forward.2} parent=1 // pred_check_branch
      %339 = sbr.rel (0) target = $region81
    $region80: #{semantic_attention_forward.2} parent=1 // pred_region
      %s340 = sadd.s32 0, 0
      %s341 = smul.u32 32, %s340
      %s342 = smul.addr %s341, 4
      %s343 = sadd.s32 2, %s342
      %s344 = smul.addr %s343, 8
      %s345 = scalar_lea.vmem %s2, %s344
      // Predicated region
      $region82: #{semantic_attention_forward.2} parent=80 // pred_check
        _
      $region83: #{semantic_attention_forward.2} parent=80 // pred_check_branch
        %347 = sbr.rel (0) target = $region85
      $region84: #{semantic_attention_forward.2} parent=80 // pred_region
        // Predicated region
        $region86: #{semantic_attention_forward.2} parent=84 // pred_check
          _
        $region87: #{semantic_attention_forward.2} parent=84 // pred_check_branch
          %349 = sbr.rel (0) target = $region89
        $region88: #{semantic_attention_forward.2} parent=84 // pred_region
          // Predicated region
          $region101: #{semantic_attention_forward.2} parent=88 // pred_check
            _
          $region102: #{semantic_attention_forward.2} parent=88 // pred_check_branch
            %426 = sbr.rel (0) target = $region104
          $region103: #{semantic_attention_forward.2} parent=88 // pred_region
            loop: start=0, step=1, limit=1
            $region105: #{semantic_attention_forward.2} parent=103 // loop_pre_header
              _
            $region106: #{semantic_attention_forward.2} parent=103 // loop_header
              %s428 = sphi 0, %s432
              %p429 = scmp.ge.s32.totalorder %s428, 1
              %s433 = sphi %s345, %s345
              %s434 = sphi [#allocation4], [#allocation4]
            $region107: #{semantic_attention_forward.2} parent=103 // loop_header_branch
              %431 = sbr.rel (%p429) target = $region111
            $region108: #{semantic_attention_forward.2} parent=103 // loop_body
              %v435 = vld [vmem:[%s433] sm:$0xff]
              %436 = vst [vmem:[%s434] sm:$0xff] %v435
              %v437 = vld [vmem:[%s433 + $0x20] sm:$0xff]
              %438 = vst [vmem:[%s434 + $0x8] sm:$0xff] %v437
              %v439 = vld [vmem:[%s433 + $0x40] sm:$0xff]
              %440 = vst [vmem:[%s434 + $0x10] sm:$0xff] %v439
              %v441 = vld [vmem:[%s433 + $0x60] sm:$0xff]
              %442 = vst [vmem:[%s434 + $0x18] sm:$0xff] %v441
              %v443 = vld [vmem:[%s433 + $0x80] sm:$0xff]
              %444 = vst [vmem:[%s434 + $0x20] sm:$0xff] %v443
              %v445 = vld [vmem:[%s433 + $0xa0] sm:$0xff]
              %446 = vst [vmem:[%s434 + $0x28] sm:$0xff] %v445
              %v447 = vld [vmem:[%s433 + $0xc0] sm:$0xff]
              %448 = vst [vmem:[%s434 + $0x30] sm:$0xff] %v447
              %v449 = vld [vmem:[%s433 + $0xe0] sm:$0xff]
              %450 = vst [vmem:[%s434 + $0x38] sm:$0xff] %v449
              %v451 = vld [vmem:[%s433 + $0x100] sm:$0xff]
              %452 = vst [vmem:[%s434 + $0x40] sm:$0xff] %v451
              %v453 = vld [vmem:[%s433 + $0x120] sm:$0xff]
              %454 = vst [vmem:[%s434 + $0x48] sm:$0xff] %v453
              %v455 = vld [vmem:[%s433 + $0x140] sm:$0xff]
              %456 = vst [vmem:[%s434 + $0x50] sm:$0xff] %v455
              %v457 = vld [vmem:[%s433 + $0x160] sm:$0xff]
              %458 = vst [vmem:[%s434 + $0x58] sm:$0xff] %v457
              %v459 = vld [vmem:[%s433 + $0x180] sm:$0xff]
              %460 = vst [vmem:[%s434 + $0x60] sm:$0xff] %v459
              %v461 = vld [vmem:[%s433 + $0x1a0] sm:$0xff]
              %462 = vst [vmem:[%s434 + $0x68] sm:$0xff] %v461
              %v463 = vld [vmem:[%s433 + $0x1c0] sm:$0xff]
              %464 = vst [vmem:[%s434 + $0x70] sm:$0xff] %v463
              %v465 = vld [vmem:[%s433 + $0x1e0] sm:$0xff]
              %466 = vst [vmem:[%s434 + $0x78] sm:$0xff] %v465
              %v467 = vld [vmem:[%s433 + $0x200] sm:$0xff]
              %468 = vst [vmem:[%s434 + $0x80] sm:$0xff] %v467
              %v469 = vld [vmem:[%s433 + $0x220] sm:$0xff]
              %470 = vst [vmem:[%s434 + $0x88] sm:$0xff] %v469
              %v471 = vld [vmem:[%s433 + $0x240] sm:$0xff]
              %472 = vst [vmem:[%s434 + $0x90] sm:$0xff] %v471
              %v473 = vld [vmem:[%s433 + $0x260] sm:$0xff]
              %474 = vst [vmem:[%s434 + $0x98] sm:$0xff] %v473
              %v475 = vld [vmem:[%s433 + $0x280] sm:$0xff]
              %476 = vst [vmem:[%s434 + $0xa0] sm:$0xff] %v475
              %v477 = vld [vmem:[%s433 + $0x2a0] sm:$0xff]
              %478 = vst [vmem:[%s434 + $0xa8] sm:$0xff] %v477
              %v479 = vld [vmem:[%s433 + $0x2c0] sm:$0xff]
              %480 = vst [vmem:[%s434 + $0xb0] sm:$0xff] %v479
              %v481 = vld [vmem:[%s433 + $0x2e0] sm:$0xff]
              %482 = vst [vmem:[%s434 + $0xb8] sm:$0xff] %v481
              %v483 = vld [vmem:[%s433 + $0x300] sm:$0xff]
              %484 = vst [vmem:[%s434 + $0xc0] sm:$0xff] %v483
              %v485 = vld [vmem:[%s433 + $0x320] sm:$0xff]
              %486 = vst [vmem:[%s434 + $0xc8] sm:$0xff] %v485
              %v487 = vld [vmem:[%s433 + $0x340] sm:$0xff]
              %488 = vst [vmem:[%s434 + $0xd0] sm:$0xff] %v487
              %v489 = vld [vmem:[%s433 + $0x360] sm:$0xff]
              %490 = vst [vmem:[%s434 + $0xd8] sm:$0xff] %v489
              %v491 = vld [vmem:[%s433 + $0x380] sm:$0xff]
              %492 = vst [vmem:[%s434 + $0xe0] sm:$0xff] %v491
              %v493 = vld [vmem:[%s433 + $0x3a0] sm:$0xff]
              %494 = vst [vmem:[%s434 + $0xe8] sm:$0xff] %v493
              %v495 = vld [vmem:[%s433 + $0x3c0] sm:$0xff]
              %496 = vst [vmem:[%s434 + $0xf0] sm:$0xff] %v495
              %v497 = vld [vmem:[%s433 + $0x3e0] sm:$0xff]
              %498 = vst [vmem:[%s434 + $0xf8] sm:$0xff] %v497
            $region109: #{semantic_attention_forward.2} parent=103 // loop_footer
              %s432 = sadd.s32 1, %s428
            $region110: #{semantic_attention_forward.2} parent=103 // loop_footer_branch
              %427 = sbr.rel target = $region106
            $region111: #{semantic_attention_forward.2} parent=103 // loop_exit
              _
          $region104: #{semantic_attention_forward.2} parent=88 // pred_fallthru
            _
          // Predicated region
          $region112: #{semantic_attention_forward.2} parent=88 // pred_check
            _
          $region113: #{semantic_attention_forward.2} parent=88 // pred_check_branch
            %500 = sbr.rel target = $region115
          $region114: #{semantic_attention_forward.2} parent=88 // pred_region
            _
          $region115: #{semantic_attention_forward.2} parent=88 // pred_fallthru
            _
        $region89: #{semantic_attention_forward.2} parent=84 // pred_fallthru
          _
        // Predicated region
        $region90: #{semantic_attention_forward.2} parent=84 // pred_check
          _
        $region91: #{semantic_attention_forward.2} parent=84 // pred_check_branch
          %351 = sbr.rel target = $region93
        $region92: #{semantic_attention_forward.2} parent=84 // pred_region
          loop: start=0, step=1, limit=1
          $region94: #{semantic_attention_forward.2} parent=92 // loop_pre_header
            _
          $region95: #{semantic_attention_forward.2} parent=92 // loop_header
            %s354 = sphi 0, %s358
            %p355 = scmp.ge.s32.totalorder %s354, 1
            %s359 = sphi %s345, %s345
            %s360 = sphi [#allocation4], [#allocation4]
          $region96: #{semantic_attention_forward.2} parent=92 // loop_header_branch
            %357 = sbr.rel (%p355) target = $region100
          $region97: #{semantic_attention_forward.2} parent=92 // loop_body
            %v361 = vld [vmem:[%s359] sm:$0xff]
            %362 = vst [vmem:[%s360] sm:$0xff] %v361
            %v363 = vld [vmem:[%s359 + $0x20] sm:$0xff]
            %364 = vst [vmem:[%s360 + $0x8] sm:$0xff] %v363
            %v365 = vld [vmem:[%s359 + $0x40] sm:$0xff]
            %366 = vst [vmem:[%s360 + $0x10] sm:$0xff] %v365
            %v367 = vld [vmem:[%s359 + $0x60] sm:$0xff]
            %368 = vst [vmem:[%s360 + $0x18] sm:$0xff] %v367
            %v369 = vld [vmem:[%s359 + $0x80] sm:$0xff]
            %370 = vst [vmem:[%s360 + $0x20] sm:$0xff] %v369
            %v371 = vld [vmem:[%s359 + $0xa0] sm:$0xff]
            %372 = vst [vmem:[%s360 + $0x28] sm:$0xff] %v371
            %v373 = vld [vmem:[%s359 + $0xc0] sm:$0xff]
            %374 = vst [vmem:[%s360 + $0x30] sm:$0xff] %v373
            %v375 = vld [vmem:[%s359 + $0xe0] sm:$0xff]
            %376 = vst [vmem:[%s360 + $0x38] sm:$0xff] %v375
            %v377 = vld [vmem:[%s359 + $0x100] sm:$0xff]
            %378 = vst [vmem:[%s360 + $0x40] sm:$0xff] %v377
            %v379 = vld [vmem:[%s359 + $0x120] sm:$0xff]
            %380 = vst [vmem:[%s360 + $0x48] sm:$0xff] %v379
            %v381 = vld [vmem:[%s359 + $0x140] sm:$0xff]
            %382 = vst [vmem:[%s360 + $0x50] sm:$0xff] %v381
            %v383 = vld [vmem:[%s359 + $0x160] sm:$0xff]
            %384 = vst [vmem:[%s360 + $0x58] sm:$0xff] %v383
            %v385 = vld [vmem:[%s359 + $0x180] sm:$0xff]
            %386 = vst [vmem:[%s360 + $0x60] sm:$0xff] %v385
            %v387 = vld [vmem:[%s359 + $0x1a0] sm:$0xff]
            %388 = vst [vmem:[%s360 + $0x68] sm:$0xff] %v387
            %v389 = vld [vmem:[%s359 + $0x1c0] sm:$0xff]
            %390 = vst [vmem:[%s360 + $0x70] sm:$0xff] %v389
            %v391 = vld [vmem:[%s359 + $0x1e0] sm:$0xff]
            %392 = vst [vmem:[%s360 + $0x78] sm:$0xff] %v391
            %v393 = vld [vmem:[%s359 + $0x200] sm:$0xff]
            %394 = vst [vmem:[%s360 + $0x80] sm:$0xff] %v393
            %v395 = vld [vmem:[%s359 + $0x220] sm:$0xff]
            %396 = vst [vmem:[%s360 + $0x88] sm:$0xff] %v395
            %v397 = vld [vmem:[%s359 + $0x240] sm:$0xff]
            %398 = vst [vmem:[%s360 + $0x90] sm:$0xff] %v397
            %v399 = vld [vmem:[%s359 + $0x260] sm:$0xff]
            %400 = vst [vmem:[%s360 + $0x98] sm:$0xff] %v399
            %v401 = vld [vmem:[%s359 + $0x280] sm:$0xff]
            %402 = vst [vmem:[%s360 + $0xa0] sm:$0xff] %v401
            %v403 = vld [vmem:[%s359 + $0x2a0] sm:$0xff]
            %404 = vst [vmem:[%s360 + $0xa8] sm:$0xff] %v403
            %v405 = vld [vmem:[%s359 + $0x2c0] sm:$0xff]
            %406 = vst [vmem:[%s360 + $0xb0] sm:$0xff] %v405
            %v407 = vld [vmem:[%s359 + $0x2e0] sm:$0xff]
            %408 = vst [vmem:[%s360 + $0xb8] sm:$0xff] %v407
            %v409 = vld [vmem:[%s359 + $0x300] sm:$0xff]
            %410 = vst [vmem:[%s360 + $0xc0] sm:$0xff] %v409
            %v411 = vld [vmem:[%s359 + $0x320] sm:$0xff]
            %412 = vst [vmem:[%s360 + $0xc8] sm:$0xff] %v411
            %v413 = vld [vmem:[%s359 + $0x340] sm:$0xff]
            %414 = vst [vmem:[%s360 + $0xd0] sm:$0xff] %v413
            %v415 = vld [vmem:[%s359 + $0x360] sm:$0xff]
            %416 = vst [vmem:[%s360 + $0xd8] sm:$0xff] %v415
            %v417 = vld [vmem:[%s359 + $0x380] sm:$0xff]
            %418 = vst [vmem:[%s360 + $0xe0] sm:$0xff] %v417
            %v419 = vld [vmem:[%s359 + $0x3a0] sm:$0xff]
            %420 = vst [vmem:[%s360 + $0xe8] sm:$0xff] %v419
            %v421 = vld [vmem:[%s359 + $0x3c0] sm:$0xff]
            %422 = vst [vmem:[%s360 + $0xf0] sm:$0xff] %v421
            %v423 = vld [vmem:[%s359 + $0x3e0] sm:$0xff]
            %424 = vst [vmem:[%s360 + $0xf8] sm:$0xff] %v423
          $region98: #{semantic_attention_forward.2} parent=92 // loop_footer
            %s358 = sadd.s32 1, %s354
          $region99: #{semantic_attention_forward.2} parent=92 // loop_footer_branch
            %353 = sbr.rel target = $region95
          $region100: #{semantic_attention_forward.2} parent=92 // loop_exit
            _
        $region93: #{semantic_attention_forward.2} parent=84 // pred_fallthru
          _
      $region85: #{semantic_attention_forward.2} parent=80 // pred_fallthru
        _
      %501 = vnop
    $region81: #{semantic_attention_forward.2} parent=1 // pred_fallthru
      _
    // Predicated region
    $region116: #{semantic_attention_forward.2} parent=1 // pred_check
      _
    $region117: #{semantic_attention_forward.2} parent=1 // pred_check_branch
      %503 = sbr.rel (0) target = $region119
    $region118: #{semantic_attention_forward.2} parent=1 // pred_region
      %s504 = sadd.s32 0, 0
      %s505 = smul.u32 32, %s504
      %s506 = smul.addr %s505, 4
      %s507 = sadd.s32 3, %s506
      %s508 = smul.addr %s507, 8
      %s509 = scalar_lea.vmem %s3, %s508
      // Predicated region
      $region120: #{semantic_attention_forward.2} parent=118 // pred_check
        _
      $region121: #{semantic_attention_forward.2} parent=118 // pred_check_branch
        %511 = sbr.rel (0) target = $region123
      $region122: #{semantic_attention_forward.2} parent=118 // pred_region
        // Predicated region
        $region124: #{semantic_attention_forward.2} parent=122 // pred_check
          _
        $region125: #{semantic_attention_forward.2} parent=122 // pred_check_branch
          %513 = sbr.rel (0) target = $region127
        $region126: #{semantic_attention_forward.2} parent=122 // pred_region
          // Predicated region
          $region139: #{semantic_attention_forward.2} parent=126 // pred_check
            _
          $region140: #{semantic_attention_forward.2} parent=126 // pred_check_branch
            %590 = sbr.rel (0) target = $region142
          $region141: #{semantic_attention_forward.2} parent=126 // pred_region
            loop: start=0, step=1, limit=1
            $region143: #{semantic_attention_forward.2} parent=141 // loop_pre_header
              _
            $region144: #{semantic_attention_forward.2} parent=141 // loop_header
              %s592 = sphi 0, %s596
              %p593 = scmp.ge.s32.totalorder %s592, 1
              %s597 = sphi %s509, %s509
              %s598 = sphi [#allocation5], [#allocation5]
            $region145: #{semantic_attention_forward.2} parent=141 // loop_header_branch
              %595 = sbr.rel (%p593) target = $region149
            $region146: #{semantic_attention_forward.2} parent=141 // loop_body
              %v599 = vld [vmem:[%s597] sm:$0xff]
              %600 = vst [vmem:[%s598] sm:$0xff] %v599
              %v601 = vld [vmem:[%s597 + $0x20] sm:$0xff]
              %602 = vst [vmem:[%s598 + $0x8] sm:$0xff] %v601
              %v603 = vld [vmem:[%s597 + $0x40] sm:$0xff]
              %604 = vst [vmem:[%s598 + $0x10] sm:$0xff] %v603
              %v605 = vld [vmem:[%s597 + $0x60] sm:$0xff]
              %606 = vst [vmem:[%s598 + $0x18] sm:$0xff] %v605
              %v607 = vld [vmem:[%s597 + $0x80] sm:$0xff]
              %608 = vst [vmem:[%s598 + $0x20] sm:$0xff] %v607
              %v609 = vld [vmem:[%s597 + $0xa0] sm:$0xff]
              %610 = vst [vmem:[%s598 + $0x28] sm:$0xff] %v609
              %v611 = vld [vmem:[%s597 + $0xc0] sm:$0xff]
              %612 = vst [vmem:[%s598 + $0x30] sm:$0xff] %v611
              %v613 = vld [vmem:[%s597 + $0xe0] sm:$0xff]
              %614 = vst [vmem:[%s598 + $0x38] sm:$0xff] %v613
              %v615 = vld [vmem:[%s597 + $0x100] sm:$0xff]
              %616 = vst [vmem:[%s598 + $0x40] sm:$0xff] %v615
              %v617 = vld [vmem:[%s597 + $0x120] sm:$0xff]
              %618 = vst [vmem:[%s598 + $0x48] sm:$0xff] %v617
              %v619 = vld [vmem:[%s597 + $0x140] sm:$0xff]
              %620 = vst [vmem:[%s598 + $0x50] sm:$0xff] %v619
              %v621 = vld [vmem:[%s597 + $0x160] sm:$0xff]
              %622 = vst [vmem:[%s598 + $0x58] sm:$0xff] %v621
              %v623 = vld [vmem:[%s597 + $0x180] sm:$0xff]
              %624 = vst [vmem:[%s598 + $0x60] sm:$0xff] %v623
              %v625 = vld [vmem:[%s597 + $0x1a0] sm:$0xff]
              %626 = vst [vmem:[%s598 + $0x68] sm:$0xff] %v625
              %v627 = vld [vmem:[%s597 + $0x1c0] sm:$0xff]
              %628 = vst [vmem:[%s598 + $0x70] sm:$0xff] %v627
              %v629 = vld [vmem:[%s597 + $0x1e0] sm:$0xff]
              %630 = vst [vmem:[%s598 + $0x78] sm:$0xff] %v629
              %v631 = vld [vmem:[%s597 + $0x200] sm:$0xff]
              %632 = vst [vmem:[%s598 + $0x80] sm:$0xff] %v631
              %v633 = vld [vmem:[%s597 + $0x220] sm:$0xff]
              %634 = vst [vmem:[%s598 + $0x88] sm:$0xff] %v633
              %v635 = vld [vmem:[%s597 + $0x240] sm:$0xff]
              %636 = vst [vmem:[%s598 + $0x90] sm:$0xff] %v635
              %v637 = vld [vmem:[%s597 + $0x260] sm:$0xff]
              %638 = vst [vmem:[%s598 + $0x98] sm:$0xff] %v637
              %v639 = vld [vmem:[%s597 + $0x280] sm:$0xff]
              %640 = vst [vmem:[%s598 + $0xa0] sm:$0xff] %v639
              %v641 = vld [vmem:[%s597 + $0x2a0] sm:$0xff]
              %642 = vst [vmem:[%s598 + $0xa8] sm:$0xff] %v641
              %v643 = vld [vmem:[%s597 + $0x2c0] sm:$0xff]
              %644 = vst [vmem:[%s598 + $0xb0] sm:$0xff] %v643
              %v645 = vld [vmem:[%s597 + $0x2e0] sm:$0xff]
              %646 = vst [vmem:[%s598 + $0xb8] sm:$0xff] %v645
              %v647 = vld [vmem:[%s597 + $0x300] sm:$0xff]
              %648 = vst [vmem:[%s598 + $0xc0] sm:$0xff] %v647
              %v649 = vld [vmem:[%s597 + $0x320] sm:$0xff]
              %650 = vst [vmem:[%s598 + $0xc8] sm:$0xff] %v649
              %v651 = vld [vmem:[%s597 + $0x340] sm:$0xff]
              %652 = vst [vmem:[%s598 + $0xd0] sm:$0xff] %v651
              %v653 = vld [vmem:[%s597 + $0x360] sm:$0xff]
              %654 = vst [vmem:[%s598 + $0xd8] sm:$0xff] %v653
              %v655 = vld [vmem:[%s597 + $0x380] sm:$0xff]
              %656 = vst [vmem:[%s598 + $0xe0] sm:$0xff] %v655
              %v657 = vld [vmem:[%s597 + $0x3a0] sm:$0xff]
              %658 = vst [vmem:[%s598 + $0xe8] sm:$0xff] %v657
              %v659 = vld [vmem:[%s597 + $0x3c0] sm:$0xff]
              %660 = vst [vmem:[%s598 + $0xf0] sm:$0xff] %v659
              %v661 = vld [vmem:[%s597 + $0x3e0] sm:$0xff]
              %662 = vst [vmem:[%s598 + $0xf8] sm:$0xff] %v661
            $region147: #{semantic_attention_forward.2} parent=141 // loop_footer
              %s596 = sadd.s32 1, %s592
            $region148: #{semantic_attention_forward.2} parent=141 // loop_footer_branch
              %591 = sbr.rel target = $region144
            $region149: #{semantic_attention_forward.2} parent=141 // loop_exit
              _
          $region142: #{semantic_attention_forward.2} parent=126 // pred_fallthru
            _
          // Predicated region
          $region150: #{semantic_attention_forward.2} parent=126 // pred_check
            _
          $region151: #{semantic_attention_forward.2} parent=126 // pred_check_branch
            %664 = sbr.rel target = $region153
          $region152: #{semantic_attention_forward.2} parent=126 // pred_region
            _
          $region153: #{semantic_attention_forward.2} parent=126 // pred_fallthru
            _
        $region127: #{semantic_attention_forward.2} parent=122 // pred_fallthru
          _
        // Predicated region
        $region128: #{semantic_attention_forward.2} parent=122 // pred_check
          _
        $region129: #{semantic_attention_forward.2} parent=122 // pred_check_branch
          %515 = sbr.rel target = $region131
        $region130: #{semantic_attention_forward.2} parent=122 // pred_region
          loop: start=0, step=1, limit=1
          $region132: #{semantic_attention_forward.2} parent=130 // loop_pre_header
            _
          $region133: #{semantic_attention_forward.2} parent=130 // loop_header
            %s518 = sphi 0, %s522
            %p519 = scmp.ge.s32.totalorder %s518, 1
            %s523 = sphi %s509, %s509
            %s524 = sphi [#allocation5], [#allocation5]
          $region134: #{semantic_attention_forward.2} parent=130 // loop_header_branch
            %521 = sbr.rel (%p519) target = $region138
          $region135: #{semantic_attention_forward.2} parent=130 // loop_body
            %v525 = vld [vmem:[%s523] sm:$0xff]
            %526 = vst [vmem:[%s524] sm:$0xff] %v525
            %v527 = vld [vmem:[%s523 + $0x20] sm:$0xff]
            %528 = vst [vmem:[%s524 + $0x8] sm:$0xff] %v527
            %v529 = vld [vmem:[%s523 + $0x40] sm:$0xff]
            %530 = vst [vmem:[%s524 + $0x10] sm:$0xff] %v529
            %v531 = vld [vmem:[%s523 + $0x60] sm:$0xff]
            %532 = vst [vmem:[%s524 + $0x18] sm:$0xff] %v531
            %v533 = vld [vmem:[%s523 + $0x80] sm:$0xff]
            %534 = vst [vmem:[%s524 + $0x20] sm:$0xff] %v533
            %v535 = vld [vmem:[%s523 + $0xa0] sm:$0xff]
            %536 = vst [vmem:[%s524 + $0x28] sm:$0xff] %v535
            %v537 = vld [vmem:[%s523 + $0xc0] sm:$0xff]
            %538 = vst [vmem:[%s524 + $0x30] sm:$0xff] %v537
            %v539 = vld [vmem:[%s523 + $0xe0] sm:$0xff]
            %540 = vst [vmem:[%s524 + $0x38] sm:$0xff] %v539
            %v541 = vld [vmem:[%s523 + $0x100] sm:$0xff]
            %542 = vst [vmem:[%s524 + $0x40] sm:$0xff] %v541
            %v543 = vld [vmem:[%s523 + $0x120] sm:$0xff]
            %544 = vst [vmem:[%s524 + $0x48] sm:$0xff] %v543
            %v545 = vld [vmem:[%s523 + $0x140] sm:$0xff]
            %546 = vst [vmem:[%s524 + $0x50] sm:$0xff] %v545
            %v547 = vld [vmem:[%s523 + $0x160] sm:$0xff]
            %548 = vst [vmem:[%s524 + $0x58] sm:$0xff] %v547
            %v549 = vld [vmem:[%s523 + $0x180] sm:$0xff]
            %550 = vst [vmem:[%s524 + $0x60] sm:$0xff] %v549
            %v551 = vld [vmem:[%s523 + $0x1a0] sm:$0xff]
            %552 = vst [vmem:[%s524 + $0x68] sm:$0xff] %v551
            %v553 = vld [vmem:[%s523 + $0x1c0] sm:$0xff]
            %554 = vst [vmem:[%s524 + $0x70] sm:$0xff] %v553
            %v555 = vld [vmem:[%s523 + $0x1e0] sm:$0xff]
            %556 = vst [vmem:[%s524 + $0x78] sm:$0xff] %v555
            %v557 = vld [vmem:[%s523 + $0x200] sm:$0xff]
            %558 = vst [vmem:[%s524 + $0x80] sm:$0xff] %v557
            %v559 = vld [vmem:[%s523 + $0x220] sm:$0xff]
            %560 = vst [vmem:[%s524 + $0x88] sm:$0xff] %v559
            %v561 = vld [vmem:[%s523 + $0x240] sm:$0xff]
            %562 = vst [vmem:[%s524 + $0x90] sm:$0xff] %v561
            %v563 = vld [vmem:[%s523 + $0x260] sm:$0xff]
            %564 = vst [vmem:[%s524 + $0x98] sm:$0xff] %v563
            %v565 = vld [vmem:[%s523 + $0x280] sm:$0xff]
            %566 = vst [vmem:[%s524 + $0xa0] sm:$0xff] %v565
            %v567 = vld [vmem:[%s523 + $0x2a0] sm:$0xff]
            %568 = vst [vmem:[%s524 + $0xa8] sm:$0xff] %v567
            %v569 = vld [vmem:[%s523 + $0x2c0] sm:$0xff]
            %570 = vst [vmem:[%s524 + $0xb0] sm:$0xff] %v569
            %v571 = vld [vmem:[%s523 + $0x2e0] sm:$0xff]
            %572 = vst [vmem:[%s524 + $0xb8] sm:$0xff] %v571
            %v573 = vld [vmem:[%s523 + $0x300] sm:$0xff]
            %574 = vst [vmem:[%s524 + $0xc0] sm:$0xff] %v573
            %v575 = vld [vmem:[%s523 + $0x320] sm:$0xff]
            %576 = vst [vmem:[%s524 + $0xc8] sm:$0xff] %v575
            %v577 = vld [vmem:[%s523 + $0x340] sm:$0xff]
            %578 = vst [vmem:[%s524 + $0xd0] sm:$0xff] %v577
            %v579 = vld [vmem:[%s523 + $0x360] sm:$0xff]
            %580 = vst [vmem:[%s524 + $0xd8] sm:$0xff] %v579
            %v581 = vld [vmem:[%s523 + $0x380] sm:$0xff]
            %582 = vst [vmem:[%s524 + $0xe0] sm:$0xff] %v581
            %v583 = vld [vmem:[%s523 + $0x3a0] sm:$0xff]
            %584 = vst [vmem:[%s524 + $0xe8] sm:$0xff] %v583
            %v585 = vld [vmem:[%s523 + $0x3c0] sm:$0xff]
            %586 = vst [vmem:[%s524 + $0xf0] sm:$0xff] %v585
            %v587 = vld [vmem:[%s523 + $0x3e0] sm:$0xff]
            %588 = vst [vmem:[%s524 + $0xf8] sm:$0xff] %v587
          $region136: #{semantic_attention_forward.2} parent=130 // loop_footer
            %s522 = sadd.s32 1, %s518
          $region137: #{semantic_attention_forward.2} parent=130 // loop_footer_branch
            %517 = sbr.rel target = $region133
          $region138: #{semantic_attention_forward.2} parent=130 // loop_exit
            _
        $region131: #{semantic_attention_forward.2} parent=122 // pred_fallthru
          _
      $region123: #{semantic_attention_forward.2} parent=118 // pred_fallthru
        _
      %665 = vnop
    $region119: #{semantic_attention_forward.2} parent=1 // pred_fallthru
      _
    // Predicated region
    $region154: #{semantic_attention_forward.2} parent=1 // pred_check
      _
    $region155: #{semantic_attention_forward.2} parent=1 // pred_check_branch
      %667 = sbr.rel (0) target = $region157
    $region156: #{semantic_attention_forward.2} parent=1 // pred_region
      _
    $region157: #{semantic_attention_forward.2} parent=1 // pred_fallthru
      _
    // Predicated region
    $region158: #{semantic_attention_forward.2} parent=1 // pred_check
      _
    $region159: #{semantic_attention_forward.2} parent=1 // pred_check_branch
      %669 = sbr.rel (0) target = $region161
    $region160: #{semantic_attention_forward.2} parent=1 // pred_region
      _
    $region161: #{semantic_attention_forward.2} parent=1 // pred_fallthru
      _
    // Predicated region
    $region162: #{semantic_attention_forward.2} parent=1 // pred_check
      _
    $region163: #{semantic_attention_forward.2} parent=1 // pred_check_branch
      %671 = sbr.rel (0) target = $region165
    $region164: #{semantic_attention_forward.2} parent=1 // pred_region
      _
    $region165: #{semantic_attention_forward.2} parent=1 // pred_fallthru
      _
    // Predicated region
    $region166: #{semantic_attention_forward.2} parent=1 // pred_check
      _
    $region167: #{semantic_attention_forward.2} parent=1 // pred_check_branch
      %673 = sbr.rel (0) target = $region169
    $region168: #{semantic_attention_forward.2} parent=1 // pred_region
      _
    $region169: #{semantic_attention_forward.2} parent=1 // pred_fallthru
      _
    // Predicated region
    $region170: #{semantic_attention_forward.2} parent=1 // pred_check
      _
    $region171: #{semantic_attention_forward.2} parent=1 // pred_check_branch
      %675 = sbr.rel (0) target = $region173
    $region172: #{semantic_attention_forward.2} parent=1 // pred_region
      _
    $region173: #{semantic_attention_forward.2} parent=1 // pred_fallthru
      _
    // Predicated region
    $region174: #{semantic_attention_forward.2} parent=1 // pred_check
      _
    $region175: #{semantic_attention_forward.2} parent=1 // pred_check_branch
      %677 = sbr.rel (0) target = $region177
    $region176: #{semantic_attention_forward.2} parent=1 // pred_region
      _
    $region177: #{semantic_attention_forward.2} parent=1 // pred_fallthru
      _
    %s678 = sadd.s32 0, 0
    %s679 = smul.u32 32, %s678
    %s680 = sadd.s32 0, 0
    %s681 = smul.u32 32, %s680
    %s682 = sadd.s32 0, 0
    %s683 = smul.u32 32, %s682
    %s684 = sadd.s32 0, 0
    %s685 = smul.u32 32, %s684
    %p687 = scmp.eq.s32.totalorder 0, 0
    // Predicated region
    $region178: #{semantic_attention_forward.2} parent=1 // pred_check
      %p688 = pneg %p687
    $region179: #{semantic_attention_forward.2} parent=1 // pred_check_branch
      %690 = sbr.rel (%p688) target = $region181
    $region180: #{semantic_attention_forward.2} parent=1 // pred_region
      %691 = vst [vmem:[%s6] sm:$0xf] 0.0
    $region181: #{semantic_attention_forward.2} parent=1 // pred_fallthru
      _
    %v692 = vld [vmem:[%s4] sm:$0xf]
    %v693 = vld [vmem:[%s4 + $0x4] sm:$0xf]
    %v694 = vld [vmem:[%s4 + $0x8] sm:$0xf]
    %v695 = vld [vmem:[%s4 + $0xc] sm:$0xf]
    %v696 = vld [vmem:[%s4 + $0x10] sm:$0xf]
    %v697 = vld [vmem:[%s4 + $0x14] sm:$0xf]
    %v698 = vld [vmem:[%s4 + $0x18] sm:$0xf]
    %v699 = vld [vmem:[%s4 + $0x1c] sm:$0xf]
    %v700 = vld [vmem:[%s4 + $0x20] sm:$0xf]
    %v701 = vld [vmem:[%s4 + $0x24] sm:$0xf]
    %v702 = vld [vmem:[%s4 + $0x28] sm:$0xf]
    %v703 = vld [vmem:[%s4 + $0x2c] sm:$0xf]
    %v704 = vld [vmem:[%s4 + $0x30] sm:$0xf]
    %v705 = vld [vmem:[%s4 + $0x34] sm:$0xf]
    %v706 = vld [vmem:[%s4 + $0x38] sm:$0xf]
    %v707 = vld [vmem:[%s4 + $0x3c] sm:$0xf]
    %v708 = vld [vmem:[%s5] sm:$0x1]
    %v709 = vld [vmem:[#allocation2] sm:$0xff]
    %v710 = vld [vmem:[#allocation2 + $0x8] sm:$0xff]
    %v711 = vld [vmem:[#allocation2 + $0x10] sm:$0xff]
    %v712 = vld [vmem:[#allocation2 + $0x18] sm:$0xff]
    %v713 = vld [vmem:[#allocation2 + $0x20] sm:$0xff]
    %v714 = vld [vmem:[#allocation2 + $0x28] sm:$0xff]
    %v715 = vld [vmem:[#allocation2 + $0x30] sm:$0xff]
    %v716 = vld [vmem:[#allocation2 + $0x38] sm:$0xff]
    %v717 = vld [vmem:[#allocation2 + $0x40] sm:$0xff]
    %v718 = vld [vmem:[#allocation2 + $0x48] sm:$0xff]
    %v719 = vld [vmem:[#allocation2 + $0x50] sm:$0xff]
    %v720 = vld [vmem:[#allocation2 + $0x58] sm:$0xff]
    %v721 = vld [vmem:[#allocation2 + $0x60] sm:$0xff]
    %v722 = vld [vmem:[#allocation2 + $0x68] sm:$0xff]
    %v723 = vld [vmem:[#allocation2 + $0x70] sm:$0xff]
    %v724 = vld [vmem:[#allocation2 + $0x78] sm:$0xff]
    %v725 = vld [vmem:[#allocation2 + $0x80] sm:$0xff]
    %v726 = vld [vmem:[#allocation2 + $0x88] sm:$0xff]
    %v727 = vld [vmem:[#allocation2 + $0x90] sm:$0xff]
    %v728 = vld [vmem:[#allocation2 + $0x98] sm:$0xff]
    %v729 = vld [vmem:[#allocation2 + $0xa0] sm:$0xff]
    %v730 = vld [vmem:[#allocation2 + $0xa8] sm:$0xff]
    %v731 = vld [vmem:[#allocation2 + $0xb0] sm:$0xff]
    %v732 = vld [vmem:[#allocation2 + $0xb8] sm:$0xff]
    %v733 = vld [vmem:[#allocation2 + $0xc0] sm:$0xff]
    %v734 = vld [vmem:[#allocation2 + $0xc8] sm:$0xff]
    %v735 = vld [vmem:[#allocation2 + $0xd0] sm:$0xff]
    %v736 = vld [vmem:[#allocation2 + $0xd8] sm:$0xff]
    %v737 = vld [vmem:[#allocation2 + $0xe0] sm:$0xff]
    %v738 = vld [vmem:[#allocation2 + $0xe8] sm:$0xff]
    %v739 = vld [vmem:[#allocation2 + $0xf0] sm:$0xff]
    %v740 = vld [vmem:[#allocation2 + $0xf8] sm:$0xff]
    %v741 = vpack.c.bf16 %v710, %v709
    %v742 = vpack.c.bf16 %v712, %v711
    %v743 = vpack.c.bf16 %v714, %v713
    %v744 = vpack.c.bf16 %v716, %v715
    %v745 = vpack.c.bf16 %v718, %v717
    %v746 = vpack.c.bf16 %v720, %v719
    %v747 = vpack.c.bf16 %v722, %v721
    %v748 = vpack.c.bf16 %v724, %v723
    %v749 = vpack.c.bf16 %v726, %v725
    %v750 = vpack.c.bf16 %v728, %v727
    %v751 = vpack.c.bf16 %v730, %v729
    %v752 = vpack.c.bf16 %v732, %v731
    %v753 = vpack.c.bf16 %v734, %v733
    %v754 = vpack.c.bf16 %v736, %v735
    %v755 = vpack.c.bf16 %v738, %v737
    %v756 = vpack.c.bf16 %v740, %v739
    %v758 = vlaneseq
    %v759 = vshrl.u32 %v758, 7
    %v760 = vsub.s32 0, %v759
    %v761 = vrot.slane %v708, %v760
    %v779 = vunpack.c.l.b16 %v692
    %v780 = vunpack.c.l.b16 %v693
    %v781 = vunpack.c.l.b16 %v694
    %v782 = vunpack.c.l.b16 %v695
    %v783 = vunpack.c.l.b16 %v696
    %v784 = vunpack.c.l.b16 %v697
    %v785 = vunpack.c.l.b16 %v698
    %v786 = vunpack.c.l.b16 %v699
    %v787 = vunpack.c.l.b16 %v700
    %v788 = vunpack.c.l.b16 %v701
    %v789 = vunpack.c.l.b16 %v702
    %v790 = vunpack.c.l.b16 %v703
    %v791 = vunpack.c.l.b16 %v704
    %v792 = vunpack.c.l.b16 %v705
    %v793 = vunpack.c.l.b16 %v706
    %v794 = vunpack.c.l.b16 %v707
    %v795 = vpack.c.b16 %v780, %v779
    %v796 = vpack.c.b16 %v782, %v781
    %v797 = vpack.c.b16 %v784, %v783
    %v798 = vpack.c.b16 %v786, %v785
    %v799 = vpack.c.b16 %v788, %v787
    %v800 = vpack.c.b16 %v790, %v789
    %v801 = vpack.c.b16 %v792, %v791
    %v802 = vpack.c.b16 %v794, %v793
    %811 = vmatprep.subr.bf16.mxu0 0
    %812 = vmatpush1.bf16.msra.mxu0 %v795
    %813 = vmatprep.subr.bf16.mxu0 0
    %814 = vmatpush1.bf16.msra.mxu0 %v796
    %815 = vmatprep.subr.bf16.mxu0 0
    %816 = vmatpush1.bf16.msra.mxu0 %v797
    %817 = vmatprep.subr.bf16.mxu0 0
    %818 = vmatpush1.bf16.msra.mxu0 %v798
    %819 = vmatprep.subr.bf16.mxu0 0
    %820 = vmatpush1.bf16.msra.mxu0 %v799
    %821 = vmatprep.subr.bf16.mxu0 0
    %822 = vmatpush1.bf16.msra.mxu0 %v800
    %823 = vmatprep.subr.bf16.mxu0 0
    %824 = vmatpush1.bf16.msra.mxu0 %v801
    %825 = vmatprep.subr.bf16.mxu0 0
    %826 = vmatpush1.bf16.msra.mxu0 %v802
    %827 = vmatprep.subr.bf16.mxu0 0
    %828 = vmatpush1.bf16.msra.mxu0 0
    %829 = vmatprep.subr.bf16.mxu0 0
    %830 = vmatpush1.bf16.msra.mxu0 0
    %831 = vmatprep.subr.bf16.mxu0 0
    %832 = vmatpush1.bf16.msra.mxu0 0
    %833 = vmatprep.subr.bf16.mxu0 0
    %834 = vmatpush1.bf16.msra.mxu0 0
    %835 = vmatprep.subr.bf16.mxu0 0
    %836 = vmatpush1.bf16.msra.mxu0 0
    %837 = vmatprep.subr.bf16.mxu0 0
    %838 = vmatpush1.bf16.msra.mxu0 0
    %839 = vmatprep.subr.bf16.mxu0 0
    %840 = vmatpush1.bf16.msra.mxu0 0
    %841 = vmatprep.subr.bf16.mxu0 0
    %842 = vmatpush1.bf16.msra.mxu0 0
    %843 = vmatprep.mubr.bf16.mxu0 0
    %844 = vmatmul.mubr.bf16.gmra.mrb[0].mxu0 %v741
    %v845 = vpop.f32.mrb[0].mxu0
    %v846 = vadd.f32 %v761, %v845
    %v847 = vpop.f32.mrb[0].mxu0
    %v848 = vpop.f32.mrb[0].mxu0
    %v849 = vadd.f32 %v761, %v848
    %v850 = vpop.f32.mrb[0].mxu0
    %851 = vmatprep.mubr.bf16.mxu0 0
    %852 = vmatmul.mubr.bf16.gmra.mrb[0].mxu0 %v742
    %v853 = vpop.f32.mrb[0].mxu0
    %v854 = vadd.f32 %v761, %v853
    %v855 = vpop.f32.mrb[0].mxu0
    %v856 = vpop.f32.mrb[0].mxu0
    %v857 = vadd.f32 %v761, %v856
    %v858 = vpop.f32.mrb[0].mxu0
    %859 = vmatprep.mubr.bf16.mxu0 0
    %860 = vmatmul.mubr.bf16.gmra.mrb[0].mxu0 %v743
    %v861 = vpop.f32.mrb[0].mxu0
    %v862 = vadd.f32 %v761, %v861
    %v863 = vpop.f32.mrb[0].mxu0
    %v864 = vpop.f32.mrb[0].mxu0
    %v865 = vadd.f32 %v761, %v864
    %v866 = vpop.f32.mrb[0].mxu0
    %867 = vmatprep.mubr.bf16.mxu0 0
    %868 = vmatmul.mubr.bf16.gmra.mrb[0].mxu0 %v744
    %v869 = vpop.f32.mrb[0].mxu0
    %v870 = vadd.f32 %v761, %v869
    %v871 = vpop.f32.mrb[0].mxu0
    %v872 = vpop.f32.mrb[0].mxu0
    %v873 = vadd.f32 %v761, %v872
    %v874 = vpop.f32.mrb[0].mxu0
    %875 = vmatprep.mubr.bf16.mxu0 0
    %876 = vmatmul.mubr.bf16.gmra.mrb[0].mxu0 %v745
    %v877 = vpop.f32.mrb[0].mxu0
    %v878 = vadd.f32 %v761, %v877
    %v879 = vpop.f32.mrb[0].mxu0
    %v880 = vpop.f32.mrb[0].mxu0
    %v881 = vadd.f32 %v761, %v880
    %v882 = vpop.f32.mrb[0].mxu0
    %883 = vmatprep.mubr.bf16.mxu0 0
    %884 = vmatmul.mubr.bf16.gmra.mrb[0].mxu0 %v746
    %v885 = vpop.f32.mrb[0].mxu0
    %v886 = vadd.f32 %v761, %v885
    %v887 = vpop.f32.mrb[0].mxu0
    %v888 = vpop.f32.mrb[0].mxu0
    %v889 = vadd.f32 %v761, %v888
    %v890 = vpop.f32.mrb[0].mxu0
    %891 = vmatprep.mubr.bf16.mxu0 0
    %892 = vmatmul.mubr.bf16.gmra.mrb[0].mxu0 %v747
    %v893 = vpop.f32.mrb[0].mxu0
    %v894 = vadd.f32 %v761, %v893
    %v895 = vpop.f32.mrb[0].mxu0
    %v896 = vpop.f32.mrb[0].mxu0
    %v897 = vadd.f32 %v761, %v896
    %v898 = vpop.f32.mrb[0].mxu0
    %899 = vmatprep.mubr.bf16.mxu0 0
    %900 = vmatmul.mubr.bf16.gmra.mrb[0].mxu0 %v748
    %v901 = vpop.f32.mrb[0].mxu0
    %v902 = vadd.f32 %v761, %v901
    %v903 = vpop.f32.mrb[0].mxu0
    %v904 = vpop.f32.mrb[0].mxu0
    %v905 = vadd.f32 %v761, %v904
    %v906 = vpop.f32.mrb[0].mxu0
    %907 = vmatprep.mubr.bf16.mxu0 0
    %908 = vmatmul.mubr.bf16.gmra.mrb[0].mxu0 %v749
    %v909 = vpop.f32.mrb[0].mxu0
    %v910 = vadd.f32 %v761, %v909
    %v911 = vpop.f32.mrb[0].mxu0
    %v912 = vpop.f32.mrb[0].mxu0
    %v913 = vadd.f32 %v761, %v912
    %v914 = vpop.f32.mrb[0].mxu0
    %915 = vmatprep.mubr.bf16.mxu0 0
    %916 = vmatmul.mubr.bf16.gmra.mrb[0].mxu0 %v750
    %v917 = vpop.f32.mrb[0].mxu0
    %v918 = vadd.f32 %v761, %v917
    %v919 = vpop.f32.mrb[0].mxu0
    %v920 = vpop.f32.mrb[0].mxu0
    %v921 = vadd.f32 %v761, %v920
    %v922 = vpop.f32.mrb[0].mxu0
    %923 = vmatprep.mubr.bf16.mxu0 0
    %924 = vmatmul.mubr.bf16.gmra.mrb[0].mxu0 %v751
    %v925 = vpop.f32.mrb[0].mxu0
    %v926 = vadd.f32 %v761, %v925
    %v927 = vpop.f32.mrb[0].mxu0
    %v928 = vpop.f32.mrb[0].mxu0
    %v929 = vadd.f32 %v761, %v928
    %v930 = vpop.f32.mrb[0].mxu0
    %931 = vmatprep.mubr.bf16.mxu0 0
    %932 = vmatmul.mubr.bf16.gmra.mrb[0].mxu0 %v752
    %v933 = vpop.f32.mrb[0].mxu0
    %v934 = vadd.f32 %v761, %v933
    %v935 = vpop.f32.mrb[0].mxu0
    %v936 = vpop.f32.mrb[0].mxu0
    %v937 = vadd.f32 %v761, %v936
    %v938 = vpop.f32.mrb[0].mxu0
    %939 = vmatprep.mubr.bf16.mxu0 0
    %940 = vmatmul.mubr.bf16.gmra.mrb[0].mxu0 %v753
    %v941 = vpop.f32.mrb[0].mxu0
    %v942 = vadd.f32 %v761, %v941
    %v943 = vpop.f32.mrb[0].mxu0
    %v944 = vpop.f32.mrb[0].mxu0
    %v945 = vadd.f32 %v761, %v944
    %v946 = vpop.f32.mrb[0].mxu0
    %947 = vmatprep.mubr.bf16.mxu0 0
    %948 = vmatmul.mubr.bf16.gmra.mrb[0].mxu0 %v754
    %v949 = vpop.f32.mrb[0].mxu0
    %v950 = vadd.f32 %v761, %v949
    %v951 = vpop.f32.mrb[0].mxu0
    %v952 = vpop.f32.mrb[0].mxu0
    %v953 = vadd.f32 %v761, %v952
    %v954 = vpop.f32.mrb[0].mxu0
    %955 = vmatprep.mubr.bf16.mxu0 0
    %956 = vmatmul.mubr.bf16.gmra.mrb[0].mxu0 %v755
    %v957 = vpop.f32.mrb[0].mxu0
    %v958 = vadd.f32 %v761, %v957
    %v959 = vpop.f32.mrb[0].mxu0
    %v960 = vpop.f32.mrb[0].mxu0
    %v961 = vadd.f32 %v761, %v960
    %v962 = vpop.f32.mrb[0].mxu0
    %963 = vmatprep.mubr.bf16.mxu0 0
    %964 = vmatmul.mubr.bf16.gmra.mrb[0].mxu0 %v756
    %v965 = vpop.f32.mrb[0].mxu0
    %v966 = vadd.f32 %v761, %v965
    %v967 = vpop.f32.mrb[0].mxu0
    %v968 = vpop.f32.mrb[0].mxu0
    %v969 = vadd.f32 %v761, %v968
    %v970 = vpop.f32.mrb[0].mxu0
    %971 = vdwg.mxu0
    %v972 = vpack.c.bf16 %v849, %v846
    %v973 = vpack.c.bf16 %v857, %v854
    %v974 = vpack.c.bf16 %v865, %v862
    %v975 = vpack.c.bf16 %v873, %v870
    %v976 = vpack.c.bf16 %v881, %v878
    %v977 = vpack.c.bf16 %v889, %v886
    %v978 = vpack.c.bf16 %v897, %v894
    %v979 = vpack.c.bf16 %v905, %v902
    %v980 = vpack.c.bf16 %v913, %v910
    %v981 = vpack.c.bf16 %v921, %v918
    %v982 = vpack.c.bf16 %v929, %v926
    %v983 = vpack.c.bf16 %v937, %v934
    %v984 = vpack.c.bf16 %v945, %v942
    %v985 = vpack.c.bf16 %v953, %v950
    %v986 = vpack.c.bf16 %v961, %v958
    %v987 = vpack.c.bf16 %v969, %v966
    %v988 = vtanh.bf16.pop %v972
    %v989 = vtanh.bf16.pop %v973
    %v990 = vtanh.bf16.pop %v974
    %v991 = vtanh.bf16.pop %v975
    %v992 = vtanh.bf16.pop %v976
    %v993 = vtanh.bf16.pop %v977
    %v994 = vtanh.bf16.pop %v978
    %v995 = vtanh.bf16.pop %v979
    %v996 = vtanh.bf16.pop %v980
    %v997 = vtanh.bf16.pop %v981
    %v998 = vtanh.bf16.pop %v982
    %v999 = vtanh.bf16.pop %v983
    %v1000 = vtanh.bf16.pop %v984
    %v1001 = vtanh.bf16.pop %v985
    %v1002 = vtanh.bf16.pop %v986
    %v1003 = vtanh.bf16.pop %v987
    %v1004 = vunpack.c.l.bf16 %v988
    %v1005 = vunpack.c.h.bf16 %v988
    %v1006 = vunpack.c.l.bf16 %v989
    %v1007 = vunpack.c.h.bf16 %v989
    %v1008 = vunpack.c.l.bf16 %v990
    %v1009 = vunpack.c.h.bf16 %v990
    %v1010 = vunpack.c.l.bf16 %v991
    %v1011 = vunpack.c.h.bf16 %v991
    %v1012 = vunpack.c.l.bf16 %v992
    %v1013 = vunpack.c.h.bf16 %v992
    %v1014 = vunpack.c.l.bf16 %v993
    %v1015 = vunpack.c.h.bf16 %v993
    %v1016 = vunpack.c.l.bf16 %v994
    %v1017 = vunpack.c.h.bf16 %v994
    %v1018 = vunpack.c.l.bf16 %v995
    %v1019 = vunpack.c.h.bf16 %v995
    %v1020 = vunpack.c.l.bf16 %v996
    %v1021 = vunpack.c.h.bf16 %v996
    %v1022 = vunpack.c.l.bf16 %v997
    %v1023 = vunpack.c.h.bf16 %v997
    %v1024 = vunpack.c.l.bf16 %v998
    %v1025 = vunpack.c.h.bf16 %v998
    %v1026 = vunpack.c.l.bf16 %v999
    %v1027 = vunpack.c.h.bf16 %v999
    %v1028 = vunpack.c.l.bf16 %v1000
    %v1029 = vunpack.c.h.bf16 %v1000
    %v1030 = vunpack.c.l.bf16 %v1001
    %v1031 = vunpack.c.h.bf16 %v1001
    %v1032 = vunpack.c.l.bf16 %v1002
    %v1033 = vunpack.c.h.bf16 %v1002
    %v1034 = vunpack.c.l.bf16 %v1003
    %v1035 = vunpack.c.h.bf16 %v1003
    %v1036 = vadd.f32 %v1004, %v1005
    %v1037 = vadd.f32 %v1036, %v1006
    %v1038 = vadd.f32 %v1037, %v1007
    %v1039 = vadd.f32 %v1038, %v1008
    %v1040 = vadd.f32 %v1039, %v1009
    %v1041 = vadd.f32 %v1040, %v1010
    %v1042 = vadd.f32 %v1041, %v1011
    %v1043 = vadd.f32 %v1042, %v1012
    %v1044 = vadd.f32 %v1043, %v1013
    %v1045 = vadd.f32 %v1044, %v1014
    %v1046 = vadd.f32 %v1045, %v1015
    %v1047 = vadd.f32 %v1046, %v1016
    %v1048 = vadd.f32 %v1047, %v1017
    %v1049 = vadd.f32 %v1048, %v1018
    %v1050 = vadd.f32 %v1049, %v1019
    %v1051 = vadd.f32 %v1050, %v1020
    %v1052 = vadd.f32 %v1051, %v1021
    %v1053 = vadd.f32 %v1052, %v1022
    %v1054 = vadd.f32 %v1053, %v1023
    %v1055 = vadd.f32 %v1054, %v1024
    %v1056 = vadd.f32 %v1055, %v1025
    %v1057 = vadd.f32 %v1056, %v1026
    %v1058 = vadd.f32 %v1057, %v1027
    %v1059 = vadd.f32 %v1058, %v1028
    %v1060 = vadd.f32 %v1059, %v1029
    %v1061 = vadd.f32 %v1060, %v1030
    %v1062 = vadd.f32 %v1061, %v1031
    %v1063 = vadd.f32 %v1062, %v1032
    %v1064 = vadd.f32 %v1063, %v1033
    %v1065 = vadd.f32 %v1064, %v1034
    %v1066 = vadd.f32 %v1065, %v1035
    %v1067 = vrot.slane %v1066, 4
    %v1068 = vadd.f32 %v1066, %v1067
    %v1069 = vrot.slane %v1068, 2
    %v1070 = vadd.f32 %v1068, %v1069
    %v1071 = vrot.slane %v1070, 1
    %v1072 = vadd.f32 %v1070, %v1071
    %v1073 = vld [vmem:[#allocation3] sm:$0xff]
    %v1074 = vld [vmem:[#allocation3 + $0x8] sm:$0xff]
    %v1075 = vld [vmem:[#allocation3 + $0x10] sm:$0xff]
    %v1076 = vld [vmem:[#allocation3 + $0x18] sm:$0xff]
    %v1077 = vld [vmem:[#allocation3 + $0x20] sm:$0xff]
    %v1078 = vld [vmem:[#allocation3 + $0x28] sm:$0xff]
    %v1079 = vld [vmem:[#allocation3 + $0x30] sm:$0xff]
    %v1080 = vld [vmem:[#allocation3 + $0x38] sm:$0xff]
    %v1081 = vld [vmem:[#allocation3 + $0x40] sm:$0xff]
    %v1082 = vld [vmem:[#allocation3 + $0x48] sm:$0xff]
    %v1083 = vld [vmem:[#allocation3 + $0x50] sm:$0xff]
    %v1084 = vld [vmem:[#allocation3 + $0x58] sm:$0xff]
    %v1085 = vld [vmem:[#allocation3 + $0x60] sm:$0xff]
    %v1086 = vld [vmem:[#allocation3 + $0x68] sm:$0xff]
    %v1087 = vld [vmem:[#allocation3 + $0x70] sm:$0xff]
    %v1088 = vld [vmem:[#allocation3 + $0x78] sm:$0xff]
    %v1089 = vld [vmem:[#allocation3 + $0x80] sm:$0xff]
    %v1090 = vld [vmem:[#allocation3 + $0x88] sm:$0xff]
    %v1091 = vld [vmem:[#allocation3 + $0x90] sm:$0xff]
    %v1092 = vld [vmem:[#allocation3 + $0x98] sm:$0xff]
    %v1093 = vld [vmem:[#allocation3 + $0xa0] sm:$0xff]
    %v1094 = vld [vmem:[#allocation3 + $0xa8] sm:$0xff]
    %v1095 = vld [vmem:[#allocation3 + $0xb0] sm:$0xff]
    %v1096 = vld [vmem:[#allocation3 + $0xb8] sm:$0xff]
    %v1097 = vld [vmem:[#allocation3 + $0xc0] sm:$0xff]
    %v1098 = vld [vmem:[#allocation3 + $0xc8] sm:$0xff]
    %v1099 = vld [vmem:[#allocation3 + $0xd0] sm:$0xff]
    %v1100 = vld [vmem:[#allocation3 + $0xd8] sm:$0xff]
    %v1101 = vld [vmem:[#allocation3 + $0xe0] sm:$0xff]
    %v1102 = vld [vmem:[#allocation3 + $0xe8] sm:$0xff]
    %v1103 = vld [vmem:[#allocation3 + $0xf0] sm:$0xff]
    %v1104 = vld [vmem:[#allocation3 + $0xf8] sm:$0xff]
    %v1105 = vpack.c.bf16 %v1074, %v1073
    %v1106 = vpack.c.bf16 %v1076, %v1075
    %v1107 = vpack.c.bf16 %v1078, %v1077
    %v1108 = vpack.c.bf16 %v1080, %v1079
    %v1109 = vpack.c.bf16 %v1082, %v1081
    %v1110 = vpack.c.bf16 %v1084, %v1083
    %v1111 = vpack.c.bf16 %v1086, %v1085
    %v1112 = vpack.c.bf16 %v1088, %v1087
    %v1113 = vpack.c.bf16 %v1090, %v1089
    %v1114 = vpack.c.bf16 %v1092, %v1091
    %v1115 = vpack.c.bf16 %v1094, %v1093
    %v1116 = vpack.c.bf16 %v1096, %v1095
    %v1117 = vpack.c.bf16 %v1098, %v1097
    %v1118 = vpack.c.bf16 %v1100, %v1099
    %v1119 = vpack.c.bf16 %v1102, %v1101
    %v1120 = vpack.c.bf16 %v1104, %v1103
    %1121 = vmatprep.subr.bf16.mxu0 0
    %1122 = vmatpush1.bf16.msra.mxu0 %v795
    %1123 = vmatprep.subr.bf16.mxu0 0
    %1124 = vmatpush1.bf16.msra.mxu0 %v796
    %1125 = vmatprep.subr.bf16.mxu0 0
    %1126 = vmatpush1.bf16.msra.mxu0 %v797
    %1127 = vmatprep.subr.bf16.mxu0 0
    %1128 = vmatpush1.bf16.msra.mxu0 %v798
    %1129 = vmatprep.subr.bf16.mxu0 0
    %1130 = vmatpush1.bf16.msra.mxu0 %v799
    %1131 = vmatprep.subr.bf16.mxu0 0
    %1132 = vmatpush1.bf16.msra.mxu0 %v800
    %1133 = vmatprep.subr.bf16.mxu0 0
    %1134 = vmatpush1.bf16.msra.mxu0 %v801
    %1135 = vmatprep.subr.bf16.mxu0 0
    %1136 = vmatpush1.bf16.msra.mxu0 %v802
    %1137 = vmatprep.subr.bf16.mxu0 0
    %1138 = vmatpush1.bf16.msra.mxu0 0
    %1139 = vmatprep.subr.bf16.mxu0 0
    %1140 = vmatpush1.bf16.msra.mxu0 0
    %1141 = vmatprep.subr.bf16.mxu0 0
    %1142 = vmatpush1.bf16.msra.mxu0 0
    %1143 = vmatprep.subr.bf16.mxu0 0
    %1144 = vmatpush1.bf16.msra.mxu0 0
    %1145 = vmatprep.subr.bf16.mxu0 0
    %1146 = vmatpush1.bf16.msra.mxu0 0
    %1147 = vmatprep.subr.bf16.mxu0 0
    %1148 = vmatpush1.bf16.msra.mxu0 0
    %1149 = vmatprep.subr.bf16.mxu0 0
    %1150 = vmatpush1.bf16.msra.mxu0 0
    %1151 = vmatprep.subr.bf16.mxu0 0
    %1152 = vmatpush1.bf16.msra.mxu0 0
    %1153 = vmatprep.mubr.bf16.mxu0 0
    %1154 = vmatmul.mubr.bf16.gmra.mrb[0].mxu0 %v1105
    %v1155 = vpop.f32.mrb[0].mxu0
    %v1156 = vadd.f32 %v761, %v1155
    %v1157 = vpop.f32.mrb[0].mxu0
    %v1158 = vpop.f32.mrb[0].mxu0
    %v1159 = vadd.f32 %v761, %v1158
    %v1160 = vpop.f32.mrb[0].mxu0
    %1161 = vmatprep.mubr.bf16.mxu0 0
    %1162 = vmatmul.mubr.bf16.gmra.mrb[0].mxu0 %v1106
    %v1163 = vpop.f32.mrb[0].mxu0
    %v1164 = vadd.f32 %v761, %v1163
    %v1165 = vpop.f32.mrb[0].mxu0
    %v1166 = vpop.f32.mrb[0].mxu0
    %v1167 = vadd.f32 %v761, %v1166
    %v1168 = vpop.f32.mrb[0].mxu0
    %1169 = vmatprep.mubr.bf16.mxu0 0
    %1170 = vmatmul.mubr.bf16.gmra.mrb[0].mxu0 %v1107
    %v1171 = vpop.f32.mrb[0].mxu0
    %v1172 = vadd.f32 %v761, %v1171
    %v1173 = vpop.f32.mrb[0].mxu0
    %v1174 = vpop.f32.mrb[0].mxu0
    %v1175 = vadd.f32 %v761, %v1174
    %v1176 = vpop.f32.mrb[0].mxu0
    %1177 = vmatprep.mubr.bf16.mxu0 0
    %1178 = vmatmul.mubr.bf16.gmra.mrb[0].mxu0 %v1108
    %v1179 = vpop.f32.mrb[0].mxu0
    %v1180 = vadd.f32 %v761, %v1179
    %v1181 = vpop.f32.mrb[0].mxu0
    %v1182 = vpop.f32.mrb[0].mxu0
    %v1183 = vadd.f32 %v761, %v1182
    %v1184 = vpop.f32.mrb[0].mxu0
    %1185 = vmatprep.mubr.bf16.mxu0 0
    %1186 = vmatmul.mubr.bf16.gmra.mrb[0].mxu0 %v1109
    %v1187 = vpop.f32.mrb[0].mxu0
    %v1188 = vadd.f32 %v761, %v1187
    %v1189 = vpop.f32.mrb[0].mxu0
    %v1190 = vpop.f32.mrb[0].mxu0
    %v1191 = vadd.f32 %v761, %v1190
    %v1192 = vpop.f32.mrb[0].mxu0
    %1193 = vmatprep.mubr.bf16.mxu0 0
    %1194 = vmatmul.mubr.bf16.gmra.mrb[0].mxu0 %v1110
    %v1195 = vpop.f32.mrb[0].mxu0
    %v1196 = vadd.f32 %v761, %v1195
    %v1197 = vpop.f32.mrb[0].mxu0
    %v1198 = vpop.f32.mrb[0].mxu0
    %v1199 = vadd.f32 %v761, %v1198
    %v1200 = vpop.f32.mrb[0].mxu0
    %1201 = vmatprep.mubr.bf16.mxu0 0
    %1202 = vmatmul.mubr.bf16.gmra.mrb[0].mxu0 %v1111
    %v1203 = vpop.f32.mrb[0].mxu0
    %v1204 = vadd.f32 %v761, %v1203
    %v1205 = vpop.f32.mrb[0].mxu0
    %v1206 = vpop.f32.mrb[0].mxu0
    %v1207 = vadd.f32 %v761, %v1206
    %v1208 = vpop.f32.mrb[0].mxu0
    %1209 = vmatprep.mubr.bf16.mxu0 0
    %1210 = vmatmul.mubr.bf16.gmra.mrb[0].mxu0 %v1112
    %v1211 = vpop.f32.mrb[0].mxu0
    %v1212 = vadd.f32 %v761, %v1211
    %v1213 = vpop.f32.mrb[0].mxu0
    %v1214 = vpop.f32.mrb[0].mxu0
    %v1215 = vadd.f32 %v761, %v1214
    %v1216 = vpop.f32.mrb[0].mxu0
    %1217 = vmatprep.mubr.bf16.mxu0 0
    %1218 = vmatmul.mubr.bf16.gmra.mrb[0].mxu0 %v1113
    %v1219 = vpop.f32.mrb[0].mxu0
    %v1220 = vadd.f32 %v761, %v1219
    %v1221 = vpop.f32.mrb[0].mxu0
    %v1222 = vpop.f32.mrb[0].mxu0
    %v1223 = vadd.f32 %v761, %v1222
    %v1224 = vpop.f32.mrb[0].mxu0
    %1225 = vmatprep.mubr.bf16.mxu0 0
    %1226 = vmatmul.mubr.bf16.gmra.mrb[0].mxu0 %v1114
    %v1227 = vpop.f32.mrb[0].mxu0
    %v1228 = vadd.f32 %v761, %v1227
    %v1229 = vpop.f32.mrb[0].mxu0
    %v1230 = vpop.f32.mrb[0].mxu0
    %v1231 = vadd.f32 %v761, %v1230
    %v1232 = vpop.f32.mrb[0].mxu0
    %1233 = vmatprep.mubr.bf16.mxu0 0
    %1234 = vmatmul.mubr.bf16.gmra.mrb[0].mxu0 %v1115
    %v1235 = vpop.f32.mrb[0].mxu0
    %v1236 = vadd.f32 %v761, %v1235
    %v1237 = vpop.f32.mrb[0].mxu0
    %v1238 = vpop.f32.mrb[0].mxu0
    %v1239 = vadd.f32 %v761, %v1238
    %v1240 = vpop.f32.mrb[0].mxu0
    %1241 = vmatprep.mubr.bf16.mxu0 0
    %1242 = vmatmul.mubr.bf16.gmra.mrb[0].mxu0 %v1116
    %v1243 = vpop.f32.mrb[0].mxu0
    %v1244 = vadd.f32 %v761, %v1243
    %v1245 = vpop.f32.mrb[0].mxu0
    %v1246 = vpop.f32.mrb[0].mxu0
    %v1247 = vadd.f32 %v761, %v1246
    %v1248 = vpop.f32.mrb[0].mxu0
    %1249 = vmatprep.mubr.bf16.mxu0 0
    %1250 = vmatmul.mubr.bf16.gmra.mrb[0].mxu0 %v1117
    %v1251 = vpop.f32.mrb[0].mxu0
    %v1252 = vadd.f32 %v761, %v1251
    %v1253 = vpop.f32.mrb[0].mxu0
    %v1254 = vpop.f32.mrb[0].mxu0
    %v1255 = vadd.f32 %v761, %v1254
    %v1256 = vpop.f32.mrb[0].mxu0
    %1257 = vmatprep.mubr.bf16.mxu0 0
    %1258 = vmatmul.mubr.bf16.gmra.mrb[0].mxu0 %v1118
    %v1259 = vpop.f32.mrb[0].mxu0
    %v1260 = vadd.f32 %v761, %v1259
    %v1261 = vpop.f32.mrb[0].mxu0
    %v1262 = vpop.f32.mrb[0].mxu0
    %v1263 = vadd.f32 %v761, %v1262
    %v1264 = vpop.f32.mrb[0].mxu0
    %1265 = vmatprep.mubr.bf16.mxu0 0
    %1266 = vmatmul.mubr.bf16.gmra.mrb[0].mxu0 %v1119
    %v1267 = vpop.f32.mrb[0].mxu0
    %v1268 = vadd.f32 %v761, %v1267
    %v1269 = vpop.f32.mrb[0].mxu0
    %v1270 = vpop.f32.mrb[0].mxu0
    %v1271 = vadd.f32 %v761, %v1270
    %v1272 = vpop.f32.mrb[0].mxu0
    %1273 = vmatprep.mubr.bf16.mxu0 0
    %1274 = vmatmul.mubr.bf16.gmra.mrb[0].mxu0 %v1120
    %v1275 = vpop.f32.mrb[0].mxu0
    %v1276 = vadd.f32 %v761, %v1275
    %v1277 = vpop.f32.mrb[0].mxu0
    %v1278 = vpop.f32.mrb[0].mxu0
    %v1279 = vadd.f32 %v761, %v1278
    %v1280 = vpop.f32.mrb[0].mxu0
    %1281 = vdwg.mxu0
    %v1282 = vpack.c.bf16 %v1159, %v1156
    %v1283 = vpack.c.bf16 %v1167, %v1164
    %v1284 = vpack.c.bf16 %v1175, %v1172
    %v1285 = vpack.c.bf16 %v1183, %v1180
    %v1286 = vpack.c.bf16 %v1191, %v1188
    %v1287 = vpack.c.bf16 %v1199, %v1196
    %v1288 = vpack.c.bf16 %v1207, %v1204
    %v1289 = vpack.c.bf16 %v1215, %v1212
    %v1290 = vpack.c.bf16 %v1223, %v1220
    %v1291 = vpack.c.bf16 %v1231, %v1228
    %v1292 = vpack.c.bf16 %v1239, %v1236
    %v1293 = vpack.c.bf16 %v1247, %v1244
    %v1294 = vpack.c.bf16 %v1255, %v1252
    %v1295 = vpack.c.bf16 %v1263, %v1260
    %v1296 = vpack.c.bf16 %v1271, %v1268
    %v1297 = vpack.c.bf16 %v1279, %v1276
    %v1298 = vtanh.bf16.pop %v1282
    %v1299 = vtanh.bf16.pop %v1283
    %v1300 = vtanh.bf16.pop %v1284
    %v1301 = vtanh.bf16.pop %v1285
    %v1302 = vtanh.bf16.pop %v1286
    %v1303 = vtanh.bf16.pop %v1287
    %v1304 = vtanh.bf16.pop %v1288
    %v1305 = vtanh.bf16.pop %v1289
    %v1306 = vtanh.bf16.pop %v1290
    %v1307 = vtanh.bf16.pop %v1291
    %v1308 = vtanh.bf16.pop %v1292
    %v1309 = vtanh.bf16.pop %v1293
    %v1310 = vtanh.bf16.pop %v1294
    %v1311 = vtanh.bf16.pop %v1295
    %v1312 = vtanh.bf16.pop %v1296
    %v1313 = vtanh.bf16.pop %v1297
    %v1314 = vunpack.c.l.bf16 %v1298
    %v1315 = vunpack.c.h.bf16 %v1298
    %v1316 = vunpack.c.l.bf16 %v1299
    %v1317 = vunpack.c.h.bf16 %v1299
    %v1318 = vunpack.c.l.bf16 %v1300
    %v1319 = vunpack.c.h.bf16 %v1300
    %v1320 = vunpack.c.l.bf16 %v1301
    %v1321 = vunpack.c.h.bf16 %v1301
    %v1322 = vunpack.c.l.bf16 %v1302
    %v1323 = vunpack.c.h.bf16 %v1302
    %v1324 = vunpack.c.l.bf16 %v1303
    %v1325 = vunpack.c.h.bf16 %v1303
    %v1326 = vunpack.c.l.bf16 %v1304
    %v1327 = vunpack.c.h.bf16 %v1304
    %v1328 = vunpack.c.l.bf16 %v1305
    %v1329 = vunpack.c.h.bf16 %v1305
    %v1330 = vunpack.c.l.bf16 %v1306
    %v1331 = vunpack.c.h.bf16 %v1306
    %v1332 = vunpack.c.l.bf16 %v1307
    %v1333 = vunpack.c.h.bf16 %v1307
    %v1334 = vunpack.c.l.bf16 %v1308
    %v1335 = vunpack.c.h.bf16 %v1308
    %v1336 = vunpack.c.l.bf16 %v1309
    %v1337 = vunpack.c.h.bf16 %v1309
    %v1338 = vunpack.c.l.bf16 %v1310
    %v1339 = vunpack.c.h.bf16 %v1310
    %v1340 = vunpack.c.l.bf16 %v1311
    %v1341 = vunpack.c.h.bf16 %v1311
    %v1342 = vunpack.c.l.bf16 %v1312
    %v1343 = vunpack.c.h.bf16 %v1312
    %v1344 = vunpack.c.l.bf16 %v1313
    %v1345 = vunpack.c.h.bf16 %v1313
    %v1346 = vadd.f32 %v1314, %v1315
    %v1347 = vadd.f32 %v1346, %v1316
    %v1348 = vadd.f32 %v1347, %v1317
    %v1349 = vadd.f32 %v1348, %v1318
    %v1350 = vadd.f32 %v1349, %v1319
    %v1351 = vadd.f32 %v1350, %v1320
    %v1352 = vadd.f32 %v1351, %v1321
    %v1353 = vadd.f32 %v1352, %v1322
    %v1354 = vadd.f32 %v1353, %v1323
    %v1355 = vadd.f32 %v1354, %v1324
    %v1356 = vadd.f32 %v1355, %v1325
    %v1357 = vadd.f32 %v1356, %v1326
    %v1358 = vadd.f32 %v1357, %v1327
    %v1359 = vadd.f32 %v1358, %v1328
    %v1360 = vadd.f32 %v1359, %v1329
    %v1361 = vadd.f32 %v1360, %v1330
    %v1362 = vadd.f32 %v1361, %v1331
    %v1363 = vadd.f32 %v1362, %v1332
    %v1364 = vadd.f32 %v1363, %v1333
    %v1365 = vadd.f32 %v1364, %v1334
    %v1366 = vadd.f32 %v1365, %v1335
    %v1367 = vadd.f32 %v1366, %v1336
    %v1368 = vadd.f32 %v1367, %v1337
    %v1369 = vadd.f32 %v1368, %v1338
    %v1370 = vadd.f32 %v1369, %v1339
    %v1371 = vadd.f32 %v1370, %v1340
    %v1372 = vadd.f32 %v1371, %v1341
    %v1373 = vadd.f32 %v1372, %v1342
    %v1374 = vadd.f32 %v1373, %v1343
    %v1375 = vadd.f32 %v1374, %v1344
    %v1376 = vadd.f32 %v1375, %v1345
    %v1377 = vrot.slane %v1376, 4
    %v1378 = vadd.f32 %v1376, %v1377
    %v1379 = vrot.slane %v1378, 2
    %v1380 = vadd.f32 %v1378, %v1379
    %v1381 = vrot.slane %v1380, 1
    %v1382 = vadd.f32 %v1380, %v1381
    %v1383 = vld [vmem:[#allocation4] sm:$0xff]
    %v1384 = vld [vmem:[#allocation4 + $0x8] sm:$0xff]
    %v1385 = vld [vmem:[#allocation4 + $0x10] sm:$0xff]
    %v1386 = vld [vmem:[#allocation4 + $0x18] sm:$0xff]
    %v1387 = vld [vmem:[#allocation4 + $0x20] sm:$0xff]
    %v1388 = vld [vmem:[#allocation4 + $0x28] sm:$0xff]
    %v1389 = vld [vmem:[#allocation4 + $0x30] sm:$0xff]
    %v1390 = vld [vmem:[#allocation4 + $0x38] sm:$0xff]
    %v1391 = vld [vmem:[#allocation4 + $0x40] sm:$0xff]
    %v1392 = vld [vmem:[#allocation4 + $0x48] sm:$0xff]
    %v1393 = vld [vmem:[#allocation4 + $0x50] sm:$0xff]
    %v1394 = vld [vmem:[#allocation4 + $0x58] sm:$0xff]
    %v1395 = vld [vmem:[#allocation4 + $0x60] sm:$0xff]
    %v1396 = vld [vmem:[#allocation4 + $0x68] sm:$0xff]
    %v1397 = vld [vmem:[#allocation4 + $0x70] sm:$0xff]
    %v1398 = vld [vmem:[#allocation4 + $0x78] sm:$0xff]
    %v1399 = vld [vmem:[#allocation4 + $0x80] sm:$0xff]
    %v1400 = vld [vmem:[#allocation4 + $0x88] sm:$0xff]
    %v1401 = vld [vmem:[#allocation4 + $0x90] sm:$0xff]
    %v1402 = vld [vmem:[#allocation4 + $0x98] sm:$0xff]
    %v1403 = vld [vmem:[#allocation4 + $0xa0] sm:$0xff]
    %v1404 = vld [vmem:[#allocation4 + $0xa8] sm:$0xff]
    %v1405 = vld [vmem:[#allocation4 + $0xb0] sm:$0xff]
    %v1406 = vld [vmem:[#allocation4 + $0xb8] sm:$0xff]
    %v1407 = vld [vmem:[#allocation4 + $0xc0] sm:$0xff]
    %v1408 = vld [vmem:[#allocation4 + $0xc8] sm:$0xff]
    %v1409 = vld [vmem:[#allocation4 + $0xd0] sm:$0xff]
    %v1410 = vld [vmem:[#allocation4 + $0xd8] sm:$0xff]
    %v1411 = vld [vmem:[#allocation4 + $0xe0] sm:$0xff]
    %v1412 = vld [vmem:[#allocation4 + $0xe8] sm:$0xff]
    %v1413 = vld [vmem:[#allocation4 + $0xf0] sm:$0xff]
    %v1414 = vld [vmem:[#allocation4 + $0xf8] sm:$0xff]
    %v1415 = vpack.c.bf16 %v1384, %v1383
    %v1416 = vpack.c.bf16 %v1386, %v1385
    %v1417 = vpack.c.bf16 %v1388, %v1387
    %v1418 = vpack.c.bf16 %v1390, %v1389
    %v1419 = vpack.c.bf16 %v1392, %v1391
    %v1420 = vpack.c.bf16 %v1394, %v1393
    %v1421 = vpack.c.bf16 %v1396, %v1395
    %v1422 = vpack.c.bf16 %v1398, %v1397
    %v1423 = vpack.c.bf16 %v1400, %v1399
    %v1424 = vpack.c.bf16 %v1402, %v1401
    %v1425 = vpack.c.bf16 %v1404, %v1403
    %v1426 = vpack.c.bf16 %v1406, %v1405
    %v1427 = vpack.c.bf16 %v1408, %v1407
    %v1428 = vpack.c.bf16 %v1410, %v1409
    %v1429 = vpack.c.bf16 %v1412, %v1411
    %v1430 = vpack.c.bf16 %v1414, %v1413
    %1431 = vmatprep.subr.bf16.mxu0 0
    %1432 = vmatpush1.bf16.msra.mxu0 %v795
    %1433 = vmatprep.subr.bf16.mxu0 0
    %1434 = vmatpush1.bf16.msra.mxu0 %v796
    %1435 = vmatprep.subr.bf16.mxu0 0
    %1436 = vmatpush1.bf16.msra.mxu0 %v797
    %1437 = vmatprep.subr.bf16.mxu0 0
    %1438 = vmatpush1.bf16.msra.mxu0 %v798
    %1439 = vmatprep.subr.bf16.mxu0 0
    %1440 = vmatpush1.bf16.msra.mxu0 %v799
    %1441 = vmatprep.subr.bf16.mxu0 0
    %1442 = vmatpush1.bf16.msra.mxu0 %v800
    %1443 = vmatprep.subr.bf16.mxu0 0
    %1444 = vmatpush1.bf16.msra.mxu0 %v801
    %1445 = vmatprep.subr.bf16.mxu0 0
    %1446 = vmatpush1.bf16.msra.mxu0 %v802
    %1447 = vmatprep.subr.bf16.mxu0 0
    %1448 = vmatpush1.bf16.msra.mxu0 0
    %1449 = vmatprep.subr.bf16.mxu0 0
    %1450 = vmatpush1.bf16.msra.mxu0 0
    %1451 = vmatprep.subr.bf16.mxu0 0
    %1452 = vmatpush1.bf16.msra.mxu0 0
    %1453 = vmatprep.subr.bf16.mxu0 0
    %1454 = vmatpush1.bf16.msra.mxu0 0
    %1455 = vmatprep.subr.bf16.mxu0 0
    %1456 = vmatpush1.bf16.msra.mxu0 0
    %1457 = vmatprep.subr.bf16.mxu0 0
    %1458 = vmatpush1.bf16.msra.mxu0 0
    %1459 = vmatprep.subr.bf16.mxu0 0
    %1460 = vmatpush1.bf16.msra.mxu0 0
    %1461 = vmatprep.subr.bf16.mxu0 0
    %1462 = vmatpush1.bf16.msra.mxu0 0
    %1463 = vmatprep.mubr.bf16.mxu0 0
    %1464 = vmatmul.mubr.bf16.gmra.mrb[0].mxu0 %v1415
    %v1465 = vpop.f32.mrb[0].mxu0
    %v1466 = vadd.f32 %v761, %v1465
    %v1467 = vpop.f32.mrb[0].mxu0
    %v1468 = vpop.f32.mrb[0].mxu0
    %v1469 = vadd.f32 %v761, %v1468
    %v1470 = vpop.f32.mrb[0].mxu0
    %1471 = vmatprep.mubr.bf16.mxu0 0
    %1472 = vmatmul.mubr.bf16.gmra.mrb[0].mxu0 %v1416
    %v1473 = vpop.f32.mrb[0].mxu0
    %v1474 = vadd.f32 %v761, %v1473
    %v1475 = vpop.f32.mrb[0].mxu0
    %v1476 = vpop.f32.mrb[0].mxu0
    %v1477 = vadd.f32 %v761, %v1476
    %v1478 = vpop.f32.mrb[0].mxu0
    %1479 = vmatprep.mubr.bf16.mxu0 0
    %1480 = vmatmul.mubr.bf16.gmra.mrb[0].mxu0 %v1417
    %v1481 = vpop.f32.mrb[0].mxu0
    %v1482 = vadd.f32 %v761, %v1481
    %v1483 = vpop.f32.mrb[0].mxu0
    %v1484 = vpop.f32.mrb[0].mxu0
    %v1485 = vadd.f32 %v761, %v1484
    %v1486 = vpop.f32.mrb[0].mxu0
    %1487 = vmatprep.mubr.bf16.mxu0 0
    %1488 = vmatmul.mubr.bf16.gmra.mrb[0].mxu0 %v1418
    %v1489 = vpop.f32.mrb[0].mxu0
    %v1490 = vadd.f32 %v761, %v1489
    %v1491 = vpop.f32.mrb[0].mxu0
    %v1492 = vpop.f32.mrb[0].mxu0
    %v1493 = vadd.f32 %v761, %v1492
    %v1494 = vpop.f32.mrb[0].mxu0
    %1495 = vmatprep.mubr.bf16.mxu0 0
    %1496 = vmatmul.mubr.bf16.gmra.mrb[0].mxu0 %v1419
    %v1497 = vpop.f32.mrb[0].mxu0
    %v1498 = vadd.f32 %v761, %v1497
    %v1499 = vpop.f32.mrb[0].mxu0
    %v1500 = vpop.f32.mrb[0].mxu0
    %v1501 = vadd.f32 %v761, %v1500
    %v1502 = vpop.f32.mrb[0].mxu0
    %1503 = vmatprep.mubr.bf16.mxu0 0
    %1504 = vmatmul.mubr.bf16.gmra.mrb[0].mxu0 %v1420
    %v1505 = vpop.f32.mrb[0].mxu0
    %v1506 = vadd.f32 %v761, %v1505
    %v1507 = vpop.f32.mrb[0].mxu0
    %v1508 = vpop.f32.mrb[0].mxu0
    %v1509 = vadd.f32 %v761, %v1508
    %v1510 = vpop.f32.mrb[0].mxu0
    %1511 = vmatprep.mubr.bf16.mxu0 0
    %1512 = vmatmul.mubr.bf16.gmra.mrb[0].mxu0 %v1421
    %v1513 = vpop.f32.mrb[0].mxu0
    %v1514 = vadd.f32 %v761, %v1513
    %v1515 = vpop.f32.mrb[0].mxu0
    %v1516 = vpop.f32.mrb[0].mxu0
    %v1517 = vadd.f32 %v761, %v1516
    %v1518 = vpop.f32.mrb[0].mxu0
    %1519 = vmatprep.mubr.bf16.mxu0 0
    %1520 = vmatmul.mubr.bf16.gmra.mrb[0].mxu0 %v1422
    %v1521 = vpop.f32.mrb[0].mxu0
    %v1522 = vadd.f32 %v761, %v1521
    %v1523 = vpop.f32.mrb[0].mxu0
    %v1524 = vpop.f32.mrb[0].mxu0
    %v1525 = vadd.f32 %v761, %v1524
    %v1526 = vpop.f32.mrb[0].mxu0
    %1527 = vmatprep.mubr.bf16.mxu0 0
    %1528 = vmatmul.mubr.bf16.gmra.mrb[0].mxu0 %v1423
    %v1529 = vpop.f32.mrb[0].mxu0
    %v1530 = vadd.f32 %v761, %v1529
    %v1531 = vpop.f32.mrb[0].mxu0
    %v1532 = vpop.f32.mrb[0].mxu0
    %v1533 = vadd.f32 %v761, %v1532
    %v1534 = vpop.f32.mrb[0].mxu0
    %1535 = vmatprep.mubr.bf16.mxu0 0
    %1536 = vmatmul.mubr.bf16.gmra.mrb[0].mxu0 %v1424
    %v1537 = vpop.f32.mrb[0].mxu0
    %v1538 = vadd.f32 %v761, %v1537
    %v1539 = vpop.f32.mrb[0].mxu0
    %v1540 = vpop.f32.mrb[0].mxu0
    %v1541 = vadd.f32 %v761, %v1540
    %v1542 = vpop.f32.mrb[0].mxu0
    %1543 = vmatprep.mubr.bf16.mxu0 0
    %1544 = vmatmul.mubr.bf16.gmra.mrb[0].mxu0 %v1425
    %v1545 = vpop.f32.mrb[0].mxu0
    %v1546 = vadd.f32 %v761, %v1545
    %v1547 = vpop.f32.mrb[0].mxu0
    %v1548 = vpop.f32.mrb[0].mxu0
    %v1549 = vadd.f32 %v761, %v1548
    %v1550 = vpop.f32.mrb[0].mxu0
    %1551 = vmatprep.mubr.bf16.mxu0 0
    %1552 = vmatmul.mubr.bf16.gmra.mrb[0].mxu0 %v1426
    %v1553 = vpop.f32.mrb[0].mxu0
    %v1554 = vadd.f32 %v761, %v1553
    %v1555 = vpop.f32.mrb[0].mxu0
    %v1556 = vpop.f32.mrb[0].mxu0
    %v1557 = vadd.f32 %v761, %v1556
    %v1558 = vpop.f32.mrb[0].mxu0
    %1559 = vmatprep.mubr.bf16.mxu0 0
    %1560 = vmatmul.mubr.bf16.gmra.mrb[0].mxu0 %v1427
    %v1561 = vpop.f32.mrb[0].mxu0
    %v1562 = vadd.f32 %v761, %v1561
    %v1563 = vpop.f32.mrb[0].mxu0
    %v1564 = vpop.f32.mrb[0].mxu0
    %v1565 = vadd.f32 %v761, %v1564
    %v1566 = vpop.f32.mrb[0].mxu0
    %1567 = vmatprep.mubr.bf16.mxu0 0
    %1568 = vmatmul.mubr.bf16.gmra.mrb[0].mxu0 %v1428
    %v1569 = vpop.f32.mrb[0].mxu0
    %v1570 = vadd.f32 %v761, %v1569
    %v1571 = vpop.f32.mrb[0].mxu0
    %v1572 = vpop.f32.mrb[0].mxu0
    %v1573 = vadd.f32 %v761, %v1572
    %v1574 = vpop.f32.mrb[0].mxu0
    %1575 = vmatprep.mubr.bf16.mxu0 0
    %1576 = vmatmul.mubr.bf16.gmra.mrb[0].mxu0 %v1429
    %v1577 = vpop.f32.mrb[0].mxu0
    %v1578 = vadd.f32 %v761, %v1577
    %v1579 = vpop.f32.mrb[0].mxu0
    %v1580 = vpop.f32.mrb[0].mxu0
    %v1581 = vadd.f32 %v761, %v1580
    %v1582 = vpop.f32.mrb[0].mxu0
    %1583 = vmatprep.mubr.bf16.mxu0 0
    %1584 = vmatmul.mubr.bf16.gmra.mrb[0].mxu0 %v1430
    %v1585 = vpop.f32.mrb[0].mxu0
    %v1586 = vadd.f32 %v761, %v1585
    %v1587 = vpop.f32.mrb[0].mxu0
    %v1588 = vpop.f32.mrb[0].mxu0
    %v1589 = vadd.f32 %v761, %v1588
    %v1590 = vpop.f32.mrb[0].mxu0
    %1591 = vdwg.mxu0
    %v1592 = vpack.c.bf16 %v1469, %v1466
    %v1593 = vpack.c.bf16 %v1477, %v1474
    %v1594 = vpack.c.bf16 %v1485, %v1482
    %v1595 = vpack.c.bf16 %v1493, %v1490
    %v1596 = vpack.c.bf16 %v1501, %v1498
    %v1597 = vpack.c.bf16 %v1509, %v1506
    %v1598 = vpack.c.bf16 %v1517, %v1514
    %v1599 = vpack.c.bf16 %v1525, %v1522
    %v1600 = vpack.c.bf16 %v1533, %v1530
    %v1601 = vpack.c.bf16 %v1541, %v1538
    %v1602 = vpack.c.bf16 %v1549, %v1546
    %v1603 = vpack.c.bf16 %v1557, %v1554
    %v1604 = vpack.c.bf16 %v1565, %v1562
    %v1605 = vpack.c.bf16 %v1573, %v1570
    %v1606 = vpack.c.bf16 %v1581, %v1578
    %v1607 = vpack.c.bf16 %v1589, %v1586
    %v1608 = vtanh.bf16.pop %v1592
    %v1609 = vtanh.bf16.pop %v1593
    %v1610 = vtanh.bf16.pop %v1594
    %v1611 = vtanh.bf16.pop %v1595
    %v1612 = vtanh.bf16.pop %v1596
    %v1613 = vtanh.bf16.pop %v1597
    %v1614 = vtanh.bf16.pop %v1598
    %v1615 = vtanh.bf16.pop %v1599
    %v1616 = vtanh.bf16.pop %v1600
    %v1617 = vtanh.bf16.pop %v1601
    %v1618 = vtanh.bf16.pop %v1602
    %v1619 = vtanh.bf16.pop %v1603
    %v1620 = vtanh.bf16.pop %v1604
    %v1621 = vtanh.bf16.pop %v1605
    %v1622 = vtanh.bf16.pop %v1606
    %v1623 = vtanh.bf16.pop %v1607
    %v1624 = vunpack.c.l.bf16 %v1608
    %v1625 = vunpack.c.h.bf16 %v1608
    %v1626 = vunpack.c.l.bf16 %v1609
    %v1627 = vunpack.c.h.bf16 %v1609
    %v1628 = vunpack.c.l.bf16 %v1610
    %v1629 = vunpack.c.h.bf16 %v1610
    %v1630 = vunpack.c.l.bf16 %v1611
    %v1631 = vunpack.c.h.bf16 %v1611
    %v1632 = vunpack.c.l.bf16 %v1612
    %v1633 = vunpack.c.h.bf16 %v1612
    %v1634 = vunpack.c.l.bf16 %v1613
    %v1635 = vunpack.c.h.bf16 %v1613
    %v1636 = vunpack.c.l.bf16 %v1614
    %v1637 = vunpack.c.h.bf16 %v1614
    %v1638 = vunpack.c.l.bf16 %v1615
    %v1639 = vunpack.c.h.bf16 %v1615
    %v1640 = vunpack.c.l.bf16 %v1616
    %v1641 = vunpack.c.h.bf16 %v1616
    %v1642 = vunpack.c.l.bf16 %v1617
    %v1643 = vunpack.c.h.bf16 %v1617
    %v1644 = vunpack.c.l.bf16 %v1618
    %v1645 = vunpack.c.h.bf16 %v1618
    %v1646 = vunpack.c.l.bf16 %v1619
    %v1647 = vunpack.c.h.bf16 %v1619
    %v1648 = vunpack.c.l.bf16 %v1620
    %v1649 = vunpack.c.h.bf16 %v1620
    %v1650 = vunpack.c.l.bf16 %v1621
    %v1651 = vunpack.c.h.bf16 %v1621
    %v1652 = vunpack.c.l.bf16 %v1622
    %v1653 = vunpack.c.h.bf16 %v1622
    %v1654 = vunpack.c.l.bf16 %v1623
    %v1655 = vunpack.c.h.bf16 %v1623
    %v1656 = vadd.f32 %v1624, %v1625
    %v1657 = vadd.f32 %v1656, %v1626
    %v1658 = vadd.f32 %v1657, %v1627
    %v1659 = vadd.f32 %v1658, %v1628
    %v1660 = vadd.f32 %v1659, %v1629
    %v1661 = vadd.f32 %v1660, %v1630
    %v1662 = vadd.f32 %v1661, %v1631
    %v1663 = vadd.f32 %v1662, %v1632
    %v1664 = vadd.f32 %v1663, %v1633
    %v1665 = vadd.f32 %v1664, %v1634
    %v1666 = vadd.f32 %v1665, %v1635
    %v1667 = vadd.f32 %v1666, %v1636
    %v1668 = vadd.f32 %v1667, %v1637
    %v1669 = vadd.f32 %v1668, %v1638
    %v1670 = vadd.f32 %v1669, %v1639
    %v1671 = vadd.f32 %v1670, %v1640
    %v1672 = vadd.f32 %v1671, %v1641
    %v1673 = vadd.f32 %v1672, %v1642
    %v1674 = vadd.f32 %v1673, %v1643
    %v1675 = vadd.f32 %v1674, %v1644
    %v1676 = vadd.f32 %v1675, %v1645
    %v1677 = vadd.f32 %v1676, %v1646
    %v1678 = vadd.f32 %v1677, %v1647
    %v1679 = vadd.f32 %v1678, %v1648
    %v1680 = vadd.f32 %v1679, %v1649
    %v1681 = vadd.f32 %v1680, %v1650
    %v1682 = vadd.f32 %v1681, %v1651
    %v1683 = vadd.f32 %v1682, %v1652
    %v1684 = vadd.f32 %v1683, %v1653
    %v1685 = vadd.f32 %v1684, %v1654
    %v1686 = vadd.f32 %v1685, %v1655
    %v1687 = vrot.slane %v1686, 4
    %v1688 = vadd.f32 %v1686, %v1687
    %v1689 = vrot.slane %v1688, 2
    %v1690 = vadd.f32 %v1688, %v1689
    %v1691 = vrot.slane %v1690, 1
    %v1692 = vadd.f32 %v1690, %v1691
    %v1693 = vld [vmem:[#allocation5] sm:$0xff]
    %v1694 = vld [vmem:[#allocation5 + $0x8] sm:$0xff]
    %v1695 = vld [vmem:[#allocation5 + $0x10] sm:$0xff]
    %v1696 = vld [vmem:[#allocation5 + $0x18] sm:$0xff]
    %v1697 = vld [vmem:[#allocation5 + $0x20] sm:$0xff]
    %v1698 = vld [vmem:[#allocation5 + $0x28] sm:$0xff]
    %v1699 = vld [vmem:[#allocation5 + $0x30] sm:$0xff]
    %v1700 = vld [vmem:[#allocation5 + $0x38] sm:$0xff]
    %v1701 = vld [vmem:[#allocation5 + $0x40] sm:$0xff]
    %v1702 = vld [vmem:[#allocation5 + $0x48] sm:$0xff]
    %v1703 = vld [vmem:[#allocation5 + $0x50] sm:$0xff]
    %v1704 = vld [vmem:[#allocation5 + $0x58] sm:$0xff]
    %v1705 = vld [vmem:[#allocation5 + $0x60] sm:$0xff]
    %v1706 = vld [vmem:[#allocation5 + $0x68] sm:$0xff]
    %v1707 = vld [vmem:[#allocation5 + $0x70] sm:$0xff]
    %v1708 = vld [vmem:[#allocation5 + $0x78] sm:$0xff]
    %v1709 = vld [vmem:[#allocation5 + $0x80] sm:$0xff]
    %v1710 = vld [vmem:[#allocation5 + $0x88] sm:$0xff]
    %v1711 = vld [vmem:[#allocation5 + $0x90] sm:$0xff]
    %v1712 = vld [vmem:[#allocation5 + $0x98] sm:$0xff]
    %v1713 = vld [vmem:[#allocation5 + $0xa0] sm:$0xff]
    %v1714 = vld [vmem:[#allocation5 + $0xa8] sm:$0xff]
    %v1715 = vld [vmem:[#allocation5 + $0xb0] sm:$0xff]
    %v1716 = vld [vmem:[#allocation5 + $0xb8] sm:$0xff]
    %v1717 = vld [vmem:[#allocation5 + $0xc0] sm:$0xff]
    %v1718 = vld [vmem:[#allocation5 + $0xc8] sm:$0xff]
    %v1719 = vld [vmem:[#allocation5 + $0xd0] sm:$0xff]
    %v1720 = vld [vmem:[#allocation5 + $0xd8] sm:$0xff]
    %v1721 = vld [vmem:[#allocation5 + $0xe0] sm:$0xff]
    %v1722 = vld [vmem:[#allocation5 + $0xe8] sm:$0xff]
    %v1723 = vld [vmem:[#allocation5 + $0xf0] sm:$0xff]
    %v1724 = vld [vmem:[#allocation5 + $0xf8] sm:$0xff]
    %v1725 = vpack.c.bf16 %v1694, %v1693
    %v1726 = vpack.c.bf16 %v1696, %v1695
    %v1727 = vpack.c.bf16 %v1698, %v1697
    %v1728 = vpack.c.bf16 %v1700, %v1699
    %v1729 = vpack.c.bf16 %v1702, %v1701
    %v1730 = vpack.c.bf16 %v1704, %v1703
    %v1731 = vpack.c.bf16 %v1706, %v1705
    %v1732 = vpack.c.bf16 %v1708, %v1707
    %v1733 = vpack.c.bf16 %v1710, %v1709
    %v1734 = vpack.c.bf16 %v1712, %v1711
    %v1735 = vpack.c.bf16 %v1714, %v1713
    %v1736 = vpack.c.bf16 %v1716, %v1715
    %v1737 = vpack.c.bf16 %v1718, %v1717
    %v1738 = vpack.c.bf16 %v1720, %v1719
    %v1739 = vpack.c.bf16 %v1722, %v1721
    %v1740 = vpack.c.bf16 %v1724, %v1723
    %1741 = vmatprep.subr.bf16.mxu0 0
    %1742 = vmatpush1.bf16.msra.mxu0 %v795
    %1743 = vmatprep.subr.bf16.mxu0 0
    %1744 = vmatpush1.bf16.msra.mxu0 %v796
    %1745 = vmatprep.subr.bf16.mxu0 0
    %1746 = vmatpush1.bf16.msra.mxu0 %v797
    %1747 = vmatprep.subr.bf16.mxu0 0
    %1748 = vmatpush1.bf16.msra.mxu0 %v798
    %1749 = vmatprep.subr.bf16.mxu0 0
    %1750 = vmatpush1.bf16.msra.mxu0 %v799
    %1751 = vmatprep.subr.bf16.mxu0 0
    %1752 = vmatpush1.bf16.msra.mxu0 %v800
    %1753 = vmatprep.subr.bf16.mxu0 0
    %1754 = vmatpush1.bf16.msra.mxu0 %v801
    %1755 = vmatprep.subr.bf16.mxu0 0
    %1756 = vmatpush1.bf16.msra.mxu0 %v802
    %1757 = vmatprep.subr.bf16.mxu0 0
    %1758 = vmatpush1.bf16.msra.mxu0 0
    %1759 = vmatprep.subr.bf16.mxu0 0
    %1760 = vmatpush1.bf16.msra.mxu0 0
    %1761 = vmatprep.subr.bf16.mxu0 0
    %1762 = vmatpush1.bf16.msra.mxu0 0
    %1763 = vmatprep.subr.bf16.mxu0 0
    %1764 = vmatpush1.bf16.msra.mxu0 0
    %1765 = vmatprep.subr.bf16.mxu0 0
    %1766 = vmatpush1.bf16.msra.mxu0 0
    %1767 = vmatprep.subr.bf16.mxu0 0
    %1768 = vmatpush1.bf16.msra.mxu0 0
    %1769 = vmatprep.subr.bf16.mxu0 0
    %1770 = vmatpush1.bf16.msra.mxu0 0
    %1771 = vmatprep.subr.bf16.mxu0 0
    %1772 = vmatpush1.bf16.msra.mxu0 0
    %1773 = vmatprep.mubr.bf16.mxu0 0
    %1774 = vmatmul.mubr.bf16.gmra.mrb[0].mxu0 %v1725
    %v1775 = vpop.f32.mrb[0].mxu0
    %v1776 = vadd.f32 %v761, %v1775
    %v1777 = vpop.f32.mrb[0].mxu0
    %v1778 = vpop.f32.mrb[0].mxu0
    %v1779 = vadd.f32 %v761, %v1778
    %v1780 = vpop.f32.mrb[0].mxu0
    %1781 = vmatprep.mubr.bf16.mxu0 0
    %1782 = vmatmul.mubr.bf16.gmra.mrb[0].mxu0 %v1726
    %v1783 = vpop.f32.mrb[0].mxu0
    %v1784 = vadd.f32 %v761, %v1783
    %v1785 = vpop.f32.mrb[0].mxu0
    %v1786 = vpop.f32.mrb[0].mxu0
    %v1787 = vadd.f32 %v761, %v1786
    %v1788 = vpop.f32.mrb[0].mxu0
    %1789 = vmatprep.mubr.bf16.mxu0 0
    %1790 = vmatmul.mubr.bf16.gmra.mrb[0].mxu0 %v1727
    %v1791 = vpop.f32.mrb[0].mxu0
    %v1792 = vadd.f32 %v761, %v1791
    %v1793 = vpop.f32.mrb[0].mxu0
    %v1794 = vpop.f32.mrb[0].mxu0
    %v1795 = vadd.f32 %v761, %v1794
    %v1796 = vpop.f32.mrb[0].mxu0
    %1797 = vmatprep.mubr.bf16.mxu0 0
    %1798 = vmatmul.mubr.bf16.gmra.mrb[0].mxu0 %v1728
    %v1799 = vpop.f32.mrb[0].mxu0
    %v1800 = vadd.f32 %v761, %v1799
    %v1801 = vpop.f32.mrb[0].mxu0
    %v1802 = vpop.f32.mrb[0].mxu0
    %v1803 = vadd.f32 %v761, %v1802
    %v1804 = vpop.f32.mrb[0].mxu0
    %1805 = vmatprep.mubr.bf16.mxu0 0
    %1806 = vmatmul.mubr.bf16.gmra.mrb[0].mxu0 %v1729
    %v1807 = vpop.f32.mrb[0].mxu0
    %v1808 = vadd.f32 %v761, %v1807
    %v1809 = vpop.f32.mrb[0].mxu0
    %v1810 = vpop.f32.mrb[0].mxu0
    %v1811 = vadd.f32 %v761, %v1810
    %v1812 = vpop.f32.mrb[0].mxu0
    %1813 = vmatprep.mubr.bf16.mxu0 0
    %1814 = vmatmul.mubr.bf16.gmra.mrb[0].mxu0 %v1730
    %v1815 = vpop.f32.mrb[0].mxu0
    %v1816 = vadd.f32 %v761, %v1815
    %v1817 = vpop.f32.mrb[0].mxu0
    %v1818 = vpop.f32.mrb[0].mxu0
    %v1819 = vadd.f32 %v761, %v1818
    %v1820 = vpop.f32.mrb[0].mxu0
    %1821 = vmatprep.mubr.bf16.mxu0 0
    %1822 = vmatmul.mubr.bf16.gmra.mrb[0].mxu0 %v1731
    %v1823 = vpop.f32.mrb[0].mxu0
    %v1824 = vadd.f32 %v761, %v1823
    %v1825 = vpop.f32.mrb[0].mxu0
    %v1826 = vpop.f32.mrb[0].mxu0
    %v1827 = vadd.f32 %v761, %v1826
    %v1828 = vpop.f32.mrb[0].mxu0
    %1829 = vmatprep.mubr.bf16.mxu0 0
    %1830 = vmatmul.mubr.bf16.gmra.mrb[0].mxu0 %v1732
    %v1831 = vpop.f32.mrb[0].mxu0
    %v1832 = vadd.f32 %v761, %v1831
    %v1833 = vpop.f32.mrb[0].mxu0
    %v1834 = vpop.f32.mrb[0].mxu0
    %v1835 = vadd.f32 %v761, %v1834
    %v1836 = vpop.f32.mrb[0].mxu0
    %1837 = vmatprep.mubr.bf16.mxu0 0
    %1838 = vmatmul.mubr.bf16.gmra.mrb[0].mxu0 %v1733
    %v1839 = vpop.f32.mrb[0].mxu0
    %v1840 = vadd.f32 %v761, %v1839
    %v1841 = vpop.f32.mrb[0].mxu0
    %v1842 = vpop.f32.mrb[0].mxu0
    %v1843 = vadd.f32 %v761, %v1842
    %v1844 = vpop.f32.mrb[0].mxu0
    %1845 = vmatprep.mubr.bf16.mxu0 0
    %1846 = vmatmul.mubr.bf16.gmra.mrb[0].mxu0 %v1734
    %v1847 = vpop.f32.mrb[0].mxu0
    %v1848 = vadd.f32 %v761, %v1847
    %v1849 = vpop.f32.mrb[0].mxu0
    %v1850 = vpop.f32.mrb[0].mxu0
    %v1851 = vadd.f32 %v761, %v1850
    %v1852 = vpop.f32.mrb[0].mxu0
    %1853 = vmatprep.mubr.bf16.mxu0 0
    %1854 = vmatmul.mubr.bf16.gmra.mrb[0].mxu0 %v1735
    %v1855 = vpop.f32.mrb[0].mxu0
    %v1856 = vadd.f32 %v761, %v1855
    %v1857 = vpop.f32.mrb[0].mxu0
    %v1858 = vpop.f32.mrb[0].mxu0
    %v1859 = vadd.f32 %v761, %v1858
    %v1860 = vpop.f32.mrb[0].mxu0
    %1861 = vmatprep.mubr.bf16.mxu0 0
    %1862 = vmatmul.mubr.bf16.gmra.mrb[0].mxu0 %v1736
    %v1863 = vpop.f32.mrb[0].mxu0
    %v1864 = vadd.f32 %v761, %v1863
    %v1865 = vpop.f32.mrb[0].mxu0
    %v1866 = vpop.f32.mrb[0].mxu0
    %v1867 = vadd.f32 %v761, %v1866
    %v1868 = vpop.f32.mrb[0].mxu0
    %1869 = vmatprep.mubr.bf16.mxu0 0
    %1870 = vmatmul.mubr.bf16.gmra.mrb[0].mxu0 %v1737
    %v1871 = vpop.f32.mrb[0].mxu0
    %v1872 = vadd.f32 %v761, %v1871
    %v1873 = vpop.f32.mrb[0].mxu0
    %v1874 = vpop.f32.mrb[0].mxu0
    %v1875 = vadd.f32 %v761, %v1874
    %v1876 = vpop.f32.mrb[0].mxu0
    %1877 = vmatprep.mubr.bf16.mxu0 0
    %1878 = vmatmul.mubr.bf16.gmra.mrb[0].mxu0 %v1738
    %v1879 = vpop.f32.mrb[0].mxu0
    %v1880 = vadd.f32 %v761, %v1879
    %v1881 = vpop.f32.mrb[0].mxu0
    %v1882 = vpop.f32.mrb[0].mxu0
    %v1883 = vadd.f32 %v761, %v1882
    %v1884 = vpop.f32.mrb[0].mxu0
    %1885 = vmatprep.mubr.bf16.mxu0 0
    %1886 = vmatmul.mubr.bf16.gmra.mrb[0].mxu0 %v1739
    %v1887 = vpop.f32.mrb[0].mxu0
    %v1888 = vadd.f32 %v761, %v1887
    %v1889 = vpop.f32.mrb[0].mxu0
    %v1890 = vpop.f32.mrb[0].mxu0
    %v1891 = vadd.f32 %v761, %v1890
    %v1892 = vpop.f32.mrb[0].mxu0
    %1893 = vmatprep.mubr.bf16.mxu0 0
    %1894 = vmatmul.mubr.bf16.gmra.mrb[0].mxu0 %v1740
    %v1895 = vpop.f32.mrb[0].mxu0
    %v1896 = vadd.f32 %v761, %v1895
    %v1897 = vpop.f32.mrb[0].mxu0
    %v1898 = vpop.f32.mrb[0].mxu0
    %v1899 = vadd.f32 %v761, %v1898
    %v1900 = vpop.f32.mrb[0].mxu0
    %1901 = vdwg.mxu0
    %v1902 = vpack.c.bf16 %v1779, %v1776
    %v1903 = vpack.c.bf16 %v1787, %v1784
    %v1904 = vpack.c.bf16 %v1795, %v1792
    %v1905 = vpack.c.bf16 %v1803, %v1800
    %v1906 = vpack.c.bf16 %v1811, %v1808
    %v1907 = vpack.c.bf16 %v1819, %v1816
    %v1908 = vpack.c.bf16 %v1827, %v1824
    %v1909 = vpack.c.bf16 %v1835, %v1832
    %v1910 = vpack.c.bf16 %v1843, %v1840
    %v1911 = vpack.c.bf16 %v1851, %v1848
    %v1912 = vpack.c.bf16 %v1859, %v1856
    %v1913 = vpack.c.bf16 %v1867, %v1864
    %v1914 = vpack.c.bf16 %v1875, %v1872
    %v1915 = vpack.c.bf16 %v1883, %v1880
    %v1916 = vpack.c.bf16 %v1891, %v1888
    %v1917 = vpack.c.bf16 %v1899, %v1896
    %v1918 = vtanh.bf16.pop %v1902
    %v1919 = vtanh.bf16.pop %v1903
    %v1920 = vtanh.bf16.pop %v1904
    %v1921 = vtanh.bf16.pop %v1905
    %v1922 = vtanh.bf16.pop %v1906
    %v1923 = vtanh.bf16.pop %v1907
    %v1924 = vtanh.bf16.pop %v1908
    %v1925 = vtanh.bf16.pop %v1909
    %v1926 = vtanh.bf16.pop %v1910
    %v1927 = vtanh.bf16.pop %v1911
    %v1928 = vtanh.bf16.pop %v1912
    %v1929 = vtanh.bf16.pop %v1913
    %v1930 = vtanh.bf16.pop %v1914
    %v1931 = vtanh.bf16.pop %v1915
    %v1932 = vtanh.bf16.pop %v1916
    %v1933 = vtanh.bf16.pop %v1917
    %v1934 = vunpack.c.l.bf16 %v1918
    %v1935 = vunpack.c.h.bf16 %v1918
    %v1936 = vunpack.c.l.bf16 %v1919
    %v1937 = vunpack.c.h.bf16 %v1919
    %v1938 = vunpack.c.l.bf16 %v1920
    %v1939 = vunpack.c.h.bf16 %v1920
    %v1940 = vunpack.c.l.bf16 %v1921
    %v1941 = vunpack.c.h.bf16 %v1921
    %v1942 = vunpack.c.l.bf16 %v1922
    %v1943 = vunpack.c.h.bf16 %v1922
    %v1944 = vunpack.c.l.bf16 %v1923
    %v1945 = vunpack.c.h.bf16 %v1923
    %v1946 = vunpack.c.l.bf16 %v1924
    %v1947 = vunpack.c.h.bf16 %v1924
    %v1948 = vunpack.c.l.bf16 %v1925
    %v1949 = vunpack.c.h.bf16 %v1925
    %v1950 = vunpack.c.l.bf16 %v1926
    %v1951 = vunpack.c.h.bf16 %v1926
    %v1952 = vunpack.c.l.bf16 %v1927
    %v1953 = vunpack.c.h.bf16 %v1927
    %v1954 = vunpack.c.l.bf16 %v1928
    %v1955 = vunpack.c.h.bf16 %v1928
    %v1956 = vunpack.c.l.bf16 %v1929
    %v1957 = vunpack.c.h.bf16 %v1929
    %v1958 = vunpack.c.l.bf16 %v1930
    %v1959 = vunpack.c.h.bf16 %v1930
    %v1960 = vunpack.c.l.bf16 %v1931
    %v1961 = vunpack.c.h.bf16 %v1931
    %v1962 = vunpack.c.l.bf16 %v1932
    %v1963 = vunpack.c.h.bf16 %v1932
    %v1964 = vunpack.c.l.bf16 %v1933
    %v1965 = vunpack.c.h.bf16 %v1933
    %v1966 = vadd.f32 %v1934, %v1935
    %v1967 = vadd.f32 %v1966, %v1936
    %v1968 = vadd.f32 %v1967, %v1937
    %v1969 = vadd.f32 %v1968, %v1938
    %v1970 = vadd.f32 %v1969, %v1939
    %v1971 = vadd.f32 %v1970, %v1940
    %v1972 = vadd.f32 %v1971, %v1941
    %v1973 = vadd.f32 %v1972, %v1942
    %v1974 = vadd.f32 %v1973, %v1943
    %v1975 = vadd.f32 %v1974, %v1944
    %v1976 = vadd.f32 %v1975, %v1945
    %v1977 = vadd.f32 %v1976, %v1946
    %v1978 = vadd.f32 %v1977, %v1947
    %v1979 = vadd.f32 %v1978, %v1948
    %v1980 = vadd.f32 %v1979, %v1949
    %v1981 = vadd.f32 %v1980, %v1950
    %v1982 = vadd.f32 %v1981, %v1951
    %v1983 = vadd.f32 %v1982, %v1952
    %v1984 = vadd.f32 %v1983, %v1953
    %v1985 = vadd.f32 %v1984, %v1954
    %v1986 = vadd.f32 %v1985, %v1955
    %v1987 = vadd.f32 %v1986, %v1956
    %v1988 = vadd.f32 %v1987, %v1957
    %v1989 = vadd.f32 %v1988, %v1958
    %v1990 = vadd.f32 %v1989, %v1959
    %v1991 = vadd.f32 %v1990, %v1960
    %v1992 = vadd.f32 %v1991, %v1961
    %v1993 = vadd.f32 %v1992, %v1962
    %v1994 = vadd.f32 %v1993, %v1963
    %v1995 = vadd.f32 %v1994, %v1964
    %v1996 = vadd.f32 %v1995, %v1965
    %v1997 = vrot.slane %v1996, 4
    %v1998 = vadd.f32 %v1996, %v1997
    %v1999 = vrot.slane %v1998, 2
    %v2000 = vadd.f32 %v1998, %v1999
    %v2001 = vrot.slane %v2000, 1
    %v2002 = vadd.f32 %v2000, %v2001
    %v2003 = vld [vmem:[%s6] sm:$0xf]
    %vm2004 = vcmask 1040384
    %v2005 = vsel %vm2004, %v1072, %v1382
    %vm2006 = vcmask 1041408
    %v2007 = vsel %vm2006, %v2005, %v1692
    %vm2008 = vcmask 1042432
    %v2009 = vsel %vm2008, %v2007, %v2002
    %v2010 = vadd.f32 %v2003, %v2009
    %2011 = vst [vmem:[%s6] sm:$0xf] %v2010
    // Predicated region
    $region182: #{semantic_attention_forward.2} parent=1 // pred_check
      _
    $region183: #{semantic_attention_forward.2} parent=1 // pred_check_branch
      %2013 = sbr.rel (0) target = $region185
    $region184: #{semantic_attention_forward.2} parent=1 // pred_region
      _
    $region185: #{semantic_attention_forward.2} parent=1 // pred_fallthru
      _
    // Predicated region
    $region186: #{semantic_attention_forward.2} parent=1 // pred_check
      _
    $region187: #{semantic_attention_forward.2} parent=1 // pred_check_branch
      %2015 = sbr.rel (0) target = $region189
    $region188: #{semantic_attention_forward.2} parent=1 // pred_region
      _
    $region189: #{semantic_attention_forward.2} parent=1 // pred_fallthru
      _

</llo_original>
